<compile_context>
chip_gen: v5e
topology: v5e:2x2
jax: 0.10.0
libtpu: 0.0.40
codegen_flags: <defaults>
</compile_context>

<pallas_src>
import jax
import jax.numpy as jnp
import numpy as np
from jax.experimental import pallas as pl
from jax.experimental.pallas import tpu as pltpu


# ----------------------------------------------------------------------------
# helpers
# ----------------------------------------------------------------------------
def _round_up(x, m):
    return (x + m - 1) // m * m


# ----------------------------------------------------------------------------
# Pallas kernel 1: conv-as-matmul (+ bias + ReLU + eval BatchNorm) fused
# ----------------------------------------------------------------------------
def _make_conv_kernel(apply_relu_bn):
    def kernel(x_ref, w_ref, b_ref, s_ref, t_ref, o_ref):
        y = jnp.dot(x_ref[...], w_ref[...],
                    preferred_element_type=jnp.float32) + b_ref[...]
        if apply_relu_bn:
            y = jnp.maximum(y, 0.0)
            y = y * s_ref[...] + t_ref[...]
        o_ref[...] = y
    return kernel


def conv2d_pallas(x_nhwc, w_oihw, b, *, stride, relu_bn=None):
    """Conv2d (NHWC activations, OIHW torch weight), pad=0, via im2col+MXU.

    relu_bn: None, or (scale, shift) for the fused Conv -> ReLU -> eval-BN."""
    N, H, W, Cin = x_nhwc.shape
    O, _, k, _ = w_oihw.shape
    Ho = (H - k) // stride + 1
    Wo = (W - k) // stride + 1

    # TODO(synk): fuse this im2col gather into the kernel (strided in-kernel
    # slices) to avoid the k*k HBM read amplification at large shapes.
    cols = []
    for kh in range(k):
        for kw in range(k):
            cols.append(x_nhwc[:, kh:kh + stride * Ho:stride,
                               kw:kw + stride * Wo:stride, :])
    patches = jnp.concatenate(cols, axis=-1).reshape(N * Ho * Wo, k * k * Cin)

    K = k * k * Cin
    R = N * Ho * Wo
    Kp = _round_up(K, 128)                       # lane-pad contraction dim
    Op = _round_up(O, 128)                       # lane-pad output channels
    row_block = 512 if R > 512 else _round_up(R, 8)
    Rp = _round_up(R, row_block)

    xp = jnp.pad(patches, ((0, Rp - R), (0, Kp - K))).astype(jnp.bfloat16)
    wmat = w_oihw.transpose(2, 3, 1, 0).reshape(K, O)     # (kh,kw,cin) x O
    wp = jnp.pad(wmat, ((0, Kp - K), (0, Op - O))).astype(jnp.bfloat16)
    bp = jnp.pad(b.reshape(1, O).astype(jnp.float32), ((0, 0), (0, Op - O)))

    if relu_bn is None:
        scale = jnp.ones((1, Op), jnp.float32)
        shift = jnp.zeros((1, Op), jnp.float32)
        apply_relu_bn = False
    else:
        scale = jnp.pad(relu_bn[0].reshape(1, O).astype(jnp.float32),
                        ((0, 0), (0, Op - O)))
        shift = jnp.pad(relu_bn[1].reshape(1, O).astype(jnp.float32),
                        ((0, 0), (0, Op - O)))
        apply_relu_bn = True

    out = pl.pallas_call(
        _make_conv_kernel(apply_relu_bn),
        out_shape=jax.ShapeDtypeStruct((Rp, Op), jnp.float32),
        grid=(Rp // row_block,),
        in_specs=[
            pl.BlockSpec((row_block, Kp), lambda i: (i, 0)),
            pl.BlockSpec((Kp, Op), lambda i: (0, 0)),
            pl.BlockSpec((1, Op), lambda i: (0, 0)),
            pl.BlockSpec((1, Op), lambda i: (0, 0)),
            pl.BlockSpec((1, Op), lambda i: (0, 0)),
        ],
        out_specs=pl.BlockSpec((row_block, Op), lambda i: (i, 0)),
        compiler_params=pltpu.CompilerParams(
            dimension_semantics=("parallel",)),
    )(xp, wp, bp, scale, shift)

    return out[:R, :O].reshape(N, Ho, Wo, O)


# ----------------------------------------------------------------------------
# Pallas kernel 2: full ConvLSTM recurrence (all T steps in one pallas_call)
#   hx/cx persist in VMEM scratch; h2h conv = k*k shifted-row matmuls against
#   a zero-margined padded-grid row layout; gates packed as 4 x 128 lanes.
# ----------------------------------------------------------------------------
def _make_lstm_kernel(k, pad, w_sp, M, RPp, Cp):
    Wp2 = w_sp + 2 * pad

    def _sigmoid(v):
        # exp on EUP + approx reciprocal on EUP; keeps VALU free.
        return pl.reciprocal(1.0 + jnp.exp(-v), approx=True)

    def kernel(x_ref, w_ref, b_ref, wci_ref, wcf_ref, wco_ref, mask_ref,
               out_ref, hx_scr, cx_scr):
        t = pl.program_id(0)

        @pl.when(t == 0)
        def _init():
            hx_scr[...] = jnp.zeros_like(hx_scr)
            cx_scr[...] = jnp.zeros_like(cx_scr)

        # gates = x_t + b + h2h(hx)   (h2h: k*k shifted MXU matmuls)
        gates = x_ref[0] + b_ref[...]
        for kh in range(k):
            for kw in range(k):
                off = (kh - pad) * Wp2 + (kw - pad)
                hs = hx_scr[M + off:M + off + RPp, :].astype(jnp.bfloat16)
                gates = gates + jnp.dot(hs, w_ref[kh * k + kw],
                                        preferred_element_type=jnp.float32)

        ingate = gates[:, 0 * Cp:1 * Cp]
        cellgate = gates[:, 1 * Cp:2 * Cp]
        outgate = gates[:, 2 * Cp:3 * Cp]
        forgetgate = gates[:, 3 * Cp:4 * Cp]

        cx = cx_scr[...]
        cellgate = jnp.tanh(cellgate)
        ingate = _sigmoid(ingate + cx * wci_ref[...])
        forgetgate = _sigmoid(forgetgate + cx * wcf_ref[...])
        cy = forgetgate * cx + ingate * cellgate
        outgate = _sigmoid(outgate + cy * wco_ref[...])
        hy = outgate * jnp.tanh(cy)

        m = mask_ref[...]                 # interior mask keeps halo rows zero
        hy = hy * m
        cy = cy * m
        hx_scr[M:M + RPp, :] = hy
        cx_scr[...] = cy

        @pl.when(t == pl.num_programs(0) - 1)
        def _finalize():
            out_ref[:, 0:Cp] = hy
            out_ref[:, Cp:2 * Cp] = cy

    return kernel


def convlstm_pallas(x_nhwc, h2h_w, h2h_b, Wci, Wcf, Wco, B, T, C, h, w, k):
    """x_nhwc: (B*T, h, w, 4C) conv-stack output; returns (hy, cy) NCHW."""
    pad = (k - 1) // 2
    Cp = _round_up(C, 128)
    Hp, Wp2 = h + 2 * pad, w + 2 * pad
    RP = B * Hp * Wp2                       # padded-grid rows (explicit halo)
    RPp = _round_up(RP, 8)
    M = _round_up(pad * Wp2 + pad, 8)       # scratch margin >= max |shift|

    # x gates -> padded-grid rows, gate-block lane layout (4 blocks of Cp)
    xg = x_nhwc.reshape(B, T, h, w, 4, C)
    xg = jnp.pad(xg, ((0, 0), (0, 0), (pad, pad), (pad, pad),
                      (0, 0), (0, Cp - C)))
    xg = xg.transpose(1, 0, 2, 3, 4, 5).reshape(T, RP, 4 * Cp)
    xg = jnp.pad(xg, ((0, 0), (0, RPp - RP), (0, 0)))

    # h2h weight -> per-tap (Cp, 4*Cp) bf16 matrices (gate-block lane layout)
    Wr = h2h_w.reshape(4, C, C, k, k).transpose(3, 4, 2, 0, 1)
    Wr = Wr.reshape(k * k, C, 4, C)
    Wt = jnp.zeros((k * k, Cp, 4, Cp), jnp.float32).at[:, :C, :, :C].set(Wr)
    Wt = Wt.reshape(k * k, Cp, 4 * Cp).astype(jnp.bfloat16)

    bt = jnp.zeros((4, Cp), jnp.float32).at[:, :C].set(
        h2h_b.reshape(4, C)).reshape(1, 4 * Cp)

    def cell_rows(a):                       # (B, C, h, w) -> (RPp, Cp)
        r = a.transpose(0, 2, 3, 1)
        r = jnp.pad(r, ((0, 0), (pad, pad), (pad, pad), (0, Cp - C)))
        return jnp.pad(r.reshape(RP, Cp), ((0, RPp - RP), (0, 0)))

    wci_r, wcf_r, wco_r = cell_rows(Wci), cell_rows(Wcf), cell_rows(Wco)

    interior = jnp.zeros((B, Hp, Wp2), jnp.float32
                         ).at[:, pad:pad + h, pad:pad + w].set(1.0)
    mask = jnp.pad(interior.reshape(RP, 1), ((0, RPp - RP), (0, 0)))
    mask = mask * jnp.ones((1, Cp), jnp.float32)

    out = pl.pallas_call(
        _make_lstm_kernel(k, pad, w, M, RPp, Cp),
        out_shape=jax.ShapeDtypeStruct((RPp, 2 * Cp), jnp.float32),
        grid=(T,),
        in_specs=[
            pl.BlockSpec((1, RPp, 4 * Cp), lambda t: (t, 0, 0)),     # x_t
            pl.BlockSpec((k * k, Cp, 4 * Cp), lambda t: (0, 0, 0)),  # W taps
            pl.BlockSpec((1, 4 * Cp), lambda t: (0, 0)),             # bias
            pl.BlockSpec((RPp, Cp), lambda t: (0, 0)),               # Wci
            pl.BlockSpec((RPp, Cp), lambda t: (0, 0)),               # Wcf
            pl.BlockSpec((RPp, Cp), lambda t: (0, 0)),               # Wco
            pl.BlockSpec((RPp, Cp), lambda t: (0, 0)),               # mask
        ],
        out_specs=pl.BlockSpec((RPp, 2 * Cp), lambda t: (0, 0)),
        scratch_shapes=[pltpu.VMEM((RPp + 2 * M, Cp), jnp.float32),  # hx
                        pltpu.VMEM((RPp, Cp), jnp.float32)],         # cx
        compiler_params=pltpu.CompilerParams(
            dimension_semantics=("arbitrary",)),
    )(xg, Wt, bt, wci_r, wcf_r, wco_r, mask)

    out = out[:RP].reshape(B, Hp, Wp2, 2 * Cp)[:, pad:pad + h, pad:pad + w, :]
    hy = out[..., 0:C].transpose(0, 3, 1, 2)
    cy = out[..., Cp:Cp + C].transpose(0, 3, 1, 2)
    return hy, cy


# ----------------------------------------------------------------------------
# ST_Encoder forward (Pallas-backed)
# ----------------------------------------------------------------------------
def st_encoder_forward(params, inputs, channels, kernels):
    # inputs: (B, T, C0, H, W)
    B, T = inputs.shape[0], inputs.shape[1]
    x = inputs.reshape(B * T, *inputs.shape[2:])
    x = x.transpose(0, 2, 3, 1)                           # NHWC once

    n_layers = len(kernels)
    for i in range(n_layers):
        w = params[f"conv{i}_w"]
        b = params[f"conv{i}_b"]
        if i < n_layers - 1:
            scale = params[f"bn{i}_gamma"] / jnp.sqrt(params[f"bn{i}_var"] + 1e-5)
            shift = params[f"bn{i}_beta"] - params[f"bn{i}_mean"] * scale
            x = conv2d_pallas(x, w, b, stride=2, relu_bn=(scale, shift))
        else:
            x = conv2d_pallas(x, w, b, stride=2, relu_bn=None)

    C = channels[-1]
    k = kernels[-1]
    BT, h, w_, C4 = x.shape
    assert C4 == 4 * C

    hy, cy = convlstm_pallas(x, params["h2h_w"], params["h2h_b"],
                             params["Wci"], params["Wcf"], params["Wco"],
                             B, T, C, h, w_, k)
    return hy, cy


# ----------------------------------------------------------------------------
# pure-JAX reference (correctness check)
# ----------------------------------------------------------------------------
def _ref_conv(x, w, b, stride, pad):
    out = jax.lax.conv_general_dilated(
        x, w, window_strides=(stride, stride),
        padding=[(pad, pad), (pad, pad)],
        dimension_numbers=("NCHW", "OIHW", "NCHW"))
    return out + b.reshape(1, -1, 1, 1)


def st_encoder_reference(params, inputs, channels, kernels):
    B, T = inputs.shape[0], inputs.shape[1]
    x = inputs.reshape(B * T, *inputs.shape[2:])
    n = len(kernels)
    for i in range(n):
        x = _ref_conv(x, params[f"conv{i}_w"], params[f"conv{i}_b"], 2, 0)
        if i < n - 1:
            x = jnp.maximum(x, 0)
            scale = params[f"bn{i}_gamma"] / jnp.sqrt(params[f"bn{i}_var"] + 1e-5)
            shift = params[f"bn{i}_beta"] - params[f"bn{i}_mean"] * scale
            x = x * scale.reshape(1, -1, 1, 1) + shift.reshape(1, -1, 1, 1)
    C = channels[-1]
    h, w_ = x.shape[2], x.shape[3]
    x = x.reshape(B, T, 4 * C, h, w_)
    k = kernels[-1]
    pad = (k - 1) // 2
    hx = jnp.zeros((B, C, h, w_), jnp.float32)
    cx = jnp.zeros((B, C, h, w_), jnp.float32)
    Wci, Wcf, Wco = params["Wci"], params["Wcf"], params["Wco"]
    for t in range(T):
        gates = x[:, t] + _ref_conv(hx, params["h2h_w"], params["h2h_b"], 1, pad)
        i_g, g_g, o_g, f_g = jnp.split(gates, 4, axis=1)
        g_g = jnp.tanh(g_g)
        i_g = jax.nn.sigmoid(i_g + cx * Wci)
        f_g = jax.nn.sigmoid(f_g + cx * Wcf)
        cy = f_g * cx + i_g * g_g
        o_g = jax.nn.sigmoid(o_g + cy * Wco)
        hx = o_g * jnp.tanh(cy)
        cx = cy
    return hx, cx


# ----------------------------------------------------------------------------
# deterministic parameter init + run
# ----------------------------------------------------------------------------
def init_params(key, channels, kernels, B, H, W):
    params = {}
    n = len(kernels)
    keys = jax.random.split(key, 4 * n + 4)
    ki = 0
    for i in range(n):
        cin = channels[i]
        cout = channels[i + 1] if i < n - 1 else 4 * channels[i + 1]
        k = kernels[i]
        params[f"conv{i}_w"] = 0.1 * jax.random.normal(
            keys[ki], (cout, cin, k, k), jnp.float32); ki += 1
        params[f"conv{i}_b"] = 0.1 * jax.random.normal(
            keys[ki], (cout,), jnp.float32); ki += 1
        if i < n - 1:
            cbn = channels[i + 1]
            params[f"bn{i}_gamma"] = 1.0 + 0.1 * jax.random.normal(
                keys[ki], (cbn,), jnp.float32); ki += 1
            params[f"bn{i}_beta"] = 0.1 * jax.random.normal(
                keys[ki], (cbn,), jnp.float32); ki += 1
            params[f"bn{i}_mean"] = jnp.zeros((cbn,), jnp.float32)
            params[f"bn{i}_var"] = jnp.ones((cbn,), jnp.float32)

    C = channels[-1]
    k = kernels[-1]
    params["h2h_w"] = 0.1 * jax.random.normal(
        keys[ki], (4 * C, C, k, k), jnp.float32); ki += 1
    params["h2h_b"] = 0.1 * jax.random.normal(
        keys[ki], (4 * C,), jnp.float32); ki += 1

    # Wci/Wcf/Wco: zero-initialized per-sample cell weights (B, C, h2, w2)
    h2, w2 = H, W
    for kk in kernels:
        h2 = (h2 - kk) // 2 + 1
        w2 = (w2 - kk) // 2 + 1
    params["Wci"] = jnp.zeros((B, C, h2, w2), jnp.float32)
    params["Wcf"] = jnp.zeros((B, C, h2, w2), jnp.float32)
    params["Wco"] = jnp.zeros((B, C, h2, w2), jnp.float32)
    return params


if __name__ == "__main__":
    channels = [2, 4, 8]      # channels[-1]=8 -> ConvLSTM channel
    kernels = [3, 3]
    B, T, H, W = 2, 4, 16, 16

    key = jax.random.PRNGKey(0)
    kp, kx = jax.random.split(key)
    params = init_params(kp, channels, kernels, B, H, W)
    inputs = jax.random.normal(kx, (B, T, channels[0], H, W), jnp.float32)

    fwd = jax.jit(lambda p, x: st_encoder_forward(p, x, channels, kernels))
    hy, cy = fwd(params, inputs)
    jax.block_until_ready((hy, cy))

    hy_ref, cy_ref = st_encoder_reference(params, inputs, channels, kernels)
    np.testing.assert_allclose(np.asarray(hy), np.asarray(hy_ref),
                               rtol=2e-2, atol=2e-2)
    np.testing.assert_allclose(np.asarray(cy), np.asarray(cy_ref),
                               rtol=2e-2, atol=2e-2)
    print("KERNEL_OK")
</pallas_src>

<mosaic_0001>
module attributes {stable_mosaic.version = 11 : i64} {
  func.func @kernel(%arg0: i32, %arg1: memref<392x128xbf16, #tpu.memory_space<vmem>>, %arg2: memref<128x128xbf16, #tpu.memory_space<vmem>>, %arg3: memref<1x128xf32, #tpu.memory_space<vmem>>, %arg4: memref<1x128xf32, #tpu.memory_space<vmem>>, %arg5: memref<1x128xf32, #tpu.memory_space<vmem>>, %arg6: memref<392x128xf32, #tpu.memory_space<vmem>>) attributes {dimension_semantics = [#tpu.dimension_semantics<parallel>], iteration_bounds = array<i64: 1>, scalar_prefetch = 0 : i64, scratch_operands = 0 : i64, tpu.core_type = #tpu.core_type<tc>, window_params = [{transform_indices = @transform_0, window_bounds = array<i64: 392, 128>}, {pipeline_mode = #tpu.pipeline_mode<synchronous>, transform_indices = @transform_1, window_bounds = array<i64: 128, 128>}, {pipeline_mode = #tpu.pipeline_mode<synchronous>, transform_indices = @transform_2, window_bounds = array<i64: 1, 128>}, {pipeline_mode = #tpu.pipeline_mode<synchronous>, transform_indices = @transform_3, window_bounds = array<i64: 1, 128>}, {pipeline_mode = #tpu.pipeline_mode<synchronous>, transform_indices = @transform_4, window_bounds = array<i64: 1, 128>}, {transform_indices = @transform_5, window_bounds = array<i64: 392, 128>}]} {
    %c0 = arith.constant 0 : index
    %c0_0 = arith.constant 0 : index
    %0 = vector.load %arg1[%c0, %c0_0] : memref<392x128xbf16, #tpu.memory_space<vmem>>, vector<392x128xbf16>
    %c0_1 = arith.constant 0 : index
    %c0_2 = arith.constant 0 : index
    %1 = vector.load %arg2[%c0_1, %c0_2] : memref<128x128xbf16, #tpu.memory_space<vmem>>, vector<128x128xbf16>
    %cst = arith.constant dense<0.000000e+00> : vector<392x128xf32>
    %2 = tpu.matmul %0, %1, %cst {dimension_numbers = #tpu.dot_dimension_numbers<[1], [0], [0], [1], [0, 0, 1, 1], [], []>} : vector<392x128xbf16>, vector<128x128xbf16>, vector<392x128xf32> -> vector<392x128xf32>
    %c0_3 = arith.constant 0 : index
    %c0_4 = arith.constant 0 : index
    %3 = vector.load %arg3[%c0_3, %c0_4] : memref<1x128xf32, #tpu.memory_space<vmem>>, vector<1x128xf32>
    %4 = vector.broadcast %3 : vector<1x128xf32> to vector<392x128xf32>
    %5 = arith.addf %2, %4 : vector<392x128xf32>
    %cst_5 = arith.constant 0.000000e+00 : f32
    %6 = vector.broadcast %cst_5 : f32 to vector<392x128xf32>
    %7 = arith.maximumf %5, %6 : vector<392x128xf32>
    %c0_6 = arith.constant 0 : index
    %c0_7 = arith.constant 0 : index
    %8 = vector.load %arg4[%c0_6, %c0_7] : memref<1x128xf32, #tpu.memory_space<vmem>>, vector<1x128xf32>
    %9 = vector.broadcast %8 : vector<1x128xf32> to vector<392x128xf32>
    %10 = arith.mulf %7, %9 : vector<392x128xf32>
    %c0_8 = arith.constant 0 : index
    %c0_9 = arith.constant 0 : index
    %11 = vector.load %arg5[%c0_8, %c0_9] : memref<1x128xf32, #tpu.memory_space<vmem>>, vector<1x128xf32>
    %12 = vector.broadcast %11 : vector<1x128xf32> to vector<392x128xf32>
    %13 = arith.addf %10, %12 : vector<392x128xf32>
    %c0_10 = arith.constant 0 : index
    %c0_11 = arith.constant 0 : index
    %14 = vector.load %arg6[%c0_10, %c0_11] : memref<392x128xf32, #tpu.memory_space<vmem>>, vector<392x128xf32>
    tpu.vector_store %arg6[%c0_10, %c0_11], %13 {strides = array<i32>} : memref<392x128xf32, #tpu.memory_space<vmem>>, vector<392x128xf32>,
    return
  }
  func.func @transform_0(%arg0: i32) -> (i32, i32) {
    %c0_i32 = arith.constant 0 : i32
    %c0_i32_0 = arith.constant 0 : i32
    return %arg0, %c0_i32 : i32, i32
  }
  func.func @transform_1(%arg0: i32) -> (i32, i32) {
    %c0_i32 = arith.constant 0 : i32
    %c0_i32_0 = arith.constant 0 : i32
    %c0_i32_1 = arith.constant 0 : i32
    return %c0_i32, %c0_i32_0 : i32, i32
  }
  func.func @transform_2(%arg0: i32) -> (i32, i32) {
    %c0_i32 = arith.constant 0 : i32
    %c0_i32_0 = arith.constant 0 : i32
    %c0_i32_1 = arith.constant 0 : i32
    return %c0_i32, %c0_i32_0 : i32, i32
  }
  func.func @transform_3(%arg0: i32) -> (i32, i32) {
    %c0_i32 = arith.constant 0 : i32
    %c0_i32_0 = arith.constant 0 : i32
    %c0_i32_1 = arith.constant 0 : i32
    return %c0_i32, %c0_i32_0 : i32, i32
  }
  func.func @transform_4(%arg0: i32) -> (i32, i32) {
    %c0_i32 = arith.constant 0 : i32
    %c0_i32_0 = arith.constant 0 : i32
    %c0_i32_1 = arith.constant 0 : i32
    return %c0_i32, %c0_i32_0 : i32, i32
  }
  func.func @transform_5(%arg0: i32) -> (i32, i32) {
    %c0_i32 = arith.constant 0 : i32
    %c0_i32_0 = arith.constant 0 : i32
    return %arg0, %c0_i32 : i32, i32
  }
}

module attributes {stable_mosaic.version = 11 : i64} {
  func.func @kernel(%arg0: i32, %arg1: memref<72x128xbf16, #tpu.memory_space<vmem>>, %arg2: memref<128x128xbf16, #tpu.memory_space<vmem>>, %arg3: memref<1x128xf32, #tpu.memory_space<vmem>>, %arg4: memref<1x128xf32, #tpu.memory_space<vmem>>, %arg5: memref<1x128xf32, #tpu.memory_space<vmem>>, %arg6: memref<72x128xf32, #tpu.memory_space<vmem>>) attributes {dimension_semantics = [#tpu.dimension_semantics<parallel>], iteration_bounds = array<i64: 1>, scalar_prefetch = 0 : i64, scratch_operands = 0 : i64, tpu.core_type = #tpu.core_type<tc>, window_params = [{transform_indices = @transform_0, window_bounds = array<i64: 72, 128>}, {pipeline_mode = #tpu.pipeline_mode<synchronous>, transform_indices = @transform_1, window_bounds = array<i64: 128, 128>}, {pipeline_mode = #tpu.pipeline_mode<synchronous>, transform_indices = @transform_2, window_bounds = array<i64: 1, 128>}, {pipeline_mode = #tpu.pipeline_mode<synchronous>, transform_indices = @transform_3, window_bounds = array<i64: 1, 128>}, {pipeline_mode = #tpu.pipeline_mode<synchronous>, transform_indices = @transform_4, window_bounds = array<i64: 1, 128>}, {transform_indices = @transform_5, window_bounds = array<i64: 72, 128>}]} {
    %c0 = arith.constant 0 : index
    %c0_0 = arith.constant 0 : index
    %0 = vector.load %arg1[%c0, %c0_0] : memref<72x128xbf16, #tpu.memory_space<vmem>>, vector<72x128xbf16>
    %c0_1 = arith.constant 0 : index
    %c0_2 = arith.constant 0 : index
    %1 = vector.load %arg2[%c0_1, %c0_2] : memref<128x128xbf16, #tpu.memory_space<vmem>>, vector<128x128xbf16>
    %cst = arith.constant dense<0.000000e+00> : vector<72x128xf32>
    %2 = tpu.matmul %0, %1, %cst {dimension_numbers = #tpu.dot_dimension_numbers<[1], [0], [0], [1], [0, 0, 1, 1], [], []>} : vector<72x128xbf16>, vector<128x128xbf16>, vector<72x128xf32> -> vector<72x128xf32>
    %c0_3 = arith.constant 0 : index
    %c0_4 = arith.constant 0 : index
    %3 = vector.load %arg3[%c0_3, %c0_4] : memref<1x128xf32, #tpu.memory_space<vmem>>, vector<1x128xf32>
    %4 = vector.broadcast %3 : vector<1x128xf32> to vector<72x128xf32>
    %5 = arith.addf %2, %4 : vector<72x128xf32>
    %c0_5 = arith.constant 0 : index
    %c0_6 = arith.constant 0 : index
    %6 = vector.load %arg6[%c0_5, %c0_6] : memref<72x128xf32, #tpu.memory_space<vmem>>, vector<72x128xf32>
    tpu.vector_store %arg6[%c0_5, %c0_6], %5 {strides = array<i32>} : memref<72x128xf32, #tpu.memory_space<vmem>>, vector<72x128xf32>,
    return
  }
  func.func @transform_0(%arg0: i32) -> (i32, i32) {
    %c0_i32 = arith.constant 0 : i32
    %c0_i32_0 = arith.constant 0 : i32
    return %arg0, %c0_i32 : i32, i32
  }
  func.func @transform_1(%arg0: i32) -> (i32, i32) {
    %c0_i32 = arith.constant 0 : i32
    %c0_i32_0 = arith.constant 0 : i32
    %c0_i32_1 = arith.constant 0 : i32
    return %c0_i32, %c0_i32_0 : i32, i32
  }
  func.func @transform_2(%arg0: i32) -> (i32, i32) {
    %c0_i32 = arith.constant 0 : i32
    %c0_i32_0 = arith.constant 0 : i32
    %c0_i32_1 = arith.constant 0 : i32
    return %c0_i32, %c0_i32_0 : i32, i32
  }
  func.func @transform_3(%arg0: i32) -> (i32, i32) {
    %c0_i32 = arith.constant 0 : i32
    %c0_i32_0 = arith.constant 0 : i32
    %c0_i32_1 = arith.constant 0 : i32
    return %c0_i32, %c0_i32_0 : i32, i32
  }
  func.func @transform_4(%arg0: i32) -> (i32, i32) {
    %c0_i32 = arith.constant 0 : i32
    %c0_i32_0 = arith.constant 0 : i32
    %c0_i32_1 = arith.constant 0 : i32
    return %c0_i32, %c0_i32_0 : i32, i32
  }
  func.func @transform_5(%arg0: i32) -> (i32, i32) {
    %c0_i32 = arith.constant 0 : i32
    %c0_i32_0 = arith.constant 0 : i32
    return %arg0, %c0_i32 : i32, i32
  }
}

module attributes {stable_mosaic.version = 11 : i64} {
  func.func @kernel(%arg0: i32, %arg1: memref<1x56x512xf32, #tpu.memory_space<vmem>>, %arg2: memref<9x128x512xbf16, #tpu.memory_space<vmem>>, %arg3: memref<1x512xf32, #tpu.memory_space<vmem>>, %arg4: memref<56x128xf32, #tpu.memory_space<vmem>>, %arg5: memref<56x128xf32, #tpu.memory_space<vmem>>, %arg6: memref<56x128xf32, #tpu.memory_space<vmem>>, %arg7: memref<56x128xf32, #tpu.memory_space<vmem>>, %arg8: memref<56x256xf32, #tpu.memory_space<vmem>>, %arg9: memref<72x128xf32, #tpu.memory_space<vmem>>, %arg10: memref<56x128xf32, #tpu.memory_space<vmem>>) attributes {dimension_semantics = [#tpu.dimension_semantics<arbitrary>], iteration_bounds = array<i64: 4>, scalar_prefetch = 0 : i64, scratch_operands = 2 : i64, tpu.core_type = #tpu.core_type<tc>, window_params = [{transform_indices = @transform_0, window_bounds = array<i64: 1, 56, 512>}, {pipeline_mode = #tpu.pipeline_mode<synchronous>, transform_indices = @transform_1, window_bounds = array<i64: 9, 128, 512>}, {pipeline_mode = #tpu.pipeline_mode<synchronous>, transform_indices = @transform_2, window_bounds = array<i64: 1, 512>}, {pipeline_mode = #tpu.pipeline_mode<synchronous>, transform_indices = @transform_3, window_bounds = array<i64: 56, 128>}, {pipeline_mode = #tpu.pipeline_mode<synchronous>, transform_indices = @transform_4, window_bounds = array<i64: 56, 128>}, {pipeline_mode = #tpu.pipeline_mode<synchronous>, transform_indices = @transform_5, window_bounds = array<i64: 56, 128>}, {pipeline_mode = #tpu.pipeline_mode<synchronous>, transform_indices = @transform_6, window_bounds = array<i64: 56, 128>}, {pipeline_mode = #tpu.pipeline_mode<synchronous>, transform_indices = @transform_7, window_bounds = array<i64: 56, 256>}]} {
    %c0_i32 = arith.constant 0 : i32
    %0 = arith.cmpi eq, %arg0, %c0_i32 : i32
    %1 = arith.extui %0 : i1 to i32
    %c0_i32_0 = arith.constant 0 : i32
    %2 = arith.cmpi ne, %1, %c0_i32_0 : i32
    scf.if %2 {
      %cst_67 = arith.constant 0.000000e+00 : f32
      %108 = vector.broadcast %cst_67 : f32 to vector<72x128xf32>
      %c0_68 = arith.constant 0 : index
      %c0_69 = arith.constant 0 : index
      %109 = vector.load %arg9[%c0_68, %c0_69] : memref<72x128xf32, #tpu.memory_space<vmem>>, vector<72x128xf32>
      tpu.vector_store %arg9[%c0_68, %c0_69], %108 {strides = array<i32>} : memref<72x128xf32, #tpu.memory_space<vmem>>, vector<72x128xf32>,
      %cst_70 = arith.constant 0.000000e+00 : f32
      %110 = vector.broadcast %cst_70 : f32 to vector<56x128xf32>
      %c0_71 = arith.constant 0 : index
      %c0_72 = arith.constant 0 : index
      %111 = vector.load %arg10[%c0_71, %c0_72] : memref<56x128xf32, #tpu.memory_space<vmem>>, vector<56x128xf32>
      tpu.vector_store %arg10[%c0_71, %c0_72], %110 {strides = array<i32>} : memref<56x128xf32, #tpu.memory_space<vmem>>, vector<56x128xf32>,
    } else {
    }
    %c0 = arith.constant 0 : index
    %c0_1 = arith.constant 0 : index
    %c0_2 = arith.constant 0 : index
    %3 = vector.load %arg1[%c0, %c0_1, %c0_2] : memref<1x56x512xf32, #tpu.memory_space<vmem>>, vector<1x56x512xf32>
    %4 = vector.shape_cast %3 : vector<1x56x512xf32> to vector<56x512xf32>
    %c0_3 = arith.constant 0 : index
    %c0_4 = arith.constant 0 : index
    %5 = vector.load %arg3[%c0_3, %c0_4] : memref<1x512xf32, #tpu.memory_space<vmem>>, vector<1x512xf32>
    %6 = vector.broadcast %5 : vector<1x512xf32> to vector<56x512xf32>
    %7 = arith.addf %4, %6 : vector<56x512xf32>
    %c2 = arith.constant 2 : index
    %c0_5 = arith.constant 0 : index
    %8 = vector.load %arg9[%c2, %c0_5] : memref<72x128xf32, #tpu.memory_space<vmem>>, vector<56x128xf32>
    %9 = arith.truncf %8 : vector<56x128xf32> to vector<56x128xbf16>
    %c0_6 = arith.constant 0 : index
    %c0_7 = arith.constant 0 : index
    %c0_8 = arith.constant 0 : index
    %10 = vector.load %arg2[%c0_6, %c0_7, %c0_8] : memref<9x128x512xbf16, #tpu.memory_space<vmem>>, vector<1x128x512xbf16>
    %11 = vector.shape_cast %10 : vector<1x128x512xbf16> to vector<128x512xbf16>
    %cst = arith.constant dense<0.000000e+00> : vector<56x512xf32>
    %12 = tpu.matmul %9, %11, %cst {dimension_numbers = #tpu.dot_dimension_numbers<[1], [0], [0], [1], [0, 0, 1, 1], [], []>} : vector<56x128xbf16>, vector<128x512xbf16>, vector<56x512xf32> -> vector<56x512xf32>
    %13 = arith.addf %7, %12 : vector<56x512xf32>
    %c3 = arith.constant 3 : index
    %c0_9 = arith.constant 0 : index
    %14 = vector.load %arg9[%c3, %c0_9] : memref<72x128xf32, #tpu.memory_space<vmem>>, vector<56x128xf32>
    %15 = arith.truncf %14 : vector<56x128xf32> to vector<56x128xbf16>
    %c1 = arith.constant 1 : index
    %c0_10 = arith.constant 0 : index
    %c0_11 = arith.constant 0 : index
    %16 = vector.load %arg2[%c1, %c0_10, %c0_11] : memref<9x128x512xbf16, #tpu.memory_space<vmem>>, vector<1x128x512xbf16>
    %17 = vector.shape_cast %16 : vector<1x128x512xbf16> to vector<128x512xbf16>
    %cst_12 = arith.constant dense<0.000000e+00> : vector<56x512xf32>
    %18 = tpu.matmul %15, %17, %cst_12 {dimension_numbers = #tpu.dot_dimension_numbers<[1], [0], [0], [1], [0, 0, 1, 1], [], []>} : vector<56x128xbf16>, vector<128x512xbf16>, vector<56x512xf32> -> vector<56x512xf32>
    %19 = arith.addf %13, %18 : vector<56x512xf32>
    %c4 = arith.constant 4 : index
    %c0_13 = arith.constant 0 : index
    %20 = vector.load %arg9[%c4, %c0_13] : memref<72x128xf32, #tpu.memory_space<vmem>>, vector<56x128xf32>
    %21 = arith.truncf %20 : vector<56x128xf32> to vector<56x128xbf16>
    %c2_14 = arith.constant 2 : index
    %c0_15 = arith.constant 0 : index
    %c0_16 = arith.constant 0 : index
    %22 = vector.load %arg2[%c2_14, %c0_15, %c0_16] : memref<9x128x512xbf16, #tpu.memory_space<vmem>>, vector<1x128x512xbf16>
    %23 = vector.shape_cast %22 : vector<1x128x512xbf16> to vector<128x512xbf16>
    %cst_17 = arith.constant dense<0.000000e+00> : vector<56x512xf32>
    %24 = tpu.matmul %21, %23, %cst_17 {dimension_numbers = #tpu.dot_dimension_numbers<[1], [0], [0], [1], [0, 0, 1, 1], [], []>} : vector<56x128xbf16>, vector<128x512xbf16>, vector<56x512xf32> -> vector<56x512xf32>
    %25 = arith.addf %19, %24 : vector<56x512xf32>
    %c7 = arith.constant 7 : index
    %c0_18 = arith.constant 0 : index
    %26 = vector.load %arg9[%c7, %c0_18] : memref<72x128xf32, #tpu.memory_space<vmem>>, vector<56x128xf32>
    %27 = arith.truncf %26 : vector<56x128xf32> to vector<56x128xbf16>
    %c3_19 = arith.constant 3 : index
    %c0_20 = arith.constant 0 : index
    %c0_21 = arith.constant 0 : index
    %28 = vector.load %arg2[%c3_19, %c0_20, %c0_21] : memref<9x128x512xbf16, #tpu.memory_space<vmem>>, vector<1x128x512xbf16>
    %29 = vector.shape_cast %28 : vector<1x128x512xbf16> to vector<128x512xbf16>
    %cst_22 = arith.constant dense<0.000000e+00> : vector<56x512xf32>
    %30 = tpu.matmul %27, %29, %cst_22 {dimension_numbers = #tpu.dot_dimension_numbers<[1], [0], [0], [1], [0, 0, 1, 1], [], []>} : vector<56x128xbf16>, vector<128x512xbf16>, vector<56x512xf32> -> vector<56x512xf32>
    %31 = arith.addf %25, %30 : vector<56x512xf32>
    %c8 = arith.constant 8 : index
    %c0_23 = arith.constant 0 : index
    %32 = vector.load %arg9[%c8, %c0_23] : memref<72x128xf32, #tpu.memory_space<vmem>>, vector<56x128xf32>
    %33 = arith.truncf %32 : vector<56x128xf32> to vector<56x128xbf16>
    %c4_24 = arith.constant 4 : index
    %c0_25 = arith.constant 0 : index
    %c0_26 = arith.constant 0 : index
    %34 = vector.load %arg2[%c4_24, %c0_25, %c0_26] : memref<9x128x512xbf16, #tpu.memory_space<vmem>>, vector<1x128x512xbf16>
    %35 = vector.shape_cast %34 : vector<1x128x512xbf16> to vector<128x512xbf16>
    %cst_27 = arith.constant dense<0.000000e+00> : vector<56x512xf32>
    %36 = tpu.matmul %33, %35, %cst_27 {dimension_numbers = #tpu.dot_dimension_numbers<[1], [0], [0], [1], [0, 0, 1, 1], [], []>} : vector<56x128xbf16>, vector<128x512xbf16>, vector<56x512xf32> -> vector<56x512xf32>
    %37 = arith.addf %31, %36 : vector<56x512xf32>
    %c9 = arith.constant 9 : index
    %c0_28 = arith.constant 0 : index
    %38 = vector.load %arg9[%c9, %c0_28] : memref<72x128xf32, #tpu.memory_space<vmem>>, vector<56x128xf32>
    %39 = arith.truncf %38 : vector<56x128xf32> to vector<56x128xbf16>
    %c5 = arith.constant 5 : index
    %c0_29 = arith.constant 0 : index
    %c0_30 = arith.constant 0 : index
    %40 = vector.load %arg2[%c5, %c0_29, %c0_30] : memref<9x128x512xbf16, #tpu.memory_space<vmem>>, vector<1x128x512xbf16>
    %41 = vector.shape_cast %40 : vector<1x128x512xbf16> to vector<128x512xbf16>
    %cst_31 = arith.constant dense<0.000000e+00> : vector<56x512xf32>
    %42 = tpu.matmul %39, %41, %cst_31 {dimension_numbers = #tpu.dot_dimension_numbers<[1], [0], [0], [1], [0, 0, 1, 1], [], []>} : vector<56x128xbf16>, vector<128x512xbf16>, vector<56x512xf32> -> vector<56x512xf32>
    %43 = arith.addf %37, %42 : vector<56x512xf32>
    %c12 = arith.constant 12 : index
    %c0_32 = arith.constant 0 : index
    %44 = vector.load %arg9[%c12, %c0_32] : memref<72x128xf32, #tpu.memory_space<vmem>>, vector<56x128xf32>
    %45 = arith.truncf %44 : vector<56x128xf32> to vector<56x128xbf16>
    %c6 = arith.constant 6 : index
    %c0_33 = arith.constant 0 : index
    %c0_34 = arith.constant 0 : index
    %46 = vector.load %arg2[%c6, %c0_33, %c0_34] : memref<9x128x512xbf16, #tpu.memory_space<vmem>>, vector<1x128x512xbf16>
    %47 = vector.shape_cast %46 : vector<1x128x512xbf16> to vector<128x512xbf16>
    %cst_35 = arith.constant dense<0.000000e+00> : vector<56x512xf32>
    %48 = tpu.matmul %45, %47, %cst_35 {dimension_numbers = #tpu.dot_dimension_numbers<[1], [0], [0], [1], [0, 0, 1, 1], [], []>} : vector<56x128xbf16>, vector<128x512xbf16>, vector<56x512xf32> -> vector<56x512xf32>
    %49 = arith.addf %43, %48 : vector<56x512xf32>
    %c13 = arith.constant 13 : index
    %c0_36 = arith.constant 0 : index
    %50 = vector.load %arg9[%c13, %c0_36] : memref<72x128xf32, #tpu.memory_space<vmem>>, vector<56x128xf32>
    %51 = arith.truncf %50 : vector<56x128xf32> to vector<56x128xbf16>
    %c7_37 = arith.constant 7 : index
    %c0_38 = arith.constant 0 : index
    %c0_39 = arith.constant 0 : index
    %52 = vector.load %arg2[%c7_37, %c0_38, %c0_39] : memref<9x128x512xbf16, #tpu.memory_space<vmem>>, vector<1x128x512xbf16>
    %53 = vector.shape_cast %52 : vector<1x128x512xbf16> to vector<128x512xbf16>
    %cst_40 = arith.constant dense<0.000000e+00> : vector<56x512xf32>
    %54 = tpu.matmul %51, %53, %cst_40 {dimension_numbers = #tpu.dot_dimension_numbers<[1], [0], [0], [1], [0, 0, 1, 1], [], []>} : vector<56x128xbf16>, vector<128x512xbf16>, vector<56x512xf32> -> vector<56x512xf32>
    %55 = arith.addf %49, %54 : vector<56x512xf32>
    %c14 = arith.constant 14 : index
    %c0_41 = arith.constant 0 : index
    %56 = vector.load %arg9[%c14, %c0_41] : memref<72x128xf32, #tpu.memory_space<vmem>>, vector<56x128xf32>
    %57 = arith.truncf %56 : vector<56x128xf32> to vector<56x128xbf16>
    %c8_42 = arith.constant 8 : index
    %c0_43 = arith.constant 0 : index
    %c0_44 = arith.constant 0 : index
    %58 = vector.load %arg2[%c8_42, %c0_43, %c0_44] : memref<9x128x512xbf16, #tpu.memory_space<vmem>>, vector<1x128x512xbf16>
    %59 = vector.shape_cast %58 : vector<1x128x512xbf16> to vector<128x512xbf16>
    %cst_45 = arith.constant dense<0.000000e+00> : vector<56x512xf32>
    %60 = tpu.matmul %57, %59, %cst_45 {dimension_numbers = #tpu.dot_dimension_numbers<[1], [0], [0], [1], [0, 0, 1, 1], [], []>} : vector<56x128xbf16>, vector<128x512xbf16>, vector<56x512xf32> -> vector<56x512xf32>
    %61 = arith.addf %55, %60 : vector<56x512xf32>
    %62 = vector.extract_strided_slice %61 {offsets = [0, 0], sizes = [56, 128], strides = [1, 1]} : vector<56x512xf32> to vector<56x128xf32>
    %63 = vector.extract_strided_slice %61 {offsets = [0, 128], sizes = [56, 128], strides = [1, 1]} : vector<56x512xf32> to vector<56x128xf32>
    %64 = vector.extract_strided_slice %61 {offsets = [0, 256], sizes = [56, 128], strides = [1, 1]} : vector<56x512xf32> to vector<56x128xf32>
    %65 = vector.extract_strided_slice %61 {offsets = [0, 384], sizes = [56, 128], strides = [1, 1]} : vector<56x512xf32> to vector<56x128xf32>
    %c0_46 = arith.constant 0 : index
    %c0_47 = arith.constant 0 : index
    %66 = vector.load %arg10[%c0_46, %c0_47] : memref<56x128xf32, #tpu.memory_space<vmem>>, vector<56x128xf32>
    %67 = math.tanh %63 : vector<56x128xf32>
    %c0_48 = arith.constant 0 : index
    %c0_49 = arith.constant 0 : index
    %68 = vector.load %arg4[%c0_48, %c0_49] : memref<56x128xf32, #tpu.memory_space<vmem>>, vector<56x128xf32>
    %69 = arith.mulf %66, %68 : vector<56x128xf32>
    %70 = arith.addf %62, %69 : vector<56x128xf32>
    %cst_50 = arith.constant 0.000000e+00 : f32
    %71 = vector.broadcast %cst_50 : f32 to vector<56x128xf32>
    %72 = arith.subf %71, %70 : vector<56x128xf32>
    %73 = math.exp %72 : vector<56x128xf32>
    %cst_51 = arith.constant 1.000000e+00 : f32
    %74 = vector.broadcast %cst_51 : f32 to vector<56x128xf32>
    %75 = arith.addf %74, %73 : vector<56x128xf32>
    %76 = tpu.reciprocal %75 {approx = true} : vector<56x128xf32> -> vector<56x128xf32>
    %c0_52 = arith.constant 0 : index
    %c0_53 = arith.constant 0 : index
    %77 = vector.load %arg5[%c0_52, %c0_53] : memref<56x128xf32, #tpu.memory_space<vmem>>, vector<56x128xf32>
    %78 = arith.mulf %66, %77 : vector<56x128xf32>
    %79 = arith.addf %65, %78 : vector<56x128xf32>
    %cst_54 = arith.constant 0.000000e+00 : f32
    %80 = vector.broadcast %cst_54 : f32 to vector<56x128xf32>
    %81 = arith.subf %80, %79 : vector<56x128xf32>
    %82 = math.exp %81 : vector<56x128xf32>
    %cst_55 = arith.constant 1.000000e+00 : f32
    %83 = vector.broadcast %cst_55 : f32 to vector<56x128xf32>
    %84 = arith.addf %83, %82 : vector<56x128xf32>
    %85 = tpu.reciprocal %84 {approx = true} : vector<56x128xf32> -> vector<56x128xf32>
    %86 = arith.mulf %85, %66 : vector<56x128xf32>
    %87 = arith.mulf %76, %67 : vector<56x128xf32>
    %88 = arith.addf %86, %87 : vector<56x128xf32>
    %c0_56 = arith.constant 0 : index
    %c0_57 = arith.constant 0 : index
    %89 = vector.load %arg6[%c0_56, %c0_57] : memref<56x128xf32, #tpu.memory_space<vmem>>, vector<56x128xf32>
    %90 = arith.mulf %88, %89 : vector<56x128xf32>
    %91 = arith.addf %64, %90 : vector<56x128xf32>
    %cst_58 = arith.constant 0.000000e+00 : f32
    %92 = vector.broadcast %cst_58 : f32 to vector<56x128xf32>
    %93 = arith.subf %92, %91 : vector<56x128xf32>
    %94 = math.exp %93 : vector<56x128xf32>
    %cst_59 = arith.constant 1.000000e+00 : f32
    %95 = vector.broadcast %cst_59 : f32 to vector<56x128xf32>
    %96 = arith.addf %95, %94 : vector<56x128xf32>
    %97 = tpu.reciprocal %96 {approx = true} : vector<56x128xf32> -> vector<56x128xf32>
    %98 = math.tanh %88 : vector<56x128xf32>
    %99 = arith.mulf %97, %98 : vector<56x128xf32>
    %c0_60 = arith.constant 0 : index
    %c0_61 = arith.constant 0 : index
    %100 = vector.load %arg7[%c0_60, %c0_61] : memref<56x128xf32, #tpu.memory_space<vmem>>, vector<56x128xf32>
    %101 = arith.mulf %99, %100 : vector<56x128xf32>
    %102 = arith.mulf %88, %100 : vector<56x128xf32>
    %c8_62 = arith.constant 8 : index
    %c0_63 = arith.constant 0 : index
    %103 = vector.load %arg9[%c8_62, %c0_63] : memref<72x128xf32, #tpu.memory_space<vmem>>, vector<56x128xf32>
    tpu.vector_store %arg9[%c8_62, %c0_63], %101 {strides = array<i32>} : memref<72x128xf32, #tpu.memory_space<vmem>>, vector<56x128xf32>,
    %c0_64 = arith.constant 0 : index
    %c0_65 = arith.constant 0 : index
    %104 = vector.load %arg10[%c0_64, %c0_65] : memref<56x128xf32, #tpu.memory_space<vmem>>, vector<56x128xf32>
    tpu.vector_store %arg10[%c0_64, %c0_65], %102 {strides = array<i32>} : memref<56x128xf32, #tpu.memory_space<vmem>>, vector<56x128xf32>,
    %c3_i32 = arith.constant 3 : i32
    %105 = arith.cmpi eq, %arg0, %c3_i32 : i32
    %106 = arith.extui %105 : i1 to i32
    %c0_i32_66 = arith.constant 0 : i32
    %107 = arith.cmpi ne, %106, %c0_i32_66 : i32
    scf.if %107 {
      %c0_67 = arith.constant 0 : index
      %c0_68 = arith.constant 0 : index
      %108 = vector.load %arg8[%c0_67, %c0_68] : memref<56x256xf32, #tpu.memory_space<vmem>>, vector<56x128xf32>
      tpu.vector_store %arg8[%c0_67, %c0_68], %101 {strides = array<i32>} : memref<56x256xf32, #tpu.memory_space<vmem>>, vector<56x128xf32>,
      %c0_69 = arith.constant 0 : index
      %c128 = arith.constant 128 : index
      %109 = vector.load %arg8[%c0_69, %c128] : memref<56x256xf32, #tpu.memory_space<vmem>>, vector<56x128xf32>
      tpu.vector_store %arg8[%c0_69, %c128], %102 {strides = array<i32>} : memref<56x256xf32, #tpu.memory_space<vmem>>, vector<56x128xf32>,
    } else {
    }
    return
  }
  func.func @transform_0(%arg0: i32) -> (i32, i32, i32) {
    %c0_i32 = arith.constant 0 : i32
    %c0_i32_0 = arith.constant 0 : i32
    %c0_i32_1 = arith.constant 0 : i32
    return %arg0, %c0_i32, %c0_i32_0 : i32, i32, i32
  }
  func.func @transform_1(%arg0: i32) -> (i32, i32, i32) {
    %c0_i32 = arith.constant 0 : i32
    %c0_i32_0 = arith.constant 0 : i32
    %c0_i32_1 = arith.constant 0 : i32
    %c0_i32_2 = arith.constant 0 : i32
    return %c0_i32, %c0_i32_0, %c0_i32_1 : i32, i32, i32
  }
  func.func @transform_2(%arg0: i32) -> (i32, i32) {
    %c0_i32 = arith.constant 0 : i32
    %c0_i32_0 = arith.constant 0 : i32
    %c0_i32_1 = arith.constant 0 : i32
    return %c0_i32, %c0_i32_0 : i32, i32
  }
  func.func @transform_3(%arg0: i32) -> (i32, i32) {
    %c0_i32 = arith.constant 0 : i32
    %c0_i32_0 = arith.constant 0 : i32
    %c0_i32_1 = arith.constant 0 : i32
    return %c0_i32, %c0_i32_0 : i32, i32
  }
  func.func @transform_4(%arg0: i32) -> (i32, i32) {
    %c0_i32 = arith.constant 0 : i32
    %c0_i32_0 = arith.constant 0 : i32
    %c0_i32_1 = arith.constant 0 : i32
    return %c0_i32, %c0_i32_0 : i32, i32
  }
  func.func @transform_5(%arg0: i32) -> (i32, i32) {
    %c0_i32 = arith.constant 0 : i32
    %c0_i32_0 = arith.constant 0 : i32
    %c0_i32_1 = arith.constant 0 : i32
    return %c0_i32, %c0_i32_0 : i32, i32
  }
  func.func @transform_6(%arg0: i32) -> (i32, i32) {
    %c0_i32 = arith.constant 0 : i32
    %c0_i32_0 = arith.constant 0 : i32
    %c0_i32_1 = arith.constant 0 : i32
    return %c0_i32, %c0_i32_0 : i32, i32
  }
  func.func @transform_7(%arg0: i32) -> (i32, i32) {
    %c0_i32 = arith.constant 0 : i32
    %c0_i32_0 = arith.constant 0 : i32
    %c0_i32_1 = arith.constant 0 : i32
    return %c0_i32, %c0_i32_0 : i32, i32
  }
}

</mosaic_0001>

<llo_original>
// kernel: _lambda_.3
$region0: #{_lambda_.3}
  #allocation0 [shape = 'u32[]', space=smem, size = 0x4, offset = 0x4, fixed_abs, tag = 'smem constant byte address 0x4 - core index']
  #allocation1 [shape = 'u32[72,128]{1,0:T(1,128)}', space=vmem, size = 0x9000, scoped, tag = 'internal scratch']
  %s0 = inlined_call_operand.vmem [shape: bf16[392,128], index: 0, kind: input, shape index: {}]
  %s1 = inlined_call_operand.vmem [shape: bf16[128,128], index: 1, kind: input, shape index: {}]
  %s2 = inlined_call_operand.vmem [shape: f32[1,128], index: 2, kind: input, shape index: {}]
  %s3 = inlined_call_operand.vmem [shape: f32[1,128], index: 3, kind: input, shape index: {}]
  %s4 = inlined_call_operand.vmem [shape: f32[1,128], index: 4, kind: input, shape index: {}]
  %s5 = inlined_call_operand.vmem [shape: f32[392,128], index: 5, kind: output, shape index: {}]
  %s6 = sld [smem:[#allocation0]]
  $region30: #{_lambda_.3} parent=0
    _
  %s8 = ssub.s32 1, %s6
  %s9 = scalar_select 0, %s8, %s6
  // Predicated region
  $region2: #{_lambda_.3} parent=0 // pred_check
    _
  $region3: #{_lambda_.3} parent=0 // pred_check_branch
    %11 = sbr.rel (0) target = $region5
  $region4: #{_lambda_.3} parent=0 // pred_region
    _
  $region5: #{_lambda_.3} parent=0 // pred_fallthru
    _
  // Predicated region
  $region6: #{_lambda_.3} parent=0 // pred_check
    _
  $region7: #{_lambda_.3} parent=0 // pred_check_branch
    %13 = sbr.rel (0) target = $region9
  $region8: #{_lambda_.3} parent=0 // pred_region
    _
  $region9: #{_lambda_.3} parent=0 // pred_fallthru
    _
  // Predicated region
  $region10: #{_lambda_.3} parent=0 // pred_check
    _
  $region11: #{_lambda_.3} parent=0 // pred_check_branch
    %15 = sbr.rel (0) target = $region13
  $region12: #{_lambda_.3} parent=0 // pred_region
    _
  $region13: #{_lambda_.3} parent=0 // pred_fallthru
    _
  // Predicated region
  $region14: #{_lambda_.3} parent=0 // pred_check
    _
  $region15: #{_lambda_.3} parent=0 // pred_check_branch
    %17 = sbr.rel (0) target = $region17
  $region16: #{_lambda_.3} parent=0 // pred_region
    _
  $region17: #{_lambda_.3} parent=0 // pred_fallthru
    _
  // Predicated region
  $region18: #{_lambda_.3} parent=0 // pred_check
    _
  $region19: #{_lambda_.3} parent=0 // pred_check_branch
    %19 = sbr.rel (0) target = $region21
  $region20: #{_lambda_.3} parent=0 // pred_region
    _
  $region21: #{_lambda_.3} parent=0 // pred_fallthru
    _
  %v20 = vld [vmem:[%s0] sm:$0xf]
  %v21 = vld [vmem:[%s0 + $0x4] sm:$0xf]
  %v22 = vld [vmem:[%s0 + $0x8] sm:$0xf]
  %v23 = vld [vmem:[%s0 + $0xc] sm:$0xf]
  %v24 = vld [vmem:[%s0 + $0x10] sm:$0xf]
  %v25 = vld [vmem:[%s0 + $0x14] sm:$0xf]
  %v26 = vld [vmem:[%s0 + $0x18] sm:$0xf]
  %v27 = vld [vmem:[%s0 + $0x1c] sm:$0xf]
  %v28 = vld [vmem:[%s0 + $0x20] sm:$0xf]
  %v29 = vld [vmem:[%s0 + $0x24] sm:$0xf]
  %v30 = vld [vmem:[%s0 + $0x28] sm:$0xf]
  %v31 = vld [vmem:[%s0 + $0x2c] sm:$0xf]
  %v32 = vld [vmem:[%s0 + $0x30] sm:$0xf]
  %v33 = vld [vmem:[%s0 + $0x34] sm:$0xf]
  %v34 = vld [vmem:[%s0 + $0x38] sm:$0xf]
  %v35 = vld [vmem:[%s0 + $0x3c] sm:$0xf]
  %v36 = vld [vmem:[%s0 + $0x40] sm:$0xf]
  %v37 = vld [vmem:[%s0 + $0x44] sm:$0xf]
  %v38 = vld [vmem:[%s0 + $0x48] sm:$0xf]
  %v39 = vld [vmem:[%s0 + $0x4c] sm:$0xf]
  %v40 = vld [vmem:[%s0 + $0x50] sm:$0xf]
  %v41 = vld [vmem:[%s0 + $0x54] sm:$0xf]
  %v42 = vld [vmem:[%s0 + $0x58] sm:$0xf]
  %v43 = vld [vmem:[%s0 + $0x5c] sm:$0xf]
  %v44 = vld [vmem:[%s0 + $0x60] sm:$0xf]
  %v45 = vld [vmem:[%s0 + $0x64] sm:$0xf]
  %v46 = vld [vmem:[%s0 + $0x68] sm:$0xf]
  %v47 = vld [vmem:[%s0 + $0x6c] sm:$0xf]
  %v48 = vld [vmem:[%s0 + $0x70] sm:$0xf]
  %v49 = vld [vmem:[%s0 + $0x74] sm:$0xf]
  %v50 = vld [vmem:[%s0 + $0x78] sm:$0xf]
  %v51 = vld [vmem:[%s0 + $0x7c] sm:$0xf]
  %v52 = vld [vmem:[%s0 + $0x80] sm:$0xf]
  %v53 = vld [vmem:[%s0 + $0x84] sm:$0xf]
  %v54 = vld [vmem:[%s0 + $0x88] sm:$0xf]
  %v55 = vld [vmem:[%s0 + $0x8c] sm:$0xf]
  %v56 = vld [vmem:[%s0 + $0x90] sm:$0xf]
  %v57 = vld [vmem:[%s0 + $0x94] sm:$0xf]
  %v58 = vld [vmem:[%s0 + $0x98] sm:$0xf]
  %v59 = vld [vmem:[%s0 + $0x9c] sm:$0xf]
  %v60 = vld [vmem:[%s0 + $0xa0] sm:$0xf]
  %v61 = vld [vmem:[%s0 + $0xa4] sm:$0xf]
  %v62 = vld [vmem:[%s0 + $0xa8] sm:$0xf]
  %v63 = vld [vmem:[%s0 + $0xac] sm:$0xf]
  %v64 = vld [vmem:[%s0 + $0xb0] sm:$0xf]
  %v65 = vld [vmem:[%s0 + $0xb4] sm:$0xf]
  %v66 = vld [vmem:[%s0 + $0xb8] sm:$0xf]
  %v67 = vld [vmem:[%s0 + $0xbc] sm:$0xf]
  %v68 = vld [vmem:[%s0 + $0xc0] sm:$0xf]
  %v69 = vld [vmem:[%s1] sm:$0xf]
  %v70 = vld [vmem:[%s1 + $0x4] sm:$0xf]
  %v71 = vld [vmem:[%s1 + $0x8] sm:$0xf]
  %v72 = vld [vmem:[%s1 + $0xc] sm:$0xf]
  %v73 = vld [vmem:[%s1 + $0x10] sm:$0xf]
  %v74 = vld [vmem:[%s1 + $0x14] sm:$0xf]
  %v75 = vld [vmem:[%s1 + $0x18] sm:$0xf]
  %v76 = vld [vmem:[%s1 + $0x1c] sm:$0xf]
  %v77 = vld [vmem:[%s1 + $0x20] sm:$0xf]
  %v78 = vld [vmem:[%s1 + $0x24] sm:$0xf]
  %v79 = vld [vmem:[%s1 + $0x28] sm:$0xf]
  %v80 = vld [vmem:[%s1 + $0x2c] sm:$0xf]
  %v81 = vld [vmem:[%s1 + $0x30] sm:$0xf]
  %v82 = vld [vmem:[%s1 + $0x34] sm:$0xf]
  %v83 = vld [vmem:[%s1 + $0x38] sm:$0xf]
  %v84 = vld [vmem:[%s1 + $0x3c] sm:$0xf]
  %v85 = vld [vmem:[%s2] sm:$0x1]
  %v87 = vperm.slane %v85, 0
  %v138 = vunpack.c.l.b16 %v20
  %v139 = vunpack.c.l.b16 %v21
  %v140 = vunpack.c.l.b16 %v22
  %v141 = vunpack.c.l.b16 %v23
  %v142 = vunpack.c.l.b16 %v24
  %v143 = vunpack.c.l.b16 %v25
  %v144 = vunpack.c.l.b16 %v26
  %v145 = vunpack.c.l.b16 %v27
  %v146 = vunpack.c.l.b16 %v28
  %v147 = vunpack.c.l.b16 %v29
  %v148 = vunpack.c.l.b16 %v30
  %v149 = vunpack.c.l.b16 %v31
  %v150 = vunpack.c.l.b16 %v32
  %v151 = vunpack.c.l.b16 %v33
  %v152 = vunpack.c.l.b16 %v34
  %v153 = vunpack.c.l.b16 %v35
  %v154 = vunpack.c.l.b16 %v36
  %v155 = vunpack.c.l.b16 %v37
  %v156 = vunpack.c.l.b16 %v38
  %v157 = vunpack.c.l.b16 %v39
  %v158 = vunpack.c.l.b16 %v40
  %v159 = vunpack.c.l.b16 %v41
  %v160 = vunpack.c.l.b16 %v42
  %v161 = vunpack.c.l.b16 %v43
  %v162 = vunpack.c.l.b16 %v44
  %v163 = vunpack.c.l.b16 %v45
  %v164 = vunpack.c.l.b16 %v46
  %v165 = vunpack.c.l.b16 %v47
  %v166 = vunpack.c.l.b16 %v48
  %v167 = vunpack.c.l.b16 %v49
  %v168 = vunpack.c.l.b16 %v50
  %v169 = vunpack.c.l.b16 %v51
  %v170 = vunpack.c.l.b16 %v52
  %v171 = vunpack.c.l.b16 %v53
  %v172 = vunpack.c.l.b16 %v54
  %v173 = vunpack.c.l.b16 %v55
  %v174 = vunpack.c.l.b16 %v56
  %v175 = vunpack.c.l.b16 %v57
  %v176 = vunpack.c.l.b16 %v58
  %v177 = vunpack.c.l.b16 %v59
  %v178 = vunpack.c.l.b16 %v60
  %v179 = vunpack.c.l.b16 %v61
  %v180 = vunpack.c.l.b16 %v62
  %v181 = vunpack.c.l.b16 %v63
  %v182 = vunpack.c.l.b16 %v64
  %v183 = vunpack.c.l.b16 %v65
  %v184 = vunpack.c.l.b16 %v66
  %v185 = vunpack.c.l.b16 %v67
  %v186 = vunpack.c.l.b16 %v68
  %v187 = vpack.c.b16 %v139, %v138
  %v188 = vpack.c.b16 %v141, %v140
  %v189 = vpack.c.b16 %v143, %v142
  %v190 = vpack.c.b16 %v145, %v144
  %v191 = vpack.c.b16 %v147, %v146
  %v192 = vpack.c.b16 %v149, %v148
  %v193 = vpack.c.b16 %v151, %v150
  %v194 = vpack.c.b16 %v153, %v152
  %v195 = vpack.c.b16 %v155, %v154
  %v196 = vpack.c.b16 %v157, %v156
  %v197 = vpack.c.b16 %v159, %v158
  %v198 = vpack.c.b16 %v161, %v160
  %v199 = vpack.c.b16 %v163, %v162
  %v200 = vpack.c.b16 %v165, %v164
  %v201 = vpack.c.b16 %v167, %v166
  %v202 = vpack.c.b16 %v169, %v168
  %v203 = vpack.c.b16 %v171, %v170
  %v204 = vpack.c.b16 %v173, %v172
  %v205 = vpack.c.b16 %v175, %v174
  %v206 = vpack.c.b16 %v177, %v176
  %v207 = vpack.c.b16 %v179, %v178
  %v208 = vpack.c.b16 %v181, %v180
  %v209 = vpack.c.b16 %v183, %v182
  %v210 = vpack.c.b16 %v185, %v184
  %v211 = vpack.c.b16 %v186, %v186
  %v253 = vunpack.c.l.b16 %v69
  %v254 = vunpack.c.l.b16 %v70
  %v255 = vunpack.c.l.b16 %v71
  %v256 = vunpack.c.l.b16 %v72
  %v257 = vunpack.c.l.b16 %v73
  %v258 = vunpack.c.l.b16 %v74
  %v259 = vunpack.c.l.b16 %v75
  %v260 = vunpack.c.l.b16 %v76
  %v261 = vunpack.c.l.b16 %v77
  %v262 = vunpack.c.l.b16 %v78
  %v263 = vunpack.c.l.b16 %v79
  %v264 = vunpack.c.l.b16 %v80
  %v265 = vunpack.c.l.b16 %v81
  %v266 = vunpack.c.l.b16 %v82
  %v267 = vunpack.c.l.b16 %v83
  %v268 = vunpack.c.l.b16 %v84
  %v269 = vpack.c.b16 %v254, %v253
  %v270 = vpack.c.b16 %v256, %v255
  %v271 = vpack.c.b16 %v258, %v257
  %v272 = vpack.c.b16 %v260, %v259
  %v273 = vpack.c.b16 %v262, %v261
  %v274 = vpack.c.b16 %v264, %v263
  %v275 = vpack.c.b16 %v266, %v265
  %v276 = vpack.c.b16 %v268, %v267
  %285 = vmatpush.bf16.msra.mxu0 %v276
  %286 = vmatpush.bf16.msra.mxu0 %v275
  %287 = vmatpush.bf16.msra.mxu0 %v274
  %288 = vmatpush.bf16.msra.mxu0 %v273
  %289 = vmatpush.bf16.msra.mxu0 %v272
  %290 = vmatpush.bf16.msra.mxu0 %v271
  %291 = vmatpush.bf16.msra.mxu0 %v270
  %292 = vmatpush.bf16.msra.mxu0 %v269
  %293 = vmatmul.bf16.gmra.mxu0 %v187
  %v294 = vpop.f32.mrf.mxu0
  %v295 = vadd.f32 %v87, %v294
  %v296 = vpop.f32.mrf.mxu0
  %v297 = vadd.f32 %v87, %v296
  %298 = vmatmul.bf16.gmra.mxu0 %v188
  %v299 = vpop.f32.mrf.mxu0
  %v300 = vadd.f32 %v87, %v299
  %v301 = vpop.f32.mrf.mxu0
  %v302 = vadd.f32 %v87, %v301
  %303 = vmatmul.bf16.gmra.mxu0 %v189
  %v304 = vpop.f32.mrf.mxu0
  %v305 = vadd.f32 %v87, %v304
  %v306 = vpop.f32.mrf.mxu0
  %v307 = vadd.f32 %v87, %v306
  %308 = vmatmul.bf16.gmra.mxu0 %v190
  %v309 = vpop.f32.mrf.mxu0
  %v310 = vadd.f32 %v87, %v309
  %v311 = vpop.f32.mrf.mxu0
  %v312 = vadd.f32 %v87, %v311
  %313 = vmatmul.bf16.gmra.mxu0 %v191
  %v314 = vpop.f32.mrf.mxu0
  %v315 = vadd.f32 %v87, %v314
  %v316 = vpop.f32.mrf.mxu0
  %v317 = vadd.f32 %v87, %v316
  %318 = vmatmul.bf16.gmra.mxu0 %v192
  %v319 = vpop.f32.mrf.mxu0
  %v320 = vadd.f32 %v87, %v319
  %v321 = vpop.f32.mrf.mxu0
  %v322 = vadd.f32 %v87, %v321
  %323 = vmatmul.bf16.gmra.mxu0 %v193
  %v324 = vpop.f32.mrf.mxu0
  %v325 = vadd.f32 %v87, %v324
  %v326 = vpop.f32.mrf.mxu0
  %v327 = vadd.f32 %v87, %v326
  %328 = vmatmul.bf16.gmra.mxu0 %v194
  %v329 = vpop.f32.mrf.mxu0
  %v330 = vadd.f32 %v87, %v329
  %v331 = vpop.f32.mrf.mxu0
  %v332 = vadd.f32 %v87, %v331
  %333 = vmatmul.bf16.gmra.mxu0 %v195
  %v334 = vpop.f32.mrf.mxu0
  %v335 = vadd.f32 %v87, %v334
  %v336 = vpop.f32.mrf.mxu0
  %v337 = vadd.f32 %v87, %v336
  %338 = vmatmul.bf16.gmra.mxu0 %v196
  %v339 = vpop.f32.mrf.mxu0
  %v340 = vadd.f32 %v87, %v339
  %v341 = vpop.f32.mrf.mxu0
  %v342 = vadd.f32 %v87, %v341
  %343 = vmatmul.bf16.gmra.mxu0 %v197
  %v344 = vpop.f32.mrf.mxu0
  %v345 = vadd.f32 %v87, %v344
  %v346 = vpop.f32.mrf.mxu0
  %v347 = vadd.f32 %v87, %v346
  %348 = vmatmul.bf16.gmra.mxu0 %v198
  %v349 = vpop.f32.mrf.mxu0
  %v350 = vadd.f32 %v87, %v349
  %v351 = vpop.f32.mrf.mxu0
  %v352 = vadd.f32 %v87, %v351
  %353 = vmatmul.bf16.gmra.mxu0 %v199
  %v354 = vpop.f32.mrf.mxu0
  %v355 = vadd.f32 %v87, %v354
  %v356 = vpop.f32.mrf.mxu0
  %v357 = vadd.f32 %v87, %v356
  %358 = vmatmul.bf16.gmra.mxu0 %v200
  %v359 = vpop.f32.mrf.mxu0
  %v360 = vadd.f32 %v87, %v359
  %v361 = vpop.f32.mrf.mxu0
  %v362 = vadd.f32 %v87, %v361
  %363 = vmatmul.bf16.gmra.mxu0 %v201
  %v364 = vpop.f32.mrf.mxu0
  %v365 = vadd.f32 %v87, %v364
  %v366 = vpop.f32.mrf.mxu0
  %v367 = vadd.f32 %v87, %v366
  %368 = vmatmul.bf16.gmra.mxu0 %v202
  %v369 = vpop.f32.mrf.mxu0
  %v370 = vadd.f32 %v87, %v369
  %v371 = vpop.f32.mrf.mxu0
  %v372 = vadd.f32 %v87, %v371
  %373 = vmatmul.bf16.gmra.mxu0 %v203
  %v374 = vpop.f32.mrf.mxu0
  %v375 = vadd.f32 %v87, %v374
  %v376 = vpop.f32.mrf.mxu0
  %v377 = vadd.f32 %v87, %v376
  %378 = vmatmul.bf16.gmra.mxu0 %v204
  %v379 = vpop.f32.mrf.mxu0
  %v380 = vadd.f32 %v87, %v379
  %v381 = vpop.f32.mrf.mxu0
  %v382 = vadd.f32 %v87, %v381
  %383 = vmatmul.bf16.gmra.mxu0 %v205
  %v384 = vpop.f32.mrf.mxu0
  %v385 = vadd.f32 %v87, %v384
  %v386 = vpop.f32.mrf.mxu0
  %v387 = vadd.f32 %v87, %v386
  %388 = vmatmul.bf16.gmra.mxu0 %v206
  %v389 = vpop.f32.mrf.mxu0
  %v390 = vadd.f32 %v87, %v389
  %v391 = vpop.f32.mrf.mxu0
  %v392 = vadd.f32 %v87, %v391
  %393 = vmatmul.bf16.gmra.mxu0 %v207
  %v394 = vpop.f32.mrf.mxu0
  %v395 = vadd.f32 %v87, %v394
  %v396 = vpop.f32.mrf.mxu0
  %v397 = vadd.f32 %v87, %v396
  %398 = vmatmul.bf16.gmra.mxu0 %v208
  %v399 = vpop.f32.mrf.mxu0
  %v400 = vadd.f32 %v87, %v399
  %v401 = vpop.f32.mrf.mxu0
  %v402 = vadd.f32 %v87, %v401
  %403 = vmatmul.bf16.gmra.mxu0 %v209
  %v404 = vpop.f32.mrf.mxu0
  %v405 = vadd.f32 %v87, %v404
  %v406 = vpop.f32.mrf.mxu0
  %v407 = vadd.f32 %v87, %v406
  %408 = vmatmul.bf16.gmra.mxu0 %v210
  %v409 = vpop.f32.mrf.mxu0
  %v410 = vadd.f32 %v87, %v409
  %v411 = vpop.f32.mrf.mxu0
  %v412 = vadd.f32 %v87, %v411
  %413 = vmatmul.bf16.gmra.mxu0 %v211
  %v414 = vpop.f32.mrf.mxu0
  %v415 = vadd.f32 %v87, %v414
  %v416 = vpop.f32.mrf.mxu0
  %417 = vdwg.mxu0
  %v418 = vmax.f32 %v295, 0.0
  %v419 = vmax.f32 %v297, 0.0
  %v420 = vmax.f32 %v300, 0.0
  %v421 = vmax.f32 %v302, 0.0
  %v422 = vmax.f32 %v305, 0.0
  %v423 = vmax.f32 %v307, 0.0
  %v424 = vmax.f32 %v310, 0.0
  %v425 = vmax.f32 %v312, 0.0
  %v426 = vmax.f32 %v315, 0.0
  %v427 = vmax.f32 %v317, 0.0
  %v428 = vmax.f32 %v320, 0.0
  %v429 = vmax.f32 %v322, 0.0
  %v430 = vmax.f32 %v325, 0.0
  %v431 = vmax.f32 %v327, 0.0
  %v432 = vmax.f32 %v330, 0.0
  %v433 = vmax.f32 %v332, 0.0
  %v434 = vmax.f32 %v335, 0.0
  %v435 = vmax.f32 %v337, 0.0
  %v436 = vmax.f32 %v340, 0.0
  %v437 = vmax.f32 %v342, 0.0
  %v438 = vmax.f32 %v345, 0.0
  %v439 = vmax.f32 %v347, 0.0
  %v440 = vmax.f32 %v350, 0.0
  %v441 = vmax.f32 %v352, 0.0
  %v442 = vmax.f32 %v355, 0.0
  %v443 = vmax.f32 %v357, 0.0
  %v444 = vmax.f32 %v360, 0.0
  %v445 = vmax.f32 %v362, 0.0
  %v446 = vmax.f32 %v365, 0.0
  %v447 = vmax.f32 %v367, 0.0
  %v448 = vmax.f32 %v370, 0.0
  %v449 = vmax.f32 %v372, 0.0
  %v450 = vmax.f32 %v375, 0.0
  %v451 = vmax.f32 %v377, 0.0
  %v452 = vmax.f32 %v380, 0.0
  %v453 = vmax.f32 %v382, 0.0
  %v454 = vmax.f32 %v385, 0.0
  %v455 = vmax.f32 %v387, 0.0
  %v456 = vmax.f32 %v390, 0.0
  %v457 = vmax.f32 %v392, 0.0
  %v458 = vmax.f32 %v395, 0.0
  %v459 = vmax.f32 %v397, 0.0
  %v460 = vmax.f32 %v400, 0.0
  %v461 = vmax.f32 %v402, 0.0
  %v462 = vmax.f32 %v405, 0.0
  %v463 = vmax.f32 %v407, 0.0
  %v464 = vmax.f32 %v410, 0.0
  %v465 = vmax.f32 %v412, 0.0
  %v466 = vmax.f32 %v415, 0.0
  %v467 = vld [vmem:[%s3] sm:$0x1]
  %v469 = vperm.slane %v467, 0
  %v471 = vmul.f32 %v418, %v469
  %v472 = vmul.f32 %v419, %v469
  %v473 = vmul.f32 %v420, %v469
  %v474 = vmul.f32 %v421, %v469
  %v475 = vmul.f32 %v422, %v469
  %v476 = vmul.f32 %v423, %v469
  %v477 = vmul.f32 %v424, %v469
  %v478 = vmul.f32 %v425, %v469
  %v479 = vmul.f32 %v426, %v469
  %v480 = vmul.f32 %v427, %v469
  %v481 = vmul.f32 %v428, %v469
  %v482 = vmul.f32 %v429, %v469
  %v483 = vmul.f32 %v430, %v469
  %v484 = vmul.f32 %v431, %v469
  %v485 = vmul.f32 %v432, %v469
  %v486 = vmul.f32 %v433, %v469
  %v487 = vmul.f32 %v434, %v469
  %v488 = vmul.f32 %v435, %v469
  %v489 = vmul.f32 %v436, %v469
  %v490 = vmul.f32 %v437, %v469
  %v491 = vmul.f32 %v438, %v469
  %v492 = vmul.f32 %v439, %v469
  %v493 = vmul.f32 %v440, %v469
  %v494 = vmul.f32 %v441, %v469
  %v495 = vmul.f32 %v442, %v469
  %v496 = vmul.f32 %v443, %v469
  %v497 = vmul.f32 %v444, %v469
  %v498 = vmul.f32 %v445, %v469
  %v499 = vmul.f32 %v446, %v469
  %v500 = vmul.f32 %v447, %v469
  %v501 = vmul.f32 %v448, %v469
  %v502 = vmul.f32 %v449, %v469
  %v503 = vmul.f32 %v450, %v469
  %v504 = vmul.f32 %v451, %v469
  %v505 = vmul.f32 %v452, %v469
  %v506 = vmul.f32 %v453, %v469
  %v507 = vmul.f32 %v454, %v469
  %v508 = vmul.f32 %v455, %v469
  %v509 = vmul.f32 %v456, %v469
  %v510 = vmul.f32 %v457, %v469
  %v511 = vmul.f32 %v458, %v469
  %v512 = vmul.f32 %v459, %v469
  %v513 = vmul.f32 %v460, %v469
  %v514 = vmul.f32 %v461, %v469
  %v515 = vmul.f32 %v462, %v469
  %v516 = vmul.f32 %v463, %v469
  %v517 = vmul.f32 %v464, %v469
  %v518 = vmul.f32 %v465, %v469
  %v519 = vmul.f32 %v466, %v469
  %v520 = vld [vmem:[%s4] sm:$0x1]
  %v522 = vperm.slane %v520, 0
  %v524 = vadd.f32 %v471, %v522
  %v525 = vadd.f32 %v472, %v522
  %v526 = vadd.f32 %v473, %v522
  %v527 = vadd.f32 %v474, %v522
  %v528 = vadd.f32 %v475, %v522
  %v529 = vadd.f32 %v476, %v522
  %v530 = vadd.f32 %v477, %v522
  %v531 = vadd.f32 %v478, %v522
  %v532 = vadd.f32 %v479, %v522
  %v533 = vadd.f32 %v480, %v522
  %v534 = vadd.f32 %v481, %v522
  %v535 = vadd.f32 %v482, %v522
  %v536 = vadd.f32 %v483, %v522
  %v537 = vadd.f32 %v484, %v522
  %v538 = vadd.f32 %v485, %v522
  %v539 = vadd.f32 %v486, %v522
  %v540 = vadd.f32 %v487, %v522
  %v541 = vadd.f32 %v488, %v522
  %v542 = vadd.f32 %v489, %v522
  %v543 = vadd.f32 %v490, %v522
  %v544 = vadd.f32 %v491, %v522
  %v545 = vadd.f32 %v492, %v522
  %v546 = vadd.f32 %v493, %v522
  %v547 = vadd.f32 %v494, %v522
  %v548 = vadd.f32 %v495, %v522
  %v549 = vadd.f32 %v496, %v522
  %v550 = vadd.f32 %v497, %v522
  %v551 = vadd.f32 %v498, %v522
  %v552 = vadd.f32 %v499, %v522
  %v553 = vadd.f32 %v500, %v522
  %v554 = vadd.f32 %v501, %v522
  %v555 = vadd.f32 %v502, %v522
  %v556 = vadd.f32 %v503, %v522
  %v557 = vadd.f32 %v504, %v522
  %v558 = vadd.f32 %v505, %v522
  %v559 = vadd.f32 %v506, %v522
  %v560 = vadd.f32 %v507, %v522
  %v561 = vadd.f32 %v508, %v522
  %v562 = vadd.f32 %v509, %v522
  %v563 = vadd.f32 %v510, %v522
  %v564 = vadd.f32 %v511, %v522
  %v565 = vadd.f32 %v512, %v522
  %v566 = vadd.f32 %v513, %v522
  %v567 = vadd.f32 %v514, %v522
  %v568 = vadd.f32 %v515, %v522
  %v569 = vadd.f32 %v516, %v522
  %v570 = vadd.f32 %v517, %v522
  %v571 = vadd.f32 %v518, %v522
  %v572 = vadd.f32 %v519, %v522
  %573 = vst [vmem:[%s5] sm:$0xff] %v524
  %574 = vst [vmem:[%s5 + $0x8] sm:$0xff] %v525
  %575 = vst [vmem:[%s5 + $0x10] sm:$0xff] %v526
  %576 = vst [vmem:[%s5 + $0x18] sm:$0xff] %v527
  %577 = vst [vmem:[%s5 + $0x20] sm:$0xff] %v528
  %578 = vst [vmem:[%s5 + $0x28] sm:$0xff] %v529
  %579 = vst [vmem:[%s5 + $0x30] sm:$0xff] %v530
  %580 = vst [vmem:[%s5 + $0x38] sm:$0xff] %v531
  %581 = vst [vmem:[%s5 + $0x40] sm:$0xff] %v532
  %582 = vst [vmem:[%s5 + $0x48] sm:$0xff] %v533
  %583 = vst [vmem:[%s5 + $0x50] sm:$0xff] %v534
  %584 = vst [vmem:[%s5 + $0x58] sm:$0xff] %v535
  %585 = vst [vmem:[%s5 + $0x60] sm:$0xff] %v536
  %586 = vst [vmem:[%s5 + $0x68] sm:$0xff] %v537
  %587 = vst [vmem:[%s5 + $0x70] sm:$0xff] %v538
  %588 = vst [vmem:[%s5 + $0x78] sm:$0xff] %v539
  %589 = vst [vmem:[%s5 + $0x80] sm:$0xff] %v540
  %590 = vst [vmem:[%s5 + $0x88] sm:$0xff] %v541
  %591 = vst [vmem:[%s5 + $0x90] sm:$0xff] %v542
  %592 = vst [vmem:[%s5 + $0x98] sm:$0xff] %v543
  %593 = vst [vmem:[%s5 + $0xa0] sm:$0xff] %v544
  %594 = vst [vmem:[%s5 + $0xa8] sm:$0xff] %v545
  %595 = vst [vmem:[%s5 + $0xb0] sm:$0xff] %v546
  %596 = vst [vmem:[%s5 + $0xb8] sm:$0xff] %v547
  %597 = vst [vmem:[%s5 + $0xc0] sm:$0xff] %v548
  %598 = vst [vmem:[%s5 + $0xc8] sm:$0xff] %v549
  %599 = vst [vmem:[%s5 + $0xd0] sm:$0xff] %v550
  %600 = vst [vmem:[%s5 + $0xd8] sm:$0xff] %v551
  %601 = vst [vmem:[%s5 + $0xe0] sm:$0xff] %v552
  %602 = vst [vmem:[%s5 + $0xe8] sm:$0xff] %v553
  %603 = vst [vmem:[%s5 + $0xf0] sm:$0xff] %v554
  %604 = vst [vmem:[%s5 + $0xf8] sm:$0xff] %v555
  %605 = vst [vmem:[%s5 + $0x100] sm:$0xff] %v556
  %606 = vst [vmem:[%s5 + $0x108] sm:$0xff] %v557
  %607 = vst [vmem:[%s5 + $0x110] sm:$0xff] %v558
  %608 = vst [vmem:[%s5 + $0x118] sm:$0xff] %v559
  %609 = vst [vmem:[%s5 + $0x120] sm:$0xff] %v560
  %610 = vst [vmem:[%s5 + $0x128] sm:$0xff] %v561
  %611 = vst [vmem:[%s5 + $0x130] sm:$0xff] %v562
  %612 = vst [vmem:[%s5 + $0x138] sm:$0xff] %v563
  %613 = vst [vmem:[%s5 + $0x140] sm:$0xff] %v564
  %614 = vst [vmem:[%s5 + $0x148] sm:$0xff] %v565
  %615 = vst [vmem:[%s5 + $0x150] sm:$0xff] %v566
  %616 = vst [vmem:[%s5 + $0x158] sm:$0xff] %v567
  %617 = vst [vmem:[%s5 + $0x160] sm:$0xff] %v568
  %618 = vst [vmem:[%s5 + $0x168] sm:$0xff] %v569
  %619 = vst [vmem:[%s5 + $0x170] sm:$0xff] %v570
  %620 = vst [vmem:[%s5 + $0x178] sm:$0xff] %v571
  %621 = vst [vmem:[%s5 + $0x180] sm:$0xff] %v572
  // Predicated region
  $region22: #{_lambda_.3} parent=0 // pred_check
    _
  $region23: #{_lambda_.3} parent=0 // pred_check_branch
    %623 = sbr.rel (0) target = $region25
  $region24: #{_lambda_.3} parent=0 // pred_region
    _
  $region25: #{_lambda_.3} parent=0 // pred_fallthru
    _
  // Predicated region
  $region26: #{_lambda_.3} parent=0 // pred_check
    _
  $region27: #{_lambda_.3} parent=0 // pred_check_branch
    %625 = sbr.rel (0) target = $region29
  $region28: #{_lambda_.3} parent=0 // pred_region
    _
  $region29: #{_lambda_.3} parent=0 // pred_fallthru
    _

// kernel: _lambda_.4
$region0: #{_lambda_.4}
  #allocation0 [shape = 'u32[]', space=smem, size = 0x4, offset = 0x4, fixed_abs, tag = 'smem constant byte address 0x4 - core index']
  #allocation1 [shape = 'u32[72,128]{1,0:T(1,128)}', space=vmem, size = 0x9000, scoped, tag = 'internal scratch']
  %s0 = inlined_call_operand.vmem [shape: bf16[72,128], index: 0, kind: input, shape index: {}]
  %s1 = inlined_call_operand.vmem [shape: bf16[128,128], index: 1, kind: input, shape index: {}]
  %s2 = inlined_call_operand.vmem [shape: f32[1,128], index: 2, kind: input, shape index: {}]
  %s3 = inlined_call_operand.vmem [shape: f32[1,128], index: 3, kind: input, shape index: {}]
  %s4 = inlined_call_operand.vmem [shape: f32[1,128], index: 4, kind: input, shape index: {}]
  %s5 = inlined_call_operand.vmem [shape: f32[72,128], index: 5, kind: output, shape index: {}]
  %s6 = sld [smem:[#allocation0]]
  $region30: #{_lambda_.4} parent=0
    _
  %s8 = ssub.s32 1, %s6
  %s9 = scalar_select 0, %s8, %s6
  // Predicated region
  $region2: #{_lambda_.4} parent=0 // pred_check
    _
  $region3: #{_lambda_.4} parent=0 // pred_check_branch
    %11 = sbr.rel (0) target = $region5
  $region4: #{_lambda_.4} parent=0 // pred_region
    _
  $region5: #{_lambda_.4} parent=0 // pred_fallthru
    _
  // Predicated region
  $region6: #{_lambda_.4} parent=0 // pred_check
    _
  $region7: #{_lambda_.4} parent=0 // pred_check_branch
    %13 = sbr.rel (0) target = $region9
  $region8: #{_lambda_.4} parent=0 // pred_region
    _
  $region9: #{_lambda_.4} parent=0 // pred_fallthru
    _
  // Predicated region
  $region10: #{_lambda_.4} parent=0 // pred_check
    _
  $region11: #{_lambda_.4} parent=0 // pred_check_branch
    %15 = sbr.rel (0) target = $region13
  $region12: #{_lambda_.4} parent=0 // pred_region
    _
  $region13: #{_lambda_.4} parent=0 // pred_fallthru
    _
  // Predicated region
  $region14: #{_lambda_.4} parent=0 // pred_check
    _
  $region15: #{_lambda_.4} parent=0 // pred_check_branch
    %17 = sbr.rel (0) target = $region17
  $region16: #{_lambda_.4} parent=0 // pred_region
    _
  $region17: #{_lambda_.4} parent=0 // pred_fallthru
    _
  // Predicated region
  $region18: #{_lambda_.4} parent=0 // pred_check
    _
  $region19: #{_lambda_.4} parent=0 // pred_check_branch
    %19 = sbr.rel (0) target = $region21
  $region20: #{_lambda_.4} parent=0 // pred_region
    _
  $region21: #{_lambda_.4} parent=0 // pred_fallthru
    _
  %v20 = vld [vmem:[%s0] sm:$0xf]
  %v21 = vld [vmem:[%s0 + $0x4] sm:$0xf]
  %v22 = vld [vmem:[%s0 + $0x8] sm:$0xf]
  %v23 = vld [vmem:[%s0 + $0xc] sm:$0xf]
  %v24 = vld [vmem:[%s0 + $0x10] sm:$0xf]
  %v25 = vld [vmem:[%s0 + $0x14] sm:$0xf]
  %v26 = vld [vmem:[%s0 + $0x18] sm:$0xf]
  %v27 = vld [vmem:[%s0 + $0x1c] sm:$0xf]
  %v28 = vld [vmem:[%s0 + $0x20] sm:$0xf]
  %v29 = vld [vmem:[%s1] sm:$0xf]
  %v30 = vld [vmem:[%s1 + $0x4] sm:$0xf]
  %v31 = vld [vmem:[%s1 + $0x8] sm:$0xf]
  %v32 = vld [vmem:[%s1 + $0xc] sm:$0xf]
  %v33 = vld [vmem:[%s1 + $0x10] sm:$0xf]
  %v34 = vld [vmem:[%s1 + $0x14] sm:$0xf]
  %v35 = vld [vmem:[%s1 + $0x18] sm:$0xf]
  %v36 = vld [vmem:[%s1 + $0x1c] sm:$0xf]
  %v37 = vld [vmem:[%s1 + $0x20] sm:$0xf]
  %v38 = vld [vmem:[%s1 + $0x24] sm:$0xf]
  %v39 = vld [vmem:[%s1 + $0x28] sm:$0xf]
  %v40 = vld [vmem:[%s1 + $0x2c] sm:$0xf]
  %v41 = vld [vmem:[%s1 + $0x30] sm:$0xf]
  %v42 = vld [vmem:[%s1 + $0x34] sm:$0xf]
  %v43 = vld [vmem:[%s1 + $0x38] sm:$0xf]
  %v44 = vld [vmem:[%s1 + $0x3c] sm:$0xf]
  %v45 = vld [vmem:[%s2] sm:$0x1]
  %v47 = vperm.slane %v45, 0
  %v58 = vunpack.c.l.b16 %v20
  %v59 = vunpack.c.l.b16 %v21
  %v60 = vunpack.c.l.b16 %v22
  %v61 = vunpack.c.l.b16 %v23
  %v62 = vunpack.c.l.b16 %v24
  %v63 = vunpack.c.l.b16 %v25
  %v64 = vunpack.c.l.b16 %v26
  %v65 = vunpack.c.l.b16 %v27
  %v66 = vunpack.c.l.b16 %v28
  %v67 = vpack.c.b16 %v59, %v58
  %v68 = vpack.c.b16 %v61, %v60
  %v69 = vpack.c.b16 %v63, %v62
  %v70 = vpack.c.b16 %v65, %v64
  %v71 = vpack.c.b16 %v66, %v66
  %v93 = vunpack.c.l.b16 %v29
  %v94 = vunpack.c.l.b16 %v30
  %v95 = vunpack.c.l.b16 %v31
  %v96 = vunpack.c.l.b16 %v32
  %v97 = vunpack.c.l.b16 %v33
  %v98 = vunpack.c.l.b16 %v34
  %v99 = vunpack.c.l.b16 %v35
  %v100 = vunpack.c.l.b16 %v36
  %v101 = vunpack.c.l.b16 %v37
  %v102 = vunpack.c.l.b16 %v38
  %v103 = vunpack.c.l.b16 %v39
  %v104 = vunpack.c.l.b16 %v40
  %v105 = vunpack.c.l.b16 %v41
  %v106 = vunpack.c.l.b16 %v42
  %v107 = vunpack.c.l.b16 %v43
  %v108 = vunpack.c.l.b16 %v44
  %v109 = vpack.c.b16 %v94, %v93
  %v110 = vpack.c.b16 %v96, %v95
  %v111 = vpack.c.b16 %v98, %v97
  %v112 = vpack.c.b16 %v100, %v99
  %v113 = vpack.c.b16 %v102, %v101
  %v114 = vpack.c.b16 %v104, %v103
  %v115 = vpack.c.b16 %v106, %v105
  %v116 = vpack.c.b16 %v108, %v107
  %125 = vmatpush.bf16.msra.mxu0 %v116
  %126 = vmatpush.bf16.msra.mxu0 %v115
  %127 = vmatpush.bf16.msra.mxu0 %v114
  %128 = vmatpush.bf16.msra.mxu0 %v113
  %129 = vmatpush.bf16.msra.mxu0 %v112
  %130 = vmatpush.bf16.msra.mxu0 %v111
  %131 = vmatpush.bf16.msra.mxu0 %v110
  %132 = vmatpush.bf16.msra.mxu0 %v109
  %133 = vmatmul.bf16.gmra.mxu0 %v67
  %v134 = vpop.f32.mrf.mxu0
  %v135 = vadd.f32 %v47, %v134
  %v136 = vpop.f32.mrf.mxu0
  %v137 = vadd.f32 %v47, %v136
  %138 = vmatmul.bf16.gmra.mxu0 %v68
  %v139 = vpop.f32.mrf.mxu0
  %v140 = vadd.f32 %v47, %v139
  %v141 = vpop.f32.mrf.mxu0
  %v142 = vadd.f32 %v47, %v141
  %143 = vmatmul.bf16.gmra.mxu0 %v69
  %v144 = vpop.f32.mrf.mxu0
  %v145 = vadd.f32 %v47, %v144
  %v146 = vpop.f32.mrf.mxu0
  %v147 = vadd.f32 %v47, %v146
  %148 = vmatmul.bf16.gmra.mxu0 %v70
  %v149 = vpop.f32.mrf.mxu0
  %v150 = vadd.f32 %v47, %v149
  %v151 = vpop.f32.mrf.mxu0
  %v152 = vadd.f32 %v47, %v151
  %153 = vmatmul.bf16.gmra.mxu0 %v71
  %v154 = vpop.f32.mrf.mxu0
  %v155 = vadd.f32 %v47, %v154
  %v156 = vpop.f32.mrf.mxu0
  %157 = vdwg.mxu0
  %158 = vst [vmem:[%s5] sm:$0xff] %v135
  %159 = vst [vmem:[%s5 + $0x8] sm:$0xff] %v137
  %160 = vst [vmem:[%s5 + $0x10] sm:$0xff] %v140
  %161 = vst [vmem:[%s5 + $0x18] sm:$0xff] %v142
  %162 = vst [vmem:[%s5 + $0x20] sm:$0xff] %v145
  %163 = vst [vmem:[%s5 + $0x28] sm:$0xff] %v147
  %164 = vst [vmem:[%s5 + $0x30] sm:$0xff] %v150
  %165 = vst [vmem:[%s5 + $0x38] sm:$0xff] %v152
  %166 = vst [vmem:[%s5 + $0x40] sm:$0xff] %v155
  // Predicated region
  $region22: #{_lambda_.4} parent=0 // pred_check
    _
  $region23: #{_lambda_.4} parent=0 // pred_check_branch
    %168 = sbr.rel (0) target = $region25
  $region24: #{_lambda_.4} parent=0 // pred_region
    _
  $region25: #{_lambda_.4} parent=0 // pred_fallthru
    _
  // Predicated region
  $region26: #{_lambda_.4} parent=0 // pred_check
    _
  $region27: #{_lambda_.4} parent=0 // pred_check_branch
    %170 = sbr.rel (0) target = $region29
  $region28: #{_lambda_.4} parent=0 // pred_region
    _
  $region29: #{_lambda_.4} parent=0 // pred_fallthru
    _

// kernel: mul.7
$region0: #{mul.7}
  #allocation0 [shape = 's32[1]{0}', space=sflag, size = 0x4, scoped, tag = 'scoped memory for mul.7']
  %s0 = inlined_call_operand.vmem [shape: f32[56], index: 0, kind: input, shape index: {}]
  %s1 = inlined_call_operand.vmem [shape: f32[56,128], index: 1, kind: output, shape index: {}]
  // Predicated region
  $region2: #{mul.7} parent=0 // pred_check
    _
  $region3: #{mul.7} parent=0 // pred_check_branch
    %3 = sbr.rel (0) target = $region5
  $region4: #{mul.7} parent=0 // pred_region
    _
  $region5: #{mul.7} parent=0 // pred_fallthru
    _
  %v4 = vld [vmem:[%s0] ss:$0 sm:$0xff]
  %v5 = vlaneseq
  %v6 = vshrl.u32 %v5, 7
  %8 = vset.pattern.permute.xlu0 %v6
  %9 = vperm.xlu0 %8, %v4
  %v10 = vpop.permute.xlu0 %9
  %11 = vst [vmem:[%s1] sm:$0xff] %v10
  %v12 = vld [vmem:[%s0] ss:$0 sm:$0xff]
  %v13 = vlaneseq
  %v14 = vshrl.u32 %v13, 7
  %v15 = vadd.s32 %v14, 8
  %16 = vset.pattern.permute.xlu0 %v15
  %17 = vperm.xlu0 %16, %v12
  %v18 = vpop.permute.xlu0 %17
  %s19 = scalar_lea.vmem %s1, 8
  %20 = vst [vmem:[%s19] sm:$0xff] %v18
  %v21 = vld [vmem:[%s0] ss:$0 sm:$0xff]
  %v22 = vlaneseq
  %v23 = vshrl.u32 %v22, 7
  %v24 = vadd.s32 %v23, 16
  %25 = vset.pattern.permute.xlu0 %v24
  %26 = vperm.xlu0 %25, %v21
  %v27 = vpop.permute.xlu0 %26
  %s28 = scalar_lea.vmem %s1, 16
  %29 = vst [vmem:[%s28] sm:$0xff] %v27
  %v30 = vld [vmem:[%s0] ss:$0 sm:$0xff]
  %v31 = vlaneseq
  %v32 = vshrl.u32 %v31, 7
  %v33 = vadd.s32 %v32, 24
  %34 = vset.pattern.permute.xlu0 %v33
  %35 = vperm.xlu0 %34, %v30
  %v36 = vpop.permute.xlu0 %35
  %s37 = scalar_lea.vmem %s1, 24
  %38 = vst [vmem:[%s37] sm:$0xff] %v36
  %v39 = vld [vmem:[%s0] ss:$0 sm:$0xff]
  %v40 = vlaneseq
  %v41 = vshrl.u32 %v40, 7
  %v42 = vadd.s32 %v41, 32
  %43 = vset.pattern.permute.xlu0 %v42
  %44 = vperm.xlu0 %43, %v39
  %v45 = vpop.permute.xlu0 %44
  %s46 = scalar_lea.vmem %s1, 32
  %47 = vst [vmem:[%s46] sm:$0xff] %v45
  %v48 = vld [vmem:[%s0] ss:$0 sm:$0xff]
  %v49 = vlaneseq
  %v50 = vshrl.u32 %v49, 7
  %v51 = vadd.s32 %v50, 40
  %52 = vset.pattern.permute.xlu0 %v51
  %53 = vperm.xlu0 %52, %v48
  %v54 = vpop.permute.xlu0 %53
  %s55 = scalar_lea.vmem %s1, 40
  %56 = vst [vmem:[%s55] sm:$0xff] %v54
  %v57 = vld [vmem:[%s0] ss:$0 sm:$0xff]
  %v58 = vlaneseq
  %v59 = vshrl.u32 %v58, 7
  %v60 = vadd.s32 %v59, 48
  %61 = vset.pattern.permute.xlu0 %v60
  %62 = vperm.xlu0 %61, %v57
  %v63 = vpop.permute.xlu0 %62
  %s64 = scalar_lea.vmem %s1, 48
  %65 = vst [vmem:[%s64] sm:$0xff] %v63

// kernel: _lambda_.5
$region0: #{_lambda_.5}
  #allocation0 [shape = 'u32[]', space=smem, size = 0x4, offset = 0x4, fixed_abs, tag = 'smem constant byte address 0x4 - core index']
  #allocation1 [shape = 'u32[72,128]{1,0:T(1,128)}', space=vmem, size = 0x9000, scoped, tag = 'internal scratch']
  #allocation2 [shape = 'f32[72,128]{1,0:T(8,128)}', space=vmem, size = 0x9000, scoped, tag = 'scratch operand']
  #allocation3 [shape = 'f32[56,128]{1,0:T(8,128)}', space=vmem, size = 0x7000, scoped, tag = 'scratch operand']
  %s0 = inlined_call_operand.vmem [shape: f32[4,56,512], index: 0, kind: input, shape index: {}]
  %s1 = inlined_call_operand.vmem [shape: bf16[9,128,512], index: 1, kind: input, shape index: {}]
  %s2 = inlined_call_operand.vmem [shape: f32[1,512], index: 2, kind: input, shape index: {}]
  %s3 = inlined_call_operand.vmem [shape: f32[56,128], index: 3, kind: input, shape index: {}]
  %s4 = inlined_call_operand.vmem [shape: f32[56,128], index: 4, kind: input, shape index: {}]
  %s5 = inlined_call_operand.vmem [shape: f32[56,128], index: 5, kind: input, shape index: {}]
  %s6 = inlined_call_operand.vmem [shape: f32[56,128], index: 6, kind: input, shape index: {}]
  %s7 = inlined_call_operand.vmem [shape: f32[56,256], index: 7, kind: output, shape index: {}]
  %s8 = sld [smem:[#allocation0]]
  $region69: #{_lambda_.5} parent=0
    _
  %s10 = ssub.s32 1, %s8
  %s11 = scalar_select 0, %s10, %s8
  loop: start=0, step=1, limit=6
  $region2: #{_lambda_.5} parent=0 // loop_pre_header
    _
  $region3: #{_lambda_.5} parent=0 // loop_header
    %s13 = sphi 0, %s17
    %p14 = scmp.ge.s32.totalorder %s13, 6
    %s23 = sphi 0, %s25
    %s26 = sphi 0, %s23
    %s27 = sphi 0, %s26
    %s43 = sphi 0, %s27
    %s47 = sphi 0, %s47
    %s49 = sphi 0, %s47
    %s50 = sphi 0, %s49
    %s64 = sphi 0, %s50
    %s68 = sphi 0, %s68
    %s70 = sphi 0, %s68
    %s71 = sphi 0, %s70
    %s85 = sphi 0, %s71
    %s89 = sphi 0, %s89
    %s91 = sphi 0, %s89
    %s92 = sphi 0, %s91
    %s106 = sphi 0, %s92
    %s110 = sphi 0, %s110
    %s112 = sphi 0, %s110
    %s113 = sphi 0, %s112
    %s127 = sphi 0, %s113
    %s131 = sphi 0, %s131
    %s133 = sphi 0, %s131
    %s134 = sphi 0, %s133
    %s148 = sphi 0, %s134
    %s152 = sphi 0, %s152
    %s154 = sphi 0, %s152
    %s155 = sphi 0, %s154
    %s169 = sphi 0, %s155
    %s173 = sphi 0, %s173
    %s175 = sphi 0, %s173
    %s176 = sphi 0, %s175
    %s190 = sphi 0, %s176
  $region4: #{_lambda_.5} parent=0 // loop_header_branch
    %16 = sbr.rel (%p14) target = $region8
  $region5: #{_lambda_.5} parent=0 // loop_body
    %s18 = ssub.s32 %s13, 1
    %s19 = ssub.s32 %s13, 2
    %s20 = sadd.s32 %s13, 1
    %s21 = ssub.s32 %s13, %s20
    %p22 = scmp.eq.s32.totalorder %s21, 0
    %s24 = sadd.s32 %s23, 1
    %s25 = scalar_select %p22, %s23, %s24
    %p28 = pneg %p22
    %p29 = scmp.eq.s32.totalorder %s13, 3
    %p30 = por %p28, %p29
    %p31 = scmp.ne.s32.totalorder %s23, %s26
    %p32 = scmp.eq.s32.totalorder %s13, 0
    %p33 = por %p31, %p32
    %p34 = scmp.ne.s32.totalorder %s23, %s26
    %p35 = scmp.eq.s32.totalorder %s18, 3
    %p36 = por %p34, %p35
    %p37 = scmp.ne.s32.totalorder %s26, %s27
    %p38 = scmp.eq.s32.totalorder %s18, 0
    %p39 = por %p37, %p38
    %p40 = scmp.ne.s32.totalorder %s26, %s27
    %p41 = scmp.eq.s32.totalorder %s19, 3
    %p42 = por %p40, %p41
    %p44 = scmp.ne.s32.totalorder %s27, %s43
    %p45 = scmp.eq.s32.totalorder %s19, 0
    %p46 = por %p44, %p45
    %s48 = sadd.s32 %s47, 1
    %p51 = scmp.eq.s32.totalorder %s13, 3
    %p52 = scmp.ne.s32.totalorder %s47, %s49
    %p53 = scmp.eq.s32.totalorder %s13, 0
    %p54 = por %p52, %p53
    %p55 = scmp.ne.s32.totalorder %s47, %s49
    %p56 = scmp.eq.s32.totalorder %s18, 3
    %p57 = por %p55, %p56
    %p58 = scmp.ne.s32.totalorder %s49, %s50
    %p59 = scmp.eq.s32.totalorder %s18, 0
    %p60 = por %p58, %p59
    %p61 = scmp.ne.s32.totalorder %s49, %s50
    %p62 = scmp.eq.s32.totalorder %s19, 3
    %p63 = por %p61, %p62
    %p65 = scmp.ne.s32.totalorder %s50, %s64
    %p66 = scmp.eq.s32.totalorder %s19, 0
    %p67 = por %p65, %p66
    %s69 = sadd.s32 %s68, 1
    %p72 = scmp.eq.s32.totalorder %s13, 3
    %p73 = scmp.ne.s32.totalorder %s68, %s70
    %p74 = scmp.eq.s32.totalorder %s13, 0
    %p75 = por %p73, %p74
    %p76 = scmp.ne.s32.totalorder %s68, %s70
    %p77 = scmp.eq.s32.totalorder %s18, 3
    %p78 = por %p76, %p77
    %p79 = scmp.ne.s32.totalorder %s70, %s71
    %p80 = scmp.eq.s32.totalorder %s18, 0
    %p81 = por %p79, %p80
    %p82 = scmp.ne.s32.totalorder %s70, %s71
    %p83 = scmp.eq.s32.totalorder %s19, 3
    %p84 = por %p82, %p83
    %p86 = scmp.ne.s32.totalorder %s71, %s85
    %p87 = scmp.eq.s32.totalorder %s19, 0
    %p88 = por %p86, %p87
    %s90 = sadd.s32 %s89, 1
    %p93 = scmp.eq.s32.totalorder %s13, 3
    %p94 = scmp.ne.s32.totalorder %s89, %s91
    %p95 = scmp.eq.s32.totalorder %s13, 0
    %p96 = por %p94, %p95
    %p97 = scmp.ne.s32.totalorder %s89, %s91
    %p98 = scmp.eq.s32.totalorder %s18, 3
    %p99 = por %p97, %p98
    %p100 = scmp.ne.s32.totalorder %s91, %s92
    %p101 = scmp.eq.s32.totalorder %s18, 0
    %p102 = por %p100, %p101
    %p103 = scmp.ne.s32.totalorder %s91, %s92
    %p104 = scmp.eq.s32.totalorder %s19, 3
    %p105 = por %p103, %p104
    %p107 = scmp.ne.s32.totalorder %s92, %s106
    %p108 = scmp.eq.s32.totalorder %s19, 0
    %p109 = por %p107, %p108
    %s111 = sadd.s32 %s110, 1
    %p114 = scmp.eq.s32.totalorder %s13, 3
    %p115 = scmp.ne.s32.totalorder %s110, %s112
    %p116 = scmp.eq.s32.totalorder %s13, 0
    %p117 = por %p115, %p116
    %p118 = scmp.ne.s32.totalorder %s110, %s112
    %p119 = scmp.eq.s32.totalorder %s18, 3
    %p120 = por %p118, %p119
    %p121 = scmp.ne.s32.totalorder %s112, %s113
    %p122 = scmp.eq.s32.totalorder %s18, 0
    %p123 = por %p121, %p122
    %p124 = scmp.ne.s32.totalorder %s112, %s113
    %p125 = scmp.eq.s32.totalorder %s19, 3
    %p126 = por %p124, %p125
    %p128 = scmp.ne.s32.totalorder %s113, %s127
    %p129 = scmp.eq.s32.totalorder %s19, 0
    %p130 = por %p128, %p129
    %s132 = sadd.s32 %s131, 1
    %p135 = scmp.eq.s32.totalorder %s13, 3
    %p136 = scmp.ne.s32.totalorder %s131, %s133
    %p137 = scmp.eq.s32.totalorder %s13, 0
    %p138 = por %p136, %p137
    %p139 = scmp.ne.s32.totalorder %s131, %s133
    %p140 = scmp.eq.s32.totalorder %s18, 3
    %p141 = por %p139, %p140
    %p142 = scmp.ne.s32.totalorder %s133, %s134
    %p143 = scmp.eq.s32.totalorder %s18, 0
    %p144 = por %p142, %p143
    %p145 = scmp.ne.s32.totalorder %s133, %s134
    %p146 = scmp.eq.s32.totalorder %s19, 3
    %p147 = por %p145, %p146
    %p149 = scmp.ne.s32.totalorder %s134, %s148
    %p150 = scmp.eq.s32.totalorder %s19, 0
    %p151 = por %p149, %p150
    %s153 = sadd.s32 %s152, 1
    %p156 = scmp.eq.s32.totalorder %s13, 3
    %p157 = scmp.ne.s32.totalorder %s152, %s154
    %p158 = scmp.eq.s32.totalorder %s13, 0
    %p159 = por %p157, %p158
    %p160 = scmp.ne.s32.totalorder %s152, %s154
    %p161 = scmp.eq.s32.totalorder %s18, 3
    %p162 = por %p160, %p161
    %p163 = scmp.ne.s32.totalorder %s154, %s155
    %p164 = scmp.eq.s32.totalorder %s18, 0
    %p165 = por %p163, %p164
    %p166 = scmp.ne.s32.totalorder %s154, %s155
    %p167 = scmp.eq.s32.totalorder %s19, 3
    %p168 = por %p166, %p167
    %p170 = scmp.ne.s32.totalorder %s155, %s169
    %p171 = scmp.eq.s32.totalorder %s19, 0
    %p172 = por %p170, %p171
    %s174 = sadd.s32 %s173, 1
    %p177 = scmp.eq.s32.totalorder %s13, 3
    %p178 = scmp.ne.s32.totalorder %s173, %s175
    %p179 = scmp.eq.s32.totalorder %s13, 0
    %p180 = por %p178, %p179
    %p181 = scmp.ne.s32.totalorder %s173, %s175
    %p182 = scmp.eq.s32.totalorder %s18, 3
    %p183 = por %p181, %p182
    %p184 = scmp.ne.s32.totalorder %s175, %s176
    %p185 = scmp.eq.s32.totalorder %s18, 0
    %p186 = por %p184, %p185
    %p187 = scmp.ne.s32.totalorder %s175, %s176
    %p188 = scmp.eq.s32.totalorder %s19, 3
    %p189 = por %p187, %p188
    %p191 = scmp.ne.s32.totalorder %s176, %s190
    %p192 = scmp.eq.s32.totalorder %s19, 0
    %p193 = por %p191, %p192
    %p194 = scmp.le.s32.totalorder 1, %s13
    %p195 = scmp.lt.s32.totalorder %s13, 5
    %p196 = pnand %p194, %p195
    %p197 = pneg %p196
    // Predicated region
    $region9: #{_lambda_.5} parent=5 // pred_check
      _
    $region10: #{_lambda_.5} parent=5 // pred_check_branch
      %199 = sbr.rel (%p196) target = $region12
    $region11: #{_lambda_.5} parent=5 // pred_region
      %s200 = ssub.s32 %s13, 1
      // Predicated region
      $region13: #{_lambda_.5} parent=11 // pred_check
        %p201 = pneg %p60
      $region14: #{_lambda_.5} parent=11 // pred_check_branch
        %203 = sbr.rel (%p201) target = $region16
      $region15: #{_lambda_.5} parent=11 // pred_region
        _
      $region16: #{_lambda_.5} parent=11 // pred_fallthru
        _
      // Predicated region
      $region17: #{_lambda_.5} parent=11 // pred_check
        %p204 = pneg %p81
      $region18: #{_lambda_.5} parent=11 // pred_check_branch
        %206 = sbr.rel (%p204) target = $region20
      $region19: #{_lambda_.5} parent=11 // pred_region
        _
      $region20: #{_lambda_.5} parent=11 // pred_fallthru
        _
      // Predicated region
      $region21: #{_lambda_.5} parent=11 // pred_check
        %p207 = pneg %p102
      $region22: #{_lambda_.5} parent=11 // pred_check_branch
        %209 = sbr.rel (%p207) target = $region24
      $region23: #{_lambda_.5} parent=11 // pred_region
        _
      $region24: #{_lambda_.5} parent=11 // pred_fallthru
        _
      // Predicated region
      $region25: #{_lambda_.5} parent=11 // pred_check
        %p210 = pneg %p123
      $region26: #{_lambda_.5} parent=11 // pred_check_branch
        %212 = sbr.rel (%p210) target = $region28
      $region27: #{_lambda_.5} parent=11 // pred_region
        _
      $region28: #{_lambda_.5} parent=11 // pred_fallthru
        _
      // Predicated region
      $region29: #{_lambda_.5} parent=11 // pred_check
        %p213 = pneg %p144
      $region30: #{_lambda_.5} parent=11 // pred_check_branch
        %215 = sbr.rel (%p213) target = $region32
      $region31: #{_lambda_.5} parent=11 // pred_region
        _
      $region32: #{_lambda_.5} parent=11 // pred_fallthru
        _
      // Predicated region
      $region33: #{_lambda_.5} parent=11 // pred_check
        %p216 = pneg %p165
      $region34: #{_lambda_.5} parent=11 // pred_check_branch
        %218 = sbr.rel (%p216) target = $region36
      $region35: #{_lambda_.5} parent=11 // pred_region
        _
      $region36: #{_lambda_.5} parent=11 // pred_fallthru
        _
    $region12: #{_lambda_.5} parent=5 // pred_fallthru
      _
    %p219 = scmp.lt.s32.totalorder %s13, 4
    // Predicated region
    $region37: #{_lambda_.5} parent=5 // pred_check
      %p220 = pneg %p219
    $region38: #{_lambda_.5} parent=5 // pred_check_branch
      %222 = sbr.rel (%p220) target = $region40
    $region39: #{_lambda_.5} parent=5 // pred_region
      // Predicated region
      $region41: #{_lambda_.5} parent=39 // pred_check
        %p223 = pneg %p33
      $region42: #{_lambda_.5} parent=39 // pred_check_branch
        %225 = sbr.rel (%p223) target = $region44
      $region43: #{_lambda_.5} parent=39 // pred_region
        %p226 = scmp.lt.s32.totalorder %s13, 3
        %s227 = scalar_select %p226, %s13, 3
        %s228 = smul.addr %s227, 28
        %s229 = smul.addr %s228, 8
        %s230 = scalar_lea.vmem %s0, %s229
      $region44: #{_lambda_.5} parent=39 // pred_fallthru
        _
    $region40: #{_lambda_.5} parent=5 // pred_fallthru
      _
    %p231 = scmp.le.s32.totalorder 1, %s13
    %p232 = scmp.lt.s32.totalorder %s13, 5
    %p233 = pnand %p231, %p232
    %p234 = pneg %p233
    // Predicated region
    $region45: #{_lambda_.5} parent=5 // pred_check
      _
    $region46: #{_lambda_.5} parent=5 // pred_check_branch
      %236 = sbr.rel (%p233) target = $region48
    $region47: #{_lambda_.5} parent=5 // pred_region
      %s237 = ssub.s32 %s13, 1
      %p238 = scmp.lt.s32.totalorder %s18, 3
      %s239 = scalar_select %p238, %s18, 3
      %s240 = smul.addr %s239, 28
      %s241 = smul.addr %s240, 8
      %s242 = scalar_lea.vmem %s0, %s241
      %p243 = pneg %p39
      %p244 = pneg %p36
      %p245 = pneg %p60
      %p246 = pneg %p57
      %p247 = pneg %p81
      %p248 = pneg %p78
      %p249 = pneg %p102
      %p250 = pneg %p99
      %p251 = pneg %p123
      %p252 = pneg %p120
      %p253 = pneg %p144
      %p254 = pneg %p141
      %p255 = pneg %p165
      %p256 = pneg %p162
      %p257 = pneg %p186
      %p258 = pneg %p183
      %p259 = scmp.lt.s32.totalorder %s18, 3
      %s260 = scalar_select %p259, %s18, 3
      %s261 = smul.addr %s260, 28
      %s262 = smul.addr %s261, 8
      %s263 = scalar_lea.vmem %s0, %s262
      %p264 = scmp.eq.s32.totalorder %s18, 0
      // Predicated region
      $region49: #{_lambda_.5} parent=47 // pred_check
        %p265 = pneg %p264
      $region50: #{_lambda_.5} parent=47 // pred_check_branch
        %267 = sbr.rel (%p265) target = $region52
      $region51: #{_lambda_.5} parent=47 // pred_region
        %268 = vst [vmem:[#allocation2] sm:$0xff] 0.0
        %269 = vst [vmem:[#allocation2 + $0x8] sm:$0xff] 0.0
        %270 = vst [vmem:[#allocation2 + $0x10] sm:$0xff] 0.0
        %271 = vst [vmem:[#allocation2 + $0x18] sm:$0xff] 0.0
        %272 = vst [vmem:[#allocation2 + $0x20] sm:$0xff] 0.0
        %273 = vst [vmem:[#allocation2 + $0x28] sm:$0xff] 0.0
        %274 = vst [vmem:[#allocation2 + $0x30] sm:$0xff] 0.0
        %275 = vst [vmem:[#allocation2 + $0x38] sm:$0xff] 0.0
        %276 = vst [vmem:[#allocation2 + $0x40] sm:$0xff] 0.0
        %277 = vst [vmem:[#allocation3] sm:$0xff] 0.0
        %278 = vst [vmem:[#allocation3 + $0x8] sm:$0xff] 0.0
        %279 = vst [vmem:[#allocation3 + $0x10] sm:$0xff] 0.0
        %280 = vst [vmem:[#allocation3 + $0x18] sm:$0xff] 0.0
        %281 = vst [vmem:[#allocation3 + $0x20] sm:$0xff] 0.0
        %282 = vst [vmem:[#allocation3 + $0x28] sm:$0xff] 0.0
        %283 = vst [vmem:[#allocation3 + $0x30] sm:$0xff] 0.0
      $region52: #{_lambda_.5} parent=47 // pred_fallthru
        _
      %v284 = vld [vmem:[%s263] sm:$0xff]
      %v285 = vld [vmem:[%s263 + $0x8] sm:$0xff]
      %v286 = vld [vmem:[%s263 + $0x10] sm:$0xff]
      %v287 = vld [vmem:[%s263 + $0x18] sm:$0xff]
      %v288 = vld [vmem:[%s263 + $0x20] sm:$0xff]
      %v289 = vld [vmem:[%s263 + $0x28] sm:$0xff]
      %v290 = vld [vmem:[%s263 + $0x30] sm:$0xff]
      %v291 = vld [vmem:[%s263 + $0x38] sm:$0xff]
      %v292 = vld [vmem:[%s263 + $0x40] sm:$0xff]
      %v293 = vld [vmem:[%s263 + $0x48] sm:$0xff]
      %v294 = vld [vmem:[%s263 + $0x50] sm:$0xff]
      %v295 = vld [vmem:[%s263 + $0x58] sm:$0xff]
      %v296 = vld [vmem:[%s263 + $0x60] sm:$0xff]
      %v297 = vld [vmem:[%s263 + $0x68] sm:$0xff]
      %v298 = vld [vmem:[%s263 + $0x70] sm:$0xff]
      %v299 = vld [vmem:[%s263 + $0x78] sm:$0xff]
      %v300 = vld [vmem:[%s263 + $0x80] sm:$0xff]
      %v301 = vld [vmem:[%s263 + $0x88] sm:$0xff]
      %v302 = vld [vmem:[%s263 + $0x90] sm:$0xff]
      %v303 = vld [vmem:[%s263 + $0x98] sm:$0xff]
      %v304 = vld [vmem:[%s263 + $0xa0] sm:$0xff]
      %v305 = vld [vmem:[%s263 + $0xa8] sm:$0xff]
      %v306 = vld [vmem:[%s263 + $0xb0] sm:$0xff]
      %v307 = vld [vmem:[%s263 + $0xb8] sm:$0xff]
      %v308 = vld [vmem:[%s263 + $0xc0] sm:$0xff]
      %v309 = vld [vmem:[%s263 + $0xc8] sm:$0xff]
      %v310 = vld [vmem:[%s263 + $0xd0] sm:$0xff]
      %v311 = vld [vmem:[%s263 + $0xd8] sm:$0xff]
      %v312 = vld [vmem:[%s2] sm:$0xf]
      %v314 = vperm.slane %v312, 0
      %v315 = vperm.slane %v312, 1
      %v316 = vperm.slane %v312, 2
      %v317 = vperm.slane %v312, 3
      %v322 = vadd.f32 %v284, %v314
      %v323 = vadd.f32 %v285, %v315
      %v324 = vadd.f32 %v286, %v316
      %v325 = vadd.f32 %v287, %v317
      %v326 = vadd.f32 %v288, %v314
      %v327 = vadd.f32 %v289, %v315
      %v328 = vadd.f32 %v290, %v316
      %v329 = vadd.f32 %v291, %v317
      %v330 = vadd.f32 %v292, %v314
      %v331 = vadd.f32 %v293, %v315
      %v332 = vadd.f32 %v294, %v316
      %v333 = vadd.f32 %v295, %v317
      %v334 = vadd.f32 %v296, %v314
      %v335 = vadd.f32 %v297, %v315
      %v336 = vadd.f32 %v298, %v316
      %v337 = vadd.f32 %v299, %v317
      %v338 = vadd.f32 %v300, %v314
      %v339 = vadd.f32 %v301, %v315
      %v340 = vadd.f32 %v302, %v316
      %v341 = vadd.f32 %v303, %v317
      %v342 = vadd.f32 %v304, %v314
      %v343 = vadd.f32 %v305, %v315
      %v344 = vadd.f32 %v306, %v316
      %v345 = vadd.f32 %v307, %v317
      %v346 = vadd.f32 %v308, %v314
      %v347 = vadd.f32 %v309, %v315
      %v348 = vadd.f32 %v310, %v316
      %v349 = vadd.f32 %v311, %v317
      %v350 = vld [vmem:[#allocation2 + $0x2] sm:$0xff]
      %v351 = vld [vmem:[#allocation2 + $0xa] sm:$0xff]
      %v352 = vld [vmem:[#allocation2 + $0x12] sm:$0xff]
      %v353 = vld [vmem:[#allocation2 + $0x1a] sm:$0xff]
      %v354 = vld [vmem:[#allocation2 + $0x22] sm:$0xff]
      %v355 = vld [vmem:[#allocation2 + $0x2a] sm:$0xff]
      %v356 = vld [vmem:[#allocation2 + $0x32] sm:$0xff]
      %v357 = vpack.c.bf16 %v351, %v350
      %v358 = vpack.c.bf16 %v353, %v352
      %v359 = vpack.c.bf16 %v355, %v354
      %v360 = vpack.c.bf16 %v356, %v356
      %v361 = vld [vmem:[%s1] sm:$0xff]
      %v362 = vld [vmem:[%s1 + $0x8] sm:$0xff]
      %v363 = vld [vmem:[%s1 + $0x10] sm:$0xff]
      %v364 = vld [vmem:[%s1 + $0x18] sm:$0xff]
      %v365 = vld [vmem:[%s1 + $0x20] sm:$0xff]
      %v366 = vld [vmem:[%s1 + $0x28] sm:$0xff]
      %v367 = vld [vmem:[%s1 + $0x30] sm:$0xff]
      %v368 = vld [vmem:[%s1 + $0x38] sm:$0xff]
      %v369 = vld [vmem:[%s1 + $0x40] sm:$0xff]
      %v370 = vld [vmem:[%s1 + $0x48] sm:$0xff]
      %v371 = vld [vmem:[%s1 + $0x50] sm:$0xff]
      %v372 = vld [vmem:[%s1 + $0x58] sm:$0xff]
      %v373 = vld [vmem:[%s1 + $0x60] sm:$0xff]
      %v374 = vld [vmem:[%s1 + $0x68] sm:$0xff]
      %v375 = vld [vmem:[%s1 + $0x70] sm:$0xff]
      %v376 = vld [vmem:[%s1 + $0x78] sm:$0xff]
      %v377 = vld [vmem:[%s1 + $0x80] sm:$0xff]
      %v378 = vld [vmem:[%s1 + $0x88] sm:$0xff]
      %v379 = vld [vmem:[%s1 + $0x90] sm:$0xff]
      %v380 = vld [vmem:[%s1 + $0x98] sm:$0xff]
      %v381 = vld [vmem:[%s1 + $0xa0] sm:$0xff]
      %v382 = vld [vmem:[%s1 + $0xa8] sm:$0xff]
      %v383 = vld [vmem:[%s1 + $0xb0] sm:$0xff]
      %v384 = vld [vmem:[%s1 + $0xb8] sm:$0xff]
      %v385 = vld [vmem:[%s1 + $0xc0] sm:$0xff]
      %v386 = vld [vmem:[%s1 + $0xc8] sm:$0xff]
      %v387 = vld [vmem:[%s1 + $0xd0] sm:$0xff]
      %v388 = vld [vmem:[%s1 + $0xd8] sm:$0xff]
      %v389 = vld [vmem:[%s1 + $0xe0] sm:$0xff]
      %v390 = vld [vmem:[%s1 + $0xe8] sm:$0xff]
      %v391 = vld [vmem:[%s1 + $0xf0] sm:$0xff]
      %v392 = vld [vmem:[%s1 + $0xf8] sm:$0xff]
      %v425 = vunpack.c.l.b16 %v361
      %v426 = vunpack.c.h.b16 %v361
      %v427 = vunpack.c.l.b16 %v362
      %v428 = vunpack.c.h.b16 %v362
      %v429 = vunpack.c.l.b16 %v363
      %v430 = vunpack.c.h.b16 %v363
      %v431 = vunpack.c.l.b16 %v364
      %v432 = vunpack.c.h.b16 %v364
      %v433 = vunpack.c.l.b16 %v365
      %v434 = vunpack.c.h.b16 %v365
      %v435 = vunpack.c.l.b16 %v366
      %v436 = vunpack.c.h.b16 %v366
      %v437 = vunpack.c.l.b16 %v367
      %v438 = vunpack.c.h.b16 %v367
      %v439 = vunpack.c.l.b16 %v368
      %v440 = vunpack.c.h.b16 %v368
      %v441 = vunpack.c.l.b16 %v369
      %v442 = vunpack.c.h.b16 %v369
      %v443 = vunpack.c.l.b16 %v370
      %v444 = vunpack.c.h.b16 %v370
      %v445 = vunpack.c.l.b16 %v371
      %v446 = vunpack.c.h.b16 %v371
      %v447 = vunpack.c.l.b16 %v372
      %v448 = vunpack.c.h.b16 %v372
      %v449 = vunpack.c.l.b16 %v373
      %v450 = vunpack.c.h.b16 %v373
      %v451 = vunpack.c.l.b16 %v374
      %v452 = vunpack.c.h.b16 %v374
      %v453 = vunpack.c.l.b16 %v375
      %v454 = vunpack.c.h.b16 %v375
      %v455 = vunpack.c.l.b16 %v376
      %v456 = vunpack.c.h.b16 %v376
      %v457 = vunpack.c.l.b16 %v377
      %v458 = vunpack.c.h.b16 %v377
      %v459 = vunpack.c.l.b16 %v378
      %v460 = vunpack.c.h.b16 %v378
      %v461 = vunpack.c.l.b16 %v379
      %v462 = vunpack.c.h.b16 %v379
      %v463 = vunpack.c.l.b16 %v380
      %v464 = vunpack.c.h.b16 %v380
      %v465 = vunpack.c.l.b16 %v381
      %v466 = vunpack.c.h.b16 %v381
      %v467 = vunpack.c.l.b16 %v382
      %v468 = vunpack.c.h.b16 %v382
      %v469 = vunpack.c.l.b16 %v383
      %v470 = vunpack.c.h.b16 %v383
      %v471 = vunpack.c.l.b16 %v384
      %v472 = vunpack.c.h.b16 %v384
      %v473 = vunpack.c.l.b16 %v385
      %v474 = vunpack.c.h.b16 %v385
      %v475 = vunpack.c.l.b16 %v386
      %v476 = vunpack.c.h.b16 %v386
      %v477 = vunpack.c.l.b16 %v387
      %v478 = vunpack.c.h.b16 %v387
      %v479 = vunpack.c.l.b16 %v388
      %v480 = vunpack.c.h.b16 %v388
      %v481 = vunpack.c.l.b16 %v389
      %v482 = vunpack.c.h.b16 %v389
      %v483 = vunpack.c.l.b16 %v390
      %v484 = vunpack.c.h.b16 %v390
      %v485 = vunpack.c.l.b16 %v391
      %v486 = vunpack.c.h.b16 %v391
      %v487 = vunpack.c.l.b16 %v392
      %v488 = vunpack.c.h.b16 %v392
      %v489 = vpack.c.b16 %v429, %v425
      %v490 = vpack.c.b16 %v430, %v426
      %v491 = vpack.c.b16 %v431, %v427
      %v492 = vpack.c.b16 %v432, %v428
      %v493 = vpack.c.b16 %v437, %v433
      %v494 = vpack.c.b16 %v438, %v434
      %v495 = vpack.c.b16 %v439, %v435
      %v496 = vpack.c.b16 %v440, %v436
      %v497 = vpack.c.b16 %v445, %v441
      %v498 = vpack.c.b16 %v446, %v442
      %v499 = vpack.c.b16 %v447, %v443
      %v500 = vpack.c.b16 %v448, %v444
      %v501 = vpack.c.b16 %v453, %v449
      %v502 = vpack.c.b16 %v454, %v450
      %v503 = vpack.c.b16 %v455, %v451
      %v504 = vpack.c.b16 %v456, %v452
      %v505 = vpack.c.b16 %v461, %v457
      %v506 = vpack.c.b16 %v462, %v458
      %v507 = vpack.c.b16 %v463, %v459
      %v508 = vpack.c.b16 %v464, %v460
      %v509 = vpack.c.b16 %v469, %v465
      %v510 = vpack.c.b16 %v470, %v466
      %v511 = vpack.c.b16 %v471, %v467
      %v512 = vpack.c.b16 %v472, %v468
      %v513 = vpack.c.b16 %v477, %v473
      %v514 = vpack.c.b16 %v478, %v474
      %v515 = vpack.c.b16 %v479, %v475
      %v516 = vpack.c.b16 %v480, %v476
      %v517 = vpack.c.b16 %v485, %v481
      %v518 = vpack.c.b16 %v486, %v482
      %v519 = vpack.c.b16 %v487, %v483
      %v520 = vpack.c.b16 %v488, %v484
      %553 = vmatpush.bf16.msra.mxu0 %v517
      %554 = vmatpush.bf16.msra.mxu0 %v513
      %555 = vmatpush.bf16.msra.mxu0 %v509
      %556 = vmatpush.bf16.msra.mxu0 %v505
      %557 = vmatpush.bf16.msra.mxu0 %v501
      %558 = vmatpush.bf16.msra.mxu0 %v497
      %559 = vmatpush.bf16.msra.mxu0 %v493
      %560 = vmatpush.bf16.msra.mxu0 %v489
      %561 = vmatmul.bf16.gmra.mxu0 %v357
      %v562 = vpop.f32.mrf.mxu0
      %v563 = vadd.f32 0.0, %v562
      %v564 = vpop.f32.mrf.mxu0
      %v565 = vadd.f32 0.0, %v564
      %566 = vmatmul.bf16.gmra.mxu0 %v358
      %v567 = vpop.f32.mrf.mxu0
      %v568 = vadd.f32 0.0, %v567
      %v569 = vpop.f32.mrf.mxu0
      %v570 = vadd.f32 0.0, %v569
      %571 = vmatmul.bf16.gmra.mxu0 %v359
      %v572 = vpop.f32.mrf.mxu0
      %v573 = vadd.f32 0.0, %v572
      %v574 = vpop.f32.mrf.mxu0
      %v575 = vadd.f32 0.0, %v574
      %576 = vmatmul.bf16.gmra.mxu0 %v360
      %v577 = vpop.f32.mrf.mxu0
      %v578 = vadd.f32 0.0, %v577
      %v579 = vpop.f32.mrf.mxu0
      %580 = vdwg.mxu0
      %581 = vmatpush.bf16.msra.mxu0 %v518
      %582 = vmatpush.bf16.msra.mxu0 %v514
      %583 = vmatpush.bf16.msra.mxu0 %v510
      %584 = vmatpush.bf16.msra.mxu0 %v506
      %585 = vmatpush.bf16.msra.mxu0 %v502
      %586 = vmatpush.bf16.msra.mxu0 %v498
      %587 = vmatpush.bf16.msra.mxu0 %v494
      %588 = vmatpush.bf16.msra.mxu0 %v490
      %589 = vmatmul.bf16.gmra.mxu0 %v357
      %v590 = vpop.f32.mrf.mxu0
      %v591 = vadd.f32 0.0, %v590
      %v592 = vpop.f32.mrf.mxu0
      %v593 = vadd.f32 0.0, %v592
      %594 = vmatmul.bf16.gmra.mxu0 %v358
      %v595 = vpop.f32.mrf.mxu0
      %v596 = vadd.f32 0.0, %v595
      %v597 = vpop.f32.mrf.mxu0
      %v598 = vadd.f32 0.0, %v597
      %599 = vmatmul.bf16.gmra.mxu0 %v359
      %v600 = vpop.f32.mrf.mxu0
      %v601 = vadd.f32 0.0, %v600
      %v602 = vpop.f32.mrf.mxu0
      %v603 = vadd.f32 0.0, %v602
      %604 = vmatmul.bf16.gmra.mxu0 %v360
      %v605 = vpop.f32.mrf.mxu0
      %v606 = vadd.f32 0.0, %v605
      %v607 = vpop.f32.mrf.mxu0
      %608 = vdwg.mxu0
      %609 = vmatpush.bf16.msra.mxu0 %v519
      %610 = vmatpush.bf16.msra.mxu0 %v515
      %611 = vmatpush.bf16.msra.mxu0 %v511
      %612 = vmatpush.bf16.msra.mxu0 %v507
      %613 = vmatpush.bf16.msra.mxu0 %v503
      %614 = vmatpush.bf16.msra.mxu0 %v499
      %615 = vmatpush.bf16.msra.mxu0 %v495
      %616 = vmatpush.bf16.msra.mxu0 %v491
      %617 = vmatmul.bf16.gmra.mxu0 %v357
      %v618 = vpop.f32.mrf.mxu0
      %v619 = vadd.f32 0.0, %v618
      %v620 = vpop.f32.mrf.mxu0
      %v621 = vadd.f32 0.0, %v620
      %622 = vmatmul.bf16.gmra.mxu0 %v358
      %v623 = vpop.f32.mrf.mxu0
      %v624 = vadd.f32 0.0, %v623
      %v625 = vpop.f32.mrf.mxu0
      %v626 = vadd.f32 0.0, %v625
      %627 = vmatmul.bf16.gmra.mxu0 %v359
      %v628 = vpop.f32.mrf.mxu0
      %v629 = vadd.f32 0.0, %v628
      %v630 = vpop.f32.mrf.mxu0
      %v631 = vadd.f32 0.0, %v630
      %632 = vmatmul.bf16.gmra.mxu0 %v360
      %v633 = vpop.f32.mrf.mxu0
      %v634 = vadd.f32 0.0, %v633
      %v635 = vpop.f32.mrf.mxu0
      %636 = vdwg.mxu0
      %637 = vmatpush.bf16.msra.mxu0 %v520
      %638 = vmatpush.bf16.msra.mxu0 %v516
      %639 = vmatpush.bf16.msra.mxu0 %v512
      %640 = vmatpush.bf16.msra.mxu0 %v508
      %641 = vmatpush.bf16.msra.mxu0 %v504
      %642 = vmatpush.bf16.msra.mxu0 %v500
      %643 = vmatpush.bf16.msra.mxu0 %v496
      %644 = vmatpush.bf16.msra.mxu0 %v492
      %645 = vmatmul.bf16.gmra.mxu0 %v357
      %v646 = vpop.f32.mrf.mxu0
      %v647 = vadd.f32 0.0, %v646
      %v648 = vpop.f32.mrf.mxu0
      %v649 = vadd.f32 0.0, %v648
      %650 = vmatmul.bf16.gmra.mxu0 %v358
      %v651 = vpop.f32.mrf.mxu0
      %v652 = vadd.f32 0.0, %v651
      %v653 = vpop.f32.mrf.mxu0
      %v654 = vadd.f32 0.0, %v653
      %655 = vmatmul.bf16.gmra.mxu0 %v359
      %v656 = vpop.f32.mrf.mxu0
      %v657 = vadd.f32 0.0, %v656
      %v658 = vpop.f32.mrf.mxu0
      %v659 = vadd.f32 0.0, %v658
      %660 = vmatmul.bf16.gmra.mxu0 %v360
      %v661 = vpop.f32.mrf.mxu0
      %v662 = vadd.f32 0.0, %v661
      %v663 = vpop.f32.mrf.mxu0
      %664 = vdwg.mxu0
      %v665 = vadd.f32 %v322, %v563
      %v666 = vadd.f32 %v323, %v591
      %v667 = vadd.f32 %v324, %v619
      %v668 = vadd.f32 %v325, %v647
      %v669 = vadd.f32 %v326, %v565
      %v670 = vadd.f32 %v327, %v593
      %v671 = vadd.f32 %v328, %v621
      %v672 = vadd.f32 %v329, %v649
      %v673 = vadd.f32 %v330, %v568
      %v674 = vadd.f32 %v331, %v596
      %v675 = vadd.f32 %v332, %v624
      %v676 = vadd.f32 %v333, %v652
      %v677 = vadd.f32 %v334, %v570
      %v678 = vadd.f32 %v335, %v598
      %v679 = vadd.f32 %v336, %v626
      %v680 = vadd.f32 %v337, %v654
      %v681 = vadd.f32 %v338, %v573
      %v682 = vadd.f32 %v339, %v601
      %v683 = vadd.f32 %v340, %v629
      %v684 = vadd.f32 %v341, %v657
      %v685 = vadd.f32 %v342, %v575
      %v686 = vadd.f32 %v343, %v603
      %v687 = vadd.f32 %v344, %v631
      %v688 = vadd.f32 %v345, %v659
      %v689 = vadd.f32 %v346, %v578
      %v690 = vadd.f32 %v347, %v606
      %v691 = vadd.f32 %v348, %v634
      %v692 = vadd.f32 %v349, %v662
      %v693 = vld [vmem:[#allocation2 + $0x3] sm:$0xff]
      %v694 = vld [vmem:[#allocation2 + $0xb] sm:$0xff]
      %v695 = vld [vmem:[#allocation2 + $0x13] sm:$0xff]
      %v696 = vld [vmem:[#allocation2 + $0x1b] sm:$0xff]
      %v697 = vld [vmem:[#allocation2 + $0x23] sm:$0xff]
      %v698 = vld [vmem:[#allocation2 + $0x2b] sm:$0xff]
      %v699 = vld [vmem:[#allocation2 + $0x33] sm:$0xff]
      %v700 = vpack.c.bf16 %v694, %v693
      %v701 = vpack.c.bf16 %v696, %v695
      %v702 = vpack.c.bf16 %v698, %v697
      %v703 = vpack.c.bf16 %v699, %v699
      %s704 = scalar_lea.vmem %s1, 256
      %v705 = vld [vmem:[%s704] sm:$0xff]
      %v706 = vld [vmem:[%s704 + $0x8] sm:$0xff]
      %v707 = vld [vmem:[%s704 + $0x10] sm:$0xff]
      %v708 = vld [vmem:[%s704 + $0x18] sm:$0xff]
      %v709 = vld [vmem:[%s704 + $0x20] sm:$0xff]
      %v710 = vld [vmem:[%s704 + $0x28] sm:$0xff]
      %v711 = vld [vmem:[%s704 + $0x30] sm:$0xff]
      %v712 = vld [vmem:[%s704 + $0x38] sm:$0xff]
      %v713 = vld [vmem:[%s704 + $0x40] sm:$0xff]
      %v714 = vld [vmem:[%s704 + $0x48] sm:$0xff]
      %v715 = vld [vmem:[%s704 + $0x50] sm:$0xff]
      %v716 = vld [vmem:[%s704 + $0x58] sm:$0xff]
      %v717 = vld [vmem:[%s704 + $0x60] sm:$0xff]
      %v718 = vld [vmem:[%s704 + $0x68] sm:$0xff]
      %v719 = vld [vmem:[%s704 + $0x70] sm:$0xff]
      %v720 = vld [vmem:[%s704 + $0x78] sm:$0xff]
      %v721 = vld [vmem:[%s704 + $0x80] sm:$0xff]
      %v722 = vld [vmem:[%s704 + $0x88] sm:$0xff]
      %v723 = vld [vmem:[%s704 + $0x90] sm:$0xff]
      %v724 = vld [vmem:[%s704 + $0x98] sm:$0xff]
      %v725 = vld [vmem:[%s704 + $0xa0] sm:$0xff]
      %v726 = vld [vmem:[%s704 + $0xa8] sm:$0xff]
      %v727 = vld [vmem:[%s704 + $0xb0] sm:$0xff]
      %v728 = vld [vmem:[%s704 + $0xb8] sm:$0xff]
      %v729 = vld [vmem:[%s704 + $0xc0] sm:$0xff]
      %v730 = vld [vmem:[%s704 + $0xc8] sm:$0xff]
      %v731 = vld [vmem:[%s704 + $0xd0] sm:$0xff]
      %v732 = vld [vmem:[%s704 + $0xd8] sm:$0xff]
      %v733 = vld [vmem:[%s704 + $0xe0] sm:$0xff]
      %v734 = vld [vmem:[%s704 + $0xe8] sm:$0xff]
      %v735 = vld [vmem:[%s704 + $0xf0] sm:$0xff]
      %v736 = vld [vmem:[%s704 + $0xf8] sm:$0xff]
      %v769 = vunpack.c.l.b16 %v705
      %v770 = vunpack.c.h.b16 %v705
      %v771 = vunpack.c.l.b16 %v706
      %v772 = vunpack.c.h.b16 %v706
      %v773 = vunpack.c.l.b16 %v707
      %v774 = vunpack.c.h.b16 %v707
      %v775 = vunpack.c.l.b16 %v708
      %v776 = vunpack.c.h.b16 %v708
      %v777 = vunpack.c.l.b16 %v709
      %v778 = vunpack.c.h.b16 %v709
      %v779 = vunpack.c.l.b16 %v710
      %v780 = vunpack.c.h.b16 %v710
      %v781 = vunpack.c.l.b16 %v711
      %v782 = vunpack.c.h.b16 %v711
      %v783 = vunpack.c.l.b16 %v712
      %v784 = vunpack.c.h.b16 %v712
      %v785 = vunpack.c.l.b16 %v713
      %v786 = vunpack.c.h.b16 %v713
      %v787 = vunpack.c.l.b16 %v714
      %v788 = vunpack.c.h.b16 %v714
      %v789 = vunpack.c.l.b16 %v715
      %v790 = vunpack.c.h.b16 %v715
      %v791 = vunpack.c.l.b16 %v716
      %v792 = vunpack.c.h.b16 %v716
      %v793 = vunpack.c.l.b16 %v717
      %v794 = vunpack.c.h.b16 %v717
      %v795 = vunpack.c.l.b16 %v718
      %v796 = vunpack.c.h.b16 %v718
      %v797 = vunpack.c.l.b16 %v719
      %v798 = vunpack.c.h.b16 %v719
      %v799 = vunpack.c.l.b16 %v720
      %v800 = vunpack.c.h.b16 %v720
      %v801 = vunpack.c.l.b16 %v721
      %v802 = vunpack.c.h.b16 %v721
      %v803 = vunpack.c.l.b16 %v722
      %v804 = vunpack.c.h.b16 %v722
      %v805 = vunpack.c.l.b16 %v723
      %v806 = vunpack.c.h.b16 %v723
      %v807 = vunpack.c.l.b16 %v724
      %v808 = vunpack.c.h.b16 %v724
      %v809 = vunpack.c.l.b16 %v725
      %v810 = vunpack.c.h.b16 %v725
      %v811 = vunpack.c.l.b16 %v726
      %v812 = vunpack.c.h.b16 %v726
      %v813 = vunpack.c.l.b16 %v727
      %v814 = vunpack.c.h.b16 %v727
      %v815 = vunpack.c.l.b16 %v728
      %v816 = vunpack.c.h.b16 %v728
      %v817 = vunpack.c.l.b16 %v729
      %v818 = vunpack.c.h.b16 %v729
      %v819 = vunpack.c.l.b16 %v730
      %v820 = vunpack.c.h.b16 %v730
      %v821 = vunpack.c.l.b16 %v731
      %v822 = vunpack.c.h.b16 %v731
      %v823 = vunpack.c.l.b16 %v732
      %v824 = vunpack.c.h.b16 %v732
      %v825 = vunpack.c.l.b16 %v733
      %v826 = vunpack.c.h.b16 %v733
      %v827 = vunpack.c.l.b16 %v734
      %v828 = vunpack.c.h.b16 %v734
      %v829 = vunpack.c.l.b16 %v735
      %v830 = vunpack.c.h.b16 %v735
      %v831 = vunpack.c.l.b16 %v736
      %v832 = vunpack.c.h.b16 %v736
      %v833 = vpack.c.b16 %v773, %v769
      %v834 = vpack.c.b16 %v774, %v770
      %v835 = vpack.c.b16 %v775, %v771
      %v836 = vpack.c.b16 %v776, %v772
      %v837 = vpack.c.b16 %v781, %v777
      %v838 = vpack.c.b16 %v782, %v778
      %v839 = vpack.c.b16 %v783, %v779
      %v840 = vpack.c.b16 %v784, %v780
      %v841 = vpack.c.b16 %v789, %v785
      %v842 = vpack.c.b16 %v790, %v786
      %v843 = vpack.c.b16 %v791, %v787
      %v844 = vpack.c.b16 %v792, %v788
      %v845 = vpack.c.b16 %v797, %v793
      %v846 = vpack.c.b16 %v798, %v794
      %v847 = vpack.c.b16 %v799, %v795
      %v848 = vpack.c.b16 %v800, %v796
      %v849 = vpack.c.b16 %v805, %v801
      %v850 = vpack.c.b16 %v806, %v802
      %v851 = vpack.c.b16 %v807, %v803
      %v852 = vpack.c.b16 %v808, %v804
      %v853 = vpack.c.b16 %v813, %v809
      %v854 = vpack.c.b16 %v814, %v810
      %v855 = vpack.c.b16 %v815, %v811
      %v856 = vpack.c.b16 %v816, %v812
      %v857 = vpack.c.b16 %v821, %v817
      %v858 = vpack.c.b16 %v822, %v818
      %v859 = vpack.c.b16 %v823, %v819
      %v860 = vpack.c.b16 %v824, %v820
      %v861 = vpack.c.b16 %v829, %v825
      %v862 = vpack.c.b16 %v830, %v826
      %v863 = vpack.c.b16 %v831, %v827
      %v864 = vpack.c.b16 %v832, %v828
      %897 = vmatpush.bf16.msra.mxu0 %v861
      %898 = vmatpush.bf16.msra.mxu0 %v857
      %899 = vmatpush.bf16.msra.mxu0 %v853
      %900 = vmatpush.bf16.msra.mxu0 %v849
      %901 = vmatpush.bf16.msra.mxu0 %v845
      %902 = vmatpush.bf16.msra.mxu0 %v841
      %903 = vmatpush.bf16.msra.mxu0 %v837
      %904 = vmatpush.bf16.msra.mxu0 %v833
      %905 = vmatmul.bf16.gmra.mxu0 %v700
      %v906 = vpop.f32.mrf.mxu0
      %v907 = vadd.f32 0.0, %v906
      %v908 = vpop.f32.mrf.mxu0
      %v909 = vadd.f32 0.0, %v908
      %910 = vmatmul.bf16.gmra.mxu0 %v701
      %v911 = vpop.f32.mrf.mxu0
      %v912 = vadd.f32 0.0, %v911
      %v913 = vpop.f32.mrf.mxu0
      %v914 = vadd.f32 0.0, %v913
      %915 = vmatmul.bf16.gmra.mxu0 %v702
      %v916 = vpop.f32.mrf.mxu0
      %v917 = vadd.f32 0.0, %v916
      %v918 = vpop.f32.mrf.mxu0
      %v919 = vadd.f32 0.0, %v918
      %920 = vmatmul.bf16.gmra.mxu0 %v703
      %v921 = vpop.f32.mrf.mxu0
      %v922 = vadd.f32 0.0, %v921
      %v923 = vpop.f32.mrf.mxu0
      %924 = vdwg.mxu0
      %925 = vmatpush.bf16.msra.mxu0 %v862
      %926 = vmatpush.bf16.msra.mxu0 %v858
      %927 = vmatpush.bf16.msra.mxu0 %v854
      %928 = vmatpush.bf16.msra.mxu0 %v850
      %929 = vmatpush.bf16.msra.mxu0 %v846
      %930 = vmatpush.bf16.msra.mxu0 %v842
      %931 = vmatpush.bf16.msra.mxu0 %v838
      %932 = vmatpush.bf16.msra.mxu0 %v834
      %933 = vmatmul.bf16.gmra.mxu0 %v700
      %v934 = vpop.f32.mrf.mxu0
      %v935 = vadd.f32 0.0, %v934
      %v936 = vpop.f32.mrf.mxu0
      %v937 = vadd.f32 0.0, %v936
      %938 = vmatmul.bf16.gmra.mxu0 %v701
      %v939 = vpop.f32.mrf.mxu0
      %v940 = vadd.f32 0.0, %v939
      %v941 = vpop.f32.mrf.mxu0
      %v942 = vadd.f32 0.0, %v941
      %943 = vmatmul.bf16.gmra.mxu0 %v702
      %v944 = vpop.f32.mrf.mxu0
      %v945 = vadd.f32 0.0, %v944
      %v946 = vpop.f32.mrf.mxu0
      %v947 = vadd.f32 0.0, %v946
      %948 = vmatmul.bf16.gmra.mxu0 %v703
      %v949 = vpop.f32.mrf.mxu0
      %v950 = vadd.f32 0.0, %v949
      %v951 = vpop.f32.mrf.mxu0
      %952 = vdwg.mxu0
      %953 = vmatpush.bf16.msra.mxu0 %v863
      %954 = vmatpush.bf16.msra.mxu0 %v859
      %955 = vmatpush.bf16.msra.mxu0 %v855
      %956 = vmatpush.bf16.msra.mxu0 %v851
      %957 = vmatpush.bf16.msra.mxu0 %v847
      %958 = vmatpush.bf16.msra.mxu0 %v843
      %959 = vmatpush.bf16.msra.mxu0 %v839
      %960 = vmatpush.bf16.msra.mxu0 %v835
      %961 = vmatmul.bf16.gmra.mxu0 %v700
      %v962 = vpop.f32.mrf.mxu0
      %v963 = vadd.f32 0.0, %v962
      %v964 = vpop.f32.mrf.mxu0
      %v965 = vadd.f32 0.0, %v964
      %966 = vmatmul.bf16.gmra.mxu0 %v701
      %v967 = vpop.f32.mrf.mxu0
      %v968 = vadd.f32 0.0, %v967
      %v969 = vpop.f32.mrf.mxu0
      %v970 = vadd.f32 0.0, %v969
      %971 = vmatmul.bf16.gmra.mxu0 %v702
      %v972 = vpop.f32.mrf.mxu0
      %v973 = vadd.f32 0.0, %v972
      %v974 = vpop.f32.mrf.mxu0
      %v975 = vadd.f32 0.0, %v974
      %976 = vmatmul.bf16.gmra.mxu0 %v703
      %v977 = vpop.f32.mrf.mxu0
      %v978 = vadd.f32 0.0, %v977
      %v979 = vpop.f32.mrf.mxu0
      %980 = vdwg.mxu0
      %981 = vmatpush.bf16.msra.mxu0 %v864
      %982 = vmatpush.bf16.msra.mxu0 %v860
      %983 = vmatpush.bf16.msra.mxu0 %v856
      %984 = vmatpush.bf16.msra.mxu0 %v852
      %985 = vmatpush.bf16.msra.mxu0 %v848
      %986 = vmatpush.bf16.msra.mxu0 %v844
      %987 = vmatpush.bf16.msra.mxu0 %v840
      %988 = vmatpush.bf16.msra.mxu0 %v836
      %989 = vmatmul.bf16.gmra.mxu0 %v700
      %v990 = vpop.f32.mrf.mxu0
      %v991 = vadd.f32 0.0, %v990
      %v992 = vpop.f32.mrf.mxu0
      %v993 = vadd.f32 0.0, %v992
      %994 = vmatmul.bf16.gmra.mxu0 %v701
      %v995 = vpop.f32.mrf.mxu0
      %v996 = vadd.f32 0.0, %v995
      %v997 = vpop.f32.mrf.mxu0
      %v998 = vadd.f32 0.0, %v997
      %999 = vmatmul.bf16.gmra.mxu0 %v702
      %v1000 = vpop.f32.mrf.mxu0
      %v1001 = vadd.f32 0.0, %v1000
      %v1002 = vpop.f32.mrf.mxu0
      %v1003 = vadd.f32 0.0, %v1002
      %1004 = vmatmul.bf16.gmra.mxu0 %v703
      %v1005 = vpop.f32.mrf.mxu0
      %v1006 = vadd.f32 0.0, %v1005
      %v1007 = vpop.f32.mrf.mxu0
      %1008 = vdwg.mxu0
      %v1009 = vadd.f32 %v665, %v907
      %v1010 = vadd.f32 %v666, %v935
      %v1011 = vadd.f32 %v667, %v963
      %v1012 = vadd.f32 %v668, %v991
      %v1013 = vadd.f32 %v669, %v909
      %v1014 = vadd.f32 %v670, %v937
      %v1015 = vadd.f32 %v671, %v965
      %v1016 = vadd.f32 %v672, %v993
      %v1017 = vadd.f32 %v673, %v912
      %v1018 = vadd.f32 %v674, %v940
      %v1019 = vadd.f32 %v675, %v968
      %v1020 = vadd.f32 %v676, %v996
      %v1021 = vadd.f32 %v677, %v914
      %v1022 = vadd.f32 %v678, %v942
      %v1023 = vadd.f32 %v679, %v970
      %v1024 = vadd.f32 %v680, %v998
      %v1025 = vadd.f32 %v681, %v917
      %v1026 = vadd.f32 %v682, %v945
      %v1027 = vadd.f32 %v683, %v973
      %v1028 = vadd.f32 %v684, %v1001
      %v1029 = vadd.f32 %v685, %v919
      %v1030 = vadd.f32 %v686, %v947
      %v1031 = vadd.f32 %v687, %v975
      %v1032 = vadd.f32 %v688, %v1003
      %v1033 = vadd.f32 %v689, %v922
      %v1034 = vadd.f32 %v690, %v950
      %v1035 = vadd.f32 %v691, %v978
      %v1036 = vadd.f32 %v692, %v1006
      %v1037 = vld [vmem:[#allocation2 + $0x4] sm:$0xff]
      %v1038 = vld [vmem:[#allocation2 + $0xc] sm:$0xff]
      %v1039 = vld [vmem:[#allocation2 + $0x14] sm:$0xff]
      %v1040 = vld [vmem:[#allocation2 + $0x1c] sm:$0xff]
      %v1041 = vld [vmem:[#allocation2 + $0x24] sm:$0xff]
      %v1042 = vld [vmem:[#allocation2 + $0x2c] sm:$0xff]
      %v1043 = vld [vmem:[#allocation2 + $0x34] sm:$0xff]
      %v1044 = vpack.c.bf16 %v1038, %v1037
      %v1045 = vpack.c.bf16 %v1040, %v1039
      %v1046 = vpack.c.bf16 %v1042, %v1041
      %v1047 = vpack.c.bf16 %v1043, %v1043
      %s1048 = scalar_lea.vmem %s1, 512
      %v1049 = vld [vmem:[%s1048] sm:$0xff]
      %v1050 = vld [vmem:[%s1048 + $0x8] sm:$0xff]
      %v1051 = vld [vmem:[%s1048 + $0x10] sm:$0xff]
      %v1052 = vld [vmem:[%s1048 + $0x18] sm:$0xff]
      %v1053 = vld [vmem:[%s1048 + $0x20] sm:$0xff]
      %v1054 = vld [vmem:[%s1048 + $0x28] sm:$0xff]
      %v1055 = vld [vmem:[%s1048 + $0x30] sm:$0xff]
      %v1056 = vld [vmem:[%s1048 + $0x38] sm:$0xff]
      %v1057 = vld [vmem:[%s1048 + $0x40] sm:$0xff]
      %v1058 = vld [vmem:[%s1048 + $0x48] sm:$0xff]
      %v1059 = vld [vmem:[%s1048 + $0x50] sm:$0xff]
      %v1060 = vld [vmem:[%s1048 + $0x58] sm:$0xff]
      %v1061 = vld [vmem:[%s1048 + $0x60] sm:$0xff]
      %v1062 = vld [vmem:[%s1048 + $0x68] sm:$0xff]
      %v1063 = vld [vmem:[%s1048 + $0x70] sm:$0xff]
      %v1064 = vld [vmem:[%s1048 + $0x78] sm:$0xff]
      %v1065 = vld [vmem:[%s1048 + $0x80] sm:$0xff]
      %v1066 = vld [vmem:[%s1048 + $0x88] sm:$0xff]
      %v1067 = vld [vmem:[%s1048 + $0x90] sm:$0xff]
      %v1068 = vld [vmem:[%s1048 + $0x98] sm:$0xff]
      %v1069 = vld [vmem:[%s1048 + $0xa0] sm:$0xff]
      %v1070 = vld [vmem:[%s1048 + $0xa8] sm:$0xff]
      %v1071 = vld [vmem:[%s1048 + $0xb0] sm:$0xff]
      %v1072 = vld [vmem:[%s1048 + $0xb8] sm:$0xff]
      %v1073 = vld [vmem:[%s1048 + $0xc0] sm:$0xff]
      %v1074 = vld [vmem:[%s1048 + $0xc8] sm:$0xff]
      %v1075 = vld [vmem:[%s1048 + $0xd0] sm:$0xff]
      %v1076 = vld [vmem:[%s1048 + $0xd8] sm:$0xff]
      %v1077 = vld [vmem:[%s1048 + $0xe0] sm:$0xff]
      %v1078 = vld [vmem:[%s1048 + $0xe8] sm:$0xff]
      %v1079 = vld [vmem:[%s1048 + $0xf0] sm:$0xff]
      %v1080 = vld [vmem:[%s1048 + $0xf8] sm:$0xff]
      %v1113 = vunpack.c.l.b16 %v1049
      %v1114 = vunpack.c.h.b16 %v1049
      %v1115 = vunpack.c.l.b16 %v1050
      %v1116 = vunpack.c.h.b16 %v1050
      %v1117 = vunpack.c.l.b16 %v1051
      %v1118 = vunpack.c.h.b16 %v1051
      %v1119 = vunpack.c.l.b16 %v1052
      %v1120 = vunpack.c.h.b16 %v1052
      %v1121 = vunpack.c.l.b16 %v1053
      %v1122 = vunpack.c.h.b16 %v1053
      %v1123 = vunpack.c.l.b16 %v1054
      %v1124 = vunpack.c.h.b16 %v1054
      %v1125 = vunpack.c.l.b16 %v1055
      %v1126 = vunpack.c.h.b16 %v1055
      %v1127 = vunpack.c.l.b16 %v1056
      %v1128 = vunpack.c.h.b16 %v1056
      %v1129 = vunpack.c.l.b16 %v1057
      %v1130 = vunpack.c.h.b16 %v1057
      %v1131 = vunpack.c.l.b16 %v1058
      %v1132 = vunpack.c.h.b16 %v1058
      %v1133 = vunpack.c.l.b16 %v1059
      %v1134 = vunpack.c.h.b16 %v1059
      %v1135 = vunpack.c.l.b16 %v1060
      %v1136 = vunpack.c.h.b16 %v1060
      %v1137 = vunpack.c.l.b16 %v1061
      %v1138 = vunpack.c.h.b16 %v1061
      %v1139 = vunpack.c.l.b16 %v1062
      %v1140 = vunpack.c.h.b16 %v1062
      %v1141 = vunpack.c.l.b16 %v1063
      %v1142 = vunpack.c.h.b16 %v1063
      %v1143 = vunpack.c.l.b16 %v1064
      %v1144 = vunpack.c.h.b16 %v1064
      %v1145 = vunpack.c.l.b16 %v1065
      %v1146 = vunpack.c.h.b16 %v1065
      %v1147 = vunpack.c.l.b16 %v1066
      %v1148 = vunpack.c.h.b16 %v1066
      %v1149 = vunpack.c.l.b16 %v1067
      %v1150 = vunpack.c.h.b16 %v1067
      %v1151 = vunpack.c.l.b16 %v1068
      %v1152 = vunpack.c.h.b16 %v1068
      %v1153 = vunpack.c.l.b16 %v1069
      %v1154 = vunpack.c.h.b16 %v1069
      %v1155 = vunpack.c.l.b16 %v1070
      %v1156 = vunpack.c.h.b16 %v1070
      %v1157 = vunpack.c.l.b16 %v1071
      %v1158 = vunpack.c.h.b16 %v1071
      %v1159 = vunpack.c.l.b16 %v1072
      %v1160 = vunpack.c.h.b16 %v1072
      %v1161 = vunpack.c.l.b16 %v1073
      %v1162 = vunpack.c.h.b16 %v1073
      %v1163 = vunpack.c.l.b16 %v1074
      %v1164 = vunpack.c.h.b16 %v1074
      %v1165 = vunpack.c.l.b16 %v1075
      %v1166 = vunpack.c.h.b16 %v1075
      %v1167 = vunpack.c.l.b16 %v1076
      %v1168 = vunpack.c.h.b16 %v1076
      %v1169 = vunpack.c.l.b16 %v1077
      %v1170 = vunpack.c.h.b16 %v1077
      %v1171 = vunpack.c.l.b16 %v1078
      %v1172 = vunpack.c.h.b16 %v1078
      %v1173 = vunpack.c.l.b16 %v1079
      %v1174 = vunpack.c.h.b16 %v1079
      %v1175 = vunpack.c.l.b16 %v1080
      %v1176 = vunpack.c.h.b16 %v1080
      %v1177 = vpack.c.b16 %v1117, %v1113
      %v1178 = vpack.c.b16 %v1118, %v1114
      %v1179 = vpack.c.b16 %v1119, %v1115
      %v1180 = vpack.c.b16 %v1120, %v1116
      %v1181 = vpack.c.b16 %v1125, %v1121
      %v1182 = vpack.c.b16 %v1126, %v1122
      %v1183 = vpack.c.b16 %v1127, %v1123
      %v1184 = vpack.c.b16 %v1128, %v1124
      %v1185 = vpack.c.b16 %v1133, %v1129
      %v1186 = vpack.c.b16 %v1134, %v1130
      %v1187 = vpack.c.b16 %v1135, %v1131
      %v1188 = vpack.c.b16 %v1136, %v1132
      %v1189 = vpack.c.b16 %v1141, %v1137
      %v1190 = vpack.c.b16 %v1142, %v1138
      %v1191 = vpack.c.b16 %v1143, %v1139
      %v1192 = vpack.c.b16 %v1144, %v1140
      %v1193 = vpack.c.b16 %v1149, %v1145
      %v1194 = vpack.c.b16 %v1150, %v1146
      %v1195 = vpack.c.b16 %v1151, %v1147
      %v1196 = vpack.c.b16 %v1152, %v1148
      %v1197 = vpack.c.b16 %v1157, %v1153
      %v1198 = vpack.c.b16 %v1158, %v1154
      %v1199 = vpack.c.b16 %v1159, %v1155
      %v1200 = vpack.c.b16 %v1160, %v1156
      %v1201 = vpack.c.b16 %v1165, %v1161
      %v1202 = vpack.c.b16 %v1166, %v1162
      %v1203 = vpack.c.b16 %v1167, %v1163
      %v1204 = vpack.c.b16 %v1168, %v1164
      %v1205 = vpack.c.b16 %v1173, %v1169
      %v1206 = vpack.c.b16 %v1174, %v1170
      %v1207 = vpack.c.b16 %v1175, %v1171
      %v1208 = vpack.c.b16 %v1176, %v1172
      %1241 = vmatpush.bf16.msra.mxu0 %v1205
      %1242 = vmatpush.bf16.msra.mxu0 %v1201
      %1243 = vmatpush.bf16.msra.mxu0 %v1197
      %1244 = vmatpush.bf16.msra.mxu0 %v1193
      %1245 = vmatpush.bf16.msra.mxu0 %v1189
      %1246 = vmatpush.bf16.msra.mxu0 %v1185
      %1247 = vmatpush.bf16.msra.mxu0 %v1181
      %1248 = vmatpush.bf16.msra.mxu0 %v1177
      %1249 = vmatmul.bf16.gmra.mxu0 %v1044
      %v1250 = vpop.f32.mrf.mxu0
      %v1251 = vadd.f32 0.0, %v1250
      %v1252 = vpop.f32.mrf.mxu0
      %v1253 = vadd.f32 0.0, %v1252
      %1254 = vmatmul.bf16.gmra.mxu0 %v1045
      %v1255 = vpop.f32.mrf.mxu0
      %v1256 = vadd.f32 0.0, %v1255
      %v1257 = vpop.f32.mrf.mxu0
      %v1258 = vadd.f32 0.0, %v1257
      %1259 = vmatmul.bf16.gmra.mxu0 %v1046
      %v1260 = vpop.f32.mrf.mxu0
      %v1261 = vadd.f32 0.0, %v1260
      %v1262 = vpop.f32.mrf.mxu0
      %v1263 = vadd.f32 0.0, %v1262
      %1264 = vmatmul.bf16.gmra.mxu0 %v1047
      %v1265 = vpop.f32.mrf.mxu0
      %v1266 = vadd.f32 0.0, %v1265
      %v1267 = vpop.f32.mrf.mxu0
      %1268 = vdwg.mxu0
      %1269 = vmatpush.bf16.msra.mxu0 %v1206
      %1270 = vmatpush.bf16.msra.mxu0 %v1202
      %1271 = vmatpush.bf16.msra.mxu0 %v1198
      %1272 = vmatpush.bf16.msra.mxu0 %v1194
      %1273 = vmatpush.bf16.msra.mxu0 %v1190
      %1274 = vmatpush.bf16.msra.mxu0 %v1186
      %1275 = vmatpush.bf16.msra.mxu0 %v1182
      %1276 = vmatpush.bf16.msra.mxu0 %v1178
      %1277 = vmatmul.bf16.gmra.mxu0 %v1044
      %v1278 = vpop.f32.mrf.mxu0
      %v1279 = vadd.f32 0.0, %v1278
      %v1280 = vpop.f32.mrf.mxu0
      %v1281 = vadd.f32 0.0, %v1280
      %1282 = vmatmul.bf16.gmra.mxu0 %v1045
      %v1283 = vpop.f32.mrf.mxu0
      %v1284 = vadd.f32 0.0, %v1283
      %v1285 = vpop.f32.mrf.mxu0
      %v1286 = vadd.f32 0.0, %v1285
      %1287 = vmatmul.bf16.gmra.mxu0 %v1046
      %v1288 = vpop.f32.mrf.mxu0
      %v1289 = vadd.f32 0.0, %v1288
      %v1290 = vpop.f32.mrf.mxu0
      %v1291 = vadd.f32 0.0, %v1290
      %1292 = vmatmul.bf16.gmra.mxu0 %v1047
      %v1293 = vpop.f32.mrf.mxu0
      %v1294 = vadd.f32 0.0, %v1293
      %v1295 = vpop.f32.mrf.mxu0
      %1296 = vdwg.mxu0
      %1297 = vmatpush.bf16.msra.mxu0 %v1207
      %1298 = vmatpush.bf16.msra.mxu0 %v1203
      %1299 = vmatpush.bf16.msra.mxu0 %v1199
      %1300 = vmatpush.bf16.msra.mxu0 %v1195
      %1301 = vmatpush.bf16.msra.mxu0 %v1191
      %1302 = vmatpush.bf16.msra.mxu0 %v1187
      %1303 = vmatpush.bf16.msra.mxu0 %v1183
      %1304 = vmatpush.bf16.msra.mxu0 %v1179
      %1305 = vmatmul.bf16.gmra.mxu0 %v1044
      %v1306 = vpop.f32.mrf.mxu0
      %v1307 = vadd.f32 0.0, %v1306
      %v1308 = vpop.f32.mrf.mxu0
      %v1309 = vadd.f32 0.0, %v1308
      %1310 = vmatmul.bf16.gmra.mxu0 %v1045
      %v1311 = vpop.f32.mrf.mxu0
      %v1312 = vadd.f32 0.0, %v1311
      %v1313 = vpop.f32.mrf.mxu0
      %v1314 = vadd.f32 0.0, %v1313
      %1315 = vmatmul.bf16.gmra.mxu0 %v1046
      %v1316 = vpop.f32.mrf.mxu0
      %v1317 = vadd.f32 0.0, %v1316
      %v1318 = vpop.f32.mrf.mxu0
      %v1319 = vadd.f32 0.0, %v1318
      %1320 = vmatmul.bf16.gmra.mxu0 %v1047
      %v1321 = vpop.f32.mrf.mxu0
      %v1322 = vadd.f32 0.0, %v1321
      %v1323 = vpop.f32.mrf.mxu0
      %1324 = vdwg.mxu0
      %1325 = vmatpush.bf16.msra.mxu0 %v1208
      %1326 = vmatpush.bf16.msra.mxu0 %v1204
      %1327 = vmatpush.bf16.msra.mxu0 %v1200
      %1328 = vmatpush.bf16.msra.mxu0 %v1196
      %1329 = vmatpush.bf16.msra.mxu0 %v1192
      %1330 = vmatpush.bf16.msra.mxu0 %v1188
      %1331 = vmatpush.bf16.msra.mxu0 %v1184
      %1332 = vmatpush.bf16.msra.mxu0 %v1180
      %1333 = vmatmul.bf16.gmra.mxu0 %v1044
      %v1334 = vpop.f32.mrf.mxu0
      %v1335 = vadd.f32 0.0, %v1334
      %v1336 = vpop.f32.mrf.mxu0
      %v1337 = vadd.f32 0.0, %v1336
      %1338 = vmatmul.bf16.gmra.mxu0 %v1045
      %v1339 = vpop.f32.mrf.mxu0
      %v1340 = vadd.f32 0.0, %v1339
      %v1341 = vpop.f32.mrf.mxu0
      %v1342 = vadd.f32 0.0, %v1341
      %1343 = vmatmul.bf16.gmra.mxu0 %v1046
      %v1344 = vpop.f32.mrf.mxu0
      %v1345 = vadd.f32 0.0, %v1344
      %v1346 = vpop.f32.mrf.mxu0
      %v1347 = vadd.f32 0.0, %v1346
      %1348 = vmatmul.bf16.gmra.mxu0 %v1047
      %v1349 = vpop.f32.mrf.mxu0
      %v1350 = vadd.f32 0.0, %v1349
      %v1351 = vpop.f32.mrf.mxu0
      %1352 = vdwg.mxu0
      %v1353 = vadd.f32 %v1009, %v1251
      %v1354 = vadd.f32 %v1010, %v1279
      %v1355 = vadd.f32 %v1011, %v1307
      %v1356 = vadd.f32 %v1012, %v1335
      %v1357 = vadd.f32 %v1013, %v1253
      %v1358 = vadd.f32 %v1014, %v1281
      %v1359 = vadd.f32 %v1015, %v1309
      %v1360 = vadd.f32 %v1016, %v1337
      %v1361 = vadd.f32 %v1017, %v1256
      %v1362 = vadd.f32 %v1018, %v1284
      %v1363 = vadd.f32 %v1019, %v1312
      %v1364 = vadd.f32 %v1020, %v1340
      %v1365 = vadd.f32 %v1021, %v1258
      %v1366 = vadd.f32 %v1022, %v1286
      %v1367 = vadd.f32 %v1023, %v1314
      %v1368 = vadd.f32 %v1024, %v1342
      %v1369 = vadd.f32 %v1025, %v1261
      %v1370 = vadd.f32 %v1026, %v1289
      %v1371 = vadd.f32 %v1027, %v1317
      %v1372 = vadd.f32 %v1028, %v1345
      %v1373 = vadd.f32 %v1029, %v1263
      %v1374 = vadd.f32 %v1030, %v1291
      %v1375 = vadd.f32 %v1031, %v1319
      %v1376 = vadd.f32 %v1032, %v1347
      %v1377 = vadd.f32 %v1033, %v1266
      %v1378 = vadd.f32 %v1034, %v1294
      %v1379 = vadd.f32 %v1035, %v1322
      %v1380 = vadd.f32 %v1036, %v1350
      %v1381 = vld [vmem:[#allocation2 + $0x7] sm:$0xff]
      %v1382 = vld [vmem:[#allocation2 + $0xf] sm:$0xff]
      %v1383 = vld [vmem:[#allocation2 + $0x17] sm:$0xff]
      %v1384 = vld [vmem:[#allocation2 + $0x1f] sm:$0xff]
      %v1385 = vld [vmem:[#allocation2 + $0x27] sm:$0xff]
      %v1386 = vld [vmem:[#allocation2 + $0x2f] sm:$0xff]
      %v1387 = vld [vmem:[#allocation2 + $0x37] sm:$0xff]
      %v1388 = vpack.c.bf16 %v1382, %v1381
      %v1389 = vpack.c.bf16 %v1384, %v1383
      %v1390 = vpack.c.bf16 %v1386, %v1385
      %v1391 = vpack.c.bf16 %v1387, %v1387
      %s1392 = scalar_lea.vmem %s1, 768
      %v1393 = vld [vmem:[%s1392] sm:$0xff]
      %v1394 = vld [vmem:[%s1392 + $0x8] sm:$0xff]
      %v1395 = vld [vmem:[%s1392 + $0x10] sm:$0xff]
      %v1396 = vld [vmem:[%s1392 + $0x18] sm:$0xff]
      %v1397 = vld [vmem:[%s1392 + $0x20] sm:$0xff]
      %v1398 = vld [vmem:[%s1392 + $0x28] sm:$0xff]
      %v1399 = vld [vmem:[%s1392 + $0x30] sm:$0xff]
      %v1400 = vld [vmem:[%s1392 + $0x38] sm:$0xff]
      %v1401 = vld [vmem:[%s1392 + $0x40] sm:$0xff]
      %v1402 = vld [vmem:[%s1392 + $0x48] sm:$0xff]
      %v1403 = vld [vmem:[%s1392 + $0x50] sm:$0xff]
      %v1404 = vld [vmem:[%s1392 + $0x58] sm:$0xff]
      %v1405 = vld [vmem:[%s1392 + $0x60] sm:$0xff]
      %v1406 = vld [vmem:[%s1392 + $0x68] sm:$0xff]
      %v1407 = vld [vmem:[%s1392 + $0x70] sm:$0xff]
      %v1408 = vld [vmem:[%s1392 + $0x78] sm:$0xff]
      %v1409 = vld [vmem:[%s1392 + $0x80] sm:$0xff]
      %v1410 = vld [vmem:[%s1392 + $0x88] sm:$0xff]
      %v1411 = vld [vmem:[%s1392 + $0x90] sm:$0xff]
      %v1412 = vld [vmem:[%s1392 + $0x98] sm:$0xff]
      %v1413 = vld [vmem:[%s1392 + $0xa0] sm:$0xff]
      %v1414 = vld [vmem:[%s1392 + $0xa8] sm:$0xff]
      %v1415 = vld [vmem:[%s1392 + $0xb0] sm:$0xff]
      %v1416 = vld [vmem:[%s1392 + $0xb8] sm:$0xff]
      %v1417 = vld [vmem:[%s1392 + $0xc0] sm:$0xff]
      %v1418 = vld [vmem:[%s1392 + $0xc8] sm:$0xff]
      %v1419 = vld [vmem:[%s1392 + $0xd0] sm:$0xff]
      %v1420 = vld [vmem:[%s1392 + $0xd8] sm:$0xff]
      %v1421 = vld [vmem:[%s1392 + $0xe0] sm:$0xff]
      %v1422 = vld [vmem:[%s1392 + $0xe8] sm:$0xff]
      %v1423 = vld [vmem:[%s1392 + $0xf0] sm:$0xff]
      %v1424 = vld [vmem:[%s1392 + $0xf8] sm:$0xff]
      %v1457 = vunpack.c.l.b16 %v1393
      %v1458 = vunpack.c.h.b16 %v1393
      %v1459 = vunpack.c.l.b16 %v1394
      %v1460 = vunpack.c.h.b16 %v1394
      %v1461 = vunpack.c.l.b16 %v1395
      %v1462 = vunpack.c.h.b16 %v1395
      %v1463 = vunpack.c.l.b16 %v1396
      %v1464 = vunpack.c.h.b16 %v1396
      %v1465 = vunpack.c.l.b16 %v1397
      %v1466 = vunpack.c.h.b16 %v1397
      %v1467 = vunpack.c.l.b16 %v1398
      %v1468 = vunpack.c.h.b16 %v1398
      %v1469 = vunpack.c.l.b16 %v1399
      %v1470 = vunpack.c.h.b16 %v1399
      %v1471 = vunpack.c.l.b16 %v1400
      %v1472 = vunpack.c.h.b16 %v1400
      %v1473 = vunpack.c.l.b16 %v1401
      %v1474 = vunpack.c.h.b16 %v1401
      %v1475 = vunpack.c.l.b16 %v1402
      %v1476 = vunpack.c.h.b16 %v1402
      %v1477 = vunpack.c.l.b16 %v1403
      %v1478 = vunpack.c.h.b16 %v1403
      %v1479 = vunpack.c.l.b16 %v1404
      %v1480 = vunpack.c.h.b16 %v1404
      %v1481 = vunpack.c.l.b16 %v1405
      %v1482 = vunpack.c.h.b16 %v1405
      %v1483 = vunpack.c.l.b16 %v1406
      %v1484 = vunpack.c.h.b16 %v1406
      %v1485 = vunpack.c.l.b16 %v1407
      %v1486 = vunpack.c.h.b16 %v1407
      %v1487 = vunpack.c.l.b16 %v1408
      %v1488 = vunpack.c.h.b16 %v1408
      %v1489 = vunpack.c.l.b16 %v1409
      %v1490 = vunpack.c.h.b16 %v1409
      %v1491 = vunpack.c.l.b16 %v1410
      %v1492 = vunpack.c.h.b16 %v1410
      %v1493 = vunpack.c.l.b16 %v1411
      %v1494 = vunpack.c.h.b16 %v1411
      %v1495 = vunpack.c.l.b16 %v1412
      %v1496 = vunpack.c.h.b16 %v1412
      %v1497 = vunpack.c.l.b16 %v1413
      %v1498 = vunpack.c.h.b16 %v1413
      %v1499 = vunpack.c.l.b16 %v1414
      %v1500 = vunpack.c.h.b16 %v1414
      %v1501 = vunpack.c.l.b16 %v1415
      %v1502 = vunpack.c.h.b16 %v1415
      %v1503 = vunpack.c.l.b16 %v1416
      %v1504 = vunpack.c.h.b16 %v1416
      %v1505 = vunpack.c.l.b16 %v1417
      %v1506 = vunpack.c.h.b16 %v1417
      %v1507 = vunpack.c.l.b16 %v1418
      %v1508 = vunpack.c.h.b16 %v1418
      %v1509 = vunpack.c.l.b16 %v1419
      %v1510 = vunpack.c.h.b16 %v1419
      %v1511 = vunpack.c.l.b16 %v1420
      %v1512 = vunpack.c.h.b16 %v1420
      %v1513 = vunpack.c.l.b16 %v1421
      %v1514 = vunpack.c.h.b16 %v1421
      %v1515 = vunpack.c.l.b16 %v1422
      %v1516 = vunpack.c.h.b16 %v1422
      %v1517 = vunpack.c.l.b16 %v1423
      %v1518 = vunpack.c.h.b16 %v1423
      %v1519 = vunpack.c.l.b16 %v1424
      %v1520 = vunpack.c.h.b16 %v1424
      %v1521 = vpack.c.b16 %v1461, %v1457
      %v1522 = vpack.c.b16 %v1462, %v1458
      %v1523 = vpack.c.b16 %v1463, %v1459
      %v1524 = vpack.c.b16 %v1464, %v1460
      %v1525 = vpack.c.b16 %v1469, %v1465
      %v1526 = vpack.c.b16 %v1470, %v1466
      %v1527 = vpack.c.b16 %v1471, %v1467
      %v1528 = vpack.c.b16 %v1472, %v1468
      %v1529 = vpack.c.b16 %v1477, %v1473
      %v1530 = vpack.c.b16 %v1478, %v1474
      %v1531 = vpack.c.b16 %v1479, %v1475
      %v1532 = vpack.c.b16 %v1480, %v1476
      %v1533 = vpack.c.b16 %v1485, %v1481
      %v1534 = vpack.c.b16 %v1486, %v1482
      %v1535 = vpack.c.b16 %v1487, %v1483
      %v1536 = vpack.c.b16 %v1488, %v1484
      %v1537 = vpack.c.b16 %v1493, %v1489
      %v1538 = vpack.c.b16 %v1494, %v1490
      %v1539 = vpack.c.b16 %v1495, %v1491
      %v1540 = vpack.c.b16 %v1496, %v1492
      %v1541 = vpack.c.b16 %v1501, %v1497
      %v1542 = vpack.c.b16 %v1502, %v1498
      %v1543 = vpack.c.b16 %v1503, %v1499
      %v1544 = vpack.c.b16 %v1504, %v1500
      %v1545 = vpack.c.b16 %v1509, %v1505
      %v1546 = vpack.c.b16 %v1510, %v1506
      %v1547 = vpack.c.b16 %v1511, %v1507
      %v1548 = vpack.c.b16 %v1512, %v1508
      %v1549 = vpack.c.b16 %v1517, %v1513
      %v1550 = vpack.c.b16 %v1518, %v1514
      %v1551 = vpack.c.b16 %v1519, %v1515
      %v1552 = vpack.c.b16 %v1520, %v1516
      %1585 = vmatpush.bf16.msra.mxu0 %v1549
      %1586 = vmatpush.bf16.msra.mxu0 %v1545
      %1587 = vmatpush.bf16.msra.mxu0 %v1541
      %1588 = vmatpush.bf16.msra.mxu0 %v1537
      %1589 = vmatpush.bf16.msra.mxu0 %v1533
      %1590 = vmatpush.bf16.msra.mxu0 %v1529
      %1591 = vmatpush.bf16.msra.mxu0 %v1525
      %1592 = vmatpush.bf16.msra.mxu0 %v1521
      %1593 = vmatmul.bf16.gmra.mxu0 %v1388
      %v1594 = vpop.f32.mrf.mxu0
      %v1595 = vadd.f32 0.0, %v1594
      %v1596 = vpop.f32.mrf.mxu0
      %v1597 = vadd.f32 0.0, %v1596
      %1598 = vmatmul.bf16.gmra.mxu0 %v1389
      %v1599 = vpop.f32.mrf.mxu0
      %v1600 = vadd.f32 0.0, %v1599
      %v1601 = vpop.f32.mrf.mxu0
      %v1602 = vadd.f32 0.0, %v1601
      %1603 = vmatmul.bf16.gmra.mxu0 %v1390
      %v1604 = vpop.f32.mrf.mxu0
      %v1605 = vadd.f32 0.0, %v1604
      %v1606 = vpop.f32.mrf.mxu0
      %v1607 = vadd.f32 0.0, %v1606
      %1608 = vmatmul.bf16.gmra.mxu0 %v1391
      %v1609 = vpop.f32.mrf.mxu0
      %v1610 = vadd.f32 0.0, %v1609
      %v1611 = vpop.f32.mrf.mxu0
      %1612 = vdwg.mxu0
      %1613 = vmatpush.bf16.msra.mxu0 %v1550
      %1614 = vmatpush.bf16.msra.mxu0 %v1546
      %1615 = vmatpush.bf16.msra.mxu0 %v1542
      %1616 = vmatpush.bf16.msra.mxu0 %v1538
      %1617 = vmatpush.bf16.msra.mxu0 %v1534
      %1618 = vmatpush.bf16.msra.mxu0 %v1530
      %1619 = vmatpush.bf16.msra.mxu0 %v1526
      %1620 = vmatpush.bf16.msra.mxu0 %v1522
      %1621 = vmatmul.bf16.gmra.mxu0 %v1388
      %v1622 = vpop.f32.mrf.mxu0
      %v1623 = vadd.f32 0.0, %v1622
      %v1624 = vpop.f32.mrf.mxu0
      %v1625 = vadd.f32 0.0, %v1624
      %1626 = vmatmul.bf16.gmra.mxu0 %v1389
      %v1627 = vpop.f32.mrf.mxu0
      %v1628 = vadd.f32 0.0, %v1627
      %v1629 = vpop.f32.mrf.mxu0
      %v1630 = vadd.f32 0.0, %v1629
      %1631 = vmatmul.bf16.gmra.mxu0 %v1390
      %v1632 = vpop.f32.mrf.mxu0
      %v1633 = vadd.f32 0.0, %v1632
      %v1634 = vpop.f32.mrf.mxu0
      %v1635 = vadd.f32 0.0, %v1634
      %1636 = vmatmul.bf16.gmra.mxu0 %v1391
      %v1637 = vpop.f32.mrf.mxu0
      %v1638 = vadd.f32 0.0, %v1637
      %v1639 = vpop.f32.mrf.mxu0
      %1640 = vdwg.mxu0
      %1641 = vmatpush.bf16.msra.mxu0 %v1551
      %1642 = vmatpush.bf16.msra.mxu0 %v1547
      %1643 = vmatpush.bf16.msra.mxu0 %v1543
      %1644 = vmatpush.bf16.msra.mxu0 %v1539
      %1645 = vmatpush.bf16.msra.mxu0 %v1535
      %1646 = vmatpush.bf16.msra.mxu0 %v1531
      %1647 = vmatpush.bf16.msra.mxu0 %v1527
      %1648 = vmatpush.bf16.msra.mxu0 %v1523
      %1649 = vmatmul.bf16.gmra.mxu0 %v1388
      %v1650 = vpop.f32.mrf.mxu0
      %v1651 = vadd.f32 0.0, %v1650
      %v1652 = vpop.f32.mrf.mxu0
      %v1653 = vadd.f32 0.0, %v1652
      %1654 = vmatmul.bf16.gmra.mxu0 %v1389
      %v1655 = vpop.f32.mrf.mxu0
      %v1656 = vadd.f32 0.0, %v1655
      %v1657 = vpop.f32.mrf.mxu0
      %v1658 = vadd.f32 0.0, %v1657
      %1659 = vmatmul.bf16.gmra.mxu0 %v1390
      %v1660 = vpop.f32.mrf.mxu0
      %v1661 = vadd.f32 0.0, %v1660
      %v1662 = vpop.f32.mrf.mxu0
      %v1663 = vadd.f32 0.0, %v1662
      %1664 = vmatmul.bf16.gmra.mxu0 %v1391
      %v1665 = vpop.f32.mrf.mxu0
      %v1666 = vadd.f32 0.0, %v1665
      %v1667 = vpop.f32.mrf.mxu0
      %1668 = vdwg.mxu0
      %1669 = vmatpush.bf16.msra.mxu0 %v1552
      %1670 = vmatpush.bf16.msra.mxu0 %v1548
      %1671 = vmatpush.bf16.msra.mxu0 %v1544
      %1672 = vmatpush.bf16.msra.mxu0 %v1540
      %1673 = vmatpush.bf16.msra.mxu0 %v1536
      %1674 = vmatpush.bf16.msra.mxu0 %v1532
      %1675 = vmatpush.bf16.msra.mxu0 %v1528
      %1676 = vmatpush.bf16.msra.mxu0 %v1524
      %1677 = vmatmul.bf16.gmra.mxu0 %v1388
      %v1678 = vpop.f32.mrf.mxu0
      %v1679 = vadd.f32 0.0, %v1678
      %v1680 = vpop.f32.mrf.mxu0
      %v1681 = vadd.f32 0.0, %v1680
      %1682 = vmatmul.bf16.gmra.mxu0 %v1389
      %v1683 = vpop.f32.mrf.mxu0
      %v1684 = vadd.f32 0.0, %v1683
      %v1685 = vpop.f32.mrf.mxu0
      %v1686 = vadd.f32 0.0, %v1685
      %1687 = vmatmul.bf16.gmra.mxu0 %v1390
      %v1688 = vpop.f32.mrf.mxu0
      %v1689 = vadd.f32 0.0, %v1688
      %v1690 = vpop.f32.mrf.mxu0
      %v1691 = vadd.f32 0.0, %v1690
      %1692 = vmatmul.bf16.gmra.mxu0 %v1391
      %v1693 = vpop.f32.mrf.mxu0
      %v1694 = vadd.f32 0.0, %v1693
      %v1695 = vpop.f32.mrf.mxu0
      %1696 = vdwg.mxu0
      %v1697 = vadd.f32 %v1353, %v1595
      %v1698 = vadd.f32 %v1354, %v1623
      %v1699 = vadd.f32 %v1355, %v1651
      %v1700 = vadd.f32 %v1356, %v1679
      %v1701 = vadd.f32 %v1357, %v1597
      %v1702 = vadd.f32 %v1358, %v1625
      %v1703 = vadd.f32 %v1359, %v1653
      %v1704 = vadd.f32 %v1360, %v1681
      %v1705 = vadd.f32 %v1361, %v1600
      %v1706 = vadd.f32 %v1362, %v1628
      %v1707 = vadd.f32 %v1363, %v1656
      %v1708 = vadd.f32 %v1364, %v1684
      %v1709 = vadd.f32 %v1365, %v1602
      %v1710 = vadd.f32 %v1366, %v1630
      %v1711 = vadd.f32 %v1367, %v1658
      %v1712 = vadd.f32 %v1368, %v1686
      %v1713 = vadd.f32 %v1369, %v1605
      %v1714 = vadd.f32 %v1370, %v1633
      %v1715 = vadd.f32 %v1371, %v1661
      %v1716 = vadd.f32 %v1372, %v1689
      %v1717 = vadd.f32 %v1373, %v1607
      %v1718 = vadd.f32 %v1374, %v1635
      %v1719 = vadd.f32 %v1375, %v1663
      %v1720 = vadd.f32 %v1376, %v1691
      %v1721 = vadd.f32 %v1377, %v1610
      %v1722 = vadd.f32 %v1378, %v1638
      %v1723 = vadd.f32 %v1379, %v1666
      %v1724 = vadd.f32 %v1380, %v1694
      %v1725 = vld [vmem:[#allocation2 + $0x8] sm:$0xff]
      %v1726 = vld [vmem:[#allocation2 + $0x10] sm:$0xff]
      %v1727 = vld [vmem:[#allocation2 + $0x18] sm:$0xff]
      %v1728 = vld [vmem:[#allocation2 + $0x20] sm:$0xff]
      %v1729 = vld [vmem:[#allocation2 + $0x28] sm:$0xff]
      %v1730 = vld [vmem:[#allocation2 + $0x30] sm:$0xff]
      %v1731 = vld [vmem:[#allocation2 + $0x38] sm:$0xff]
      %v1732 = vpack.c.bf16 %v1726, %v1725
      %v1733 = vpack.c.bf16 %v1728, %v1727
      %v1734 = vpack.c.bf16 %v1730, %v1729
      %v1735 = vpack.c.bf16 %v1731, %v1731
      %s1736 = scalar_lea.vmem %s1, 1024
      %v1737 = vld [vmem:[%s1736] sm:$0xff]
      %v1738 = vld [vmem:[%s1736 + $0x8] sm:$0xff]
      %v1739 = vld [vmem:[%s1736 + $0x10] sm:$0xff]
      %v1740 = vld [vmem:[%s1736 + $0x18] sm:$0xff]
      %v1741 = vld [vmem:[%s1736 + $0x20] sm:$0xff]
      %v1742 = vld [vmem:[%s1736 + $0x28] sm:$0xff]
      %v1743 = vld [vmem:[%s1736 + $0x30] sm:$0xff]
      %v1744 = vld [vmem:[%s1736 + $0x38] sm:$0xff]
      %v1745 = vld [vmem:[%s1736 + $0x40] sm:$0xff]
      %v1746 = vld [vmem:[%s1736 + $0x48] sm:$0xff]
      %v1747 = vld [vmem:[%s1736 + $0x50] sm:$0xff]
      %v1748 = vld [vmem:[%s1736 + $0x58] sm:$0xff]
      %v1749 = vld [vmem:[%s1736 + $0x60] sm:$0xff]
      %v1750 = vld [vmem:[%s1736 + $0x68] sm:$0xff]
      %v1751 = vld [vmem:[%s1736 + $0x70] sm:$0xff]
      %v1752 = vld [vmem:[%s1736 + $0x78] sm:$0xff]
      %v1753 = vld [vmem:[%s1736 + $0x80] sm:$0xff]
      %v1754 = vld [vmem:[%s1736 + $0x88] sm:$0xff]
      %v1755 = vld [vmem:[%s1736 + $0x90] sm:$0xff]
      %v1756 = vld [vmem:[%s1736 + $0x98] sm:$0xff]
      %v1757 = vld [vmem:[%s1736 + $0xa0] sm:$0xff]
      %v1758 = vld [vmem:[%s1736 + $0xa8] sm:$0xff]
      %v1759 = vld [vmem:[%s1736 + $0xb0] sm:$0xff]
      %v1760 = vld [vmem:[%s1736 + $0xb8] sm:$0xff]
      %v1761 = vld [vmem:[%s1736 + $0xc0] sm:$0xff]
      %v1762 = vld [vmem:[%s1736 + $0xc8] sm:$0xff]
      %v1763 = vld [vmem:[%s1736 + $0xd0] sm:$0xff]
      %v1764 = vld [vmem:[%s1736 + $0xd8] sm:$0xff]
      %v1765 = vld [vmem:[%s1736 + $0xe0] sm:$0xff]
      %v1766 = vld [vmem:[%s1736 + $0xe8] sm:$0xff]
      %v1767 = vld [vmem:[%s1736 + $0xf0] sm:$0xff]
      %v1768 = vld [vmem:[%s1736 + $0xf8] sm:$0xff]
      %v1801 = vunpack.c.l.b16 %v1737
      %v1802 = vunpack.c.h.b16 %v1737
      %v1803 = vunpack.c.l.b16 %v1738
      %v1804 = vunpack.c.h.b16 %v1738
      %v1805 = vunpack.c.l.b16 %v1739
      %v1806 = vunpack.c.h.b16 %v1739
      %v1807 = vunpack.c.l.b16 %v1740
      %v1808 = vunpack.c.h.b16 %v1740
      %v1809 = vunpack.c.l.b16 %v1741
      %v1810 = vunpack.c.h.b16 %v1741
      %v1811 = vunpack.c.l.b16 %v1742
      %v1812 = vunpack.c.h.b16 %v1742
      %v1813 = vunpack.c.l.b16 %v1743
      %v1814 = vunpack.c.h.b16 %v1743
      %v1815 = vunpack.c.l.b16 %v1744
      %v1816 = vunpack.c.h.b16 %v1744
      %v1817 = vunpack.c.l.b16 %v1745
      %v1818 = vunpack.c.h.b16 %v1745
      %v1819 = vunpack.c.l.b16 %v1746
      %v1820 = vunpack.c.h.b16 %v1746
      %v1821 = vunpack.c.l.b16 %v1747
      %v1822 = vunpack.c.h.b16 %v1747
      %v1823 = vunpack.c.l.b16 %v1748
      %v1824 = vunpack.c.h.b16 %v1748
      %v1825 = vunpack.c.l.b16 %v1749
      %v1826 = vunpack.c.h.b16 %v1749
      %v1827 = vunpack.c.l.b16 %v1750
      %v1828 = vunpack.c.h.b16 %v1750
      %v1829 = vunpack.c.l.b16 %v1751
      %v1830 = vunpack.c.h.b16 %v1751
      %v1831 = vunpack.c.l.b16 %v1752
      %v1832 = vunpack.c.h.b16 %v1752
      %v1833 = vunpack.c.l.b16 %v1753
      %v1834 = vunpack.c.h.b16 %v1753
      %v1835 = vunpack.c.l.b16 %v1754
      %v1836 = vunpack.c.h.b16 %v1754
      %v1837 = vunpack.c.l.b16 %v1755
      %v1838 = vunpack.c.h.b16 %v1755
      %v1839 = vunpack.c.l.b16 %v1756
      %v1840 = vunpack.c.h.b16 %v1756
      %v1841 = vunpack.c.l.b16 %v1757
      %v1842 = vunpack.c.h.b16 %v1757
      %v1843 = vunpack.c.l.b16 %v1758
      %v1844 = vunpack.c.h.b16 %v1758
      %v1845 = vunpack.c.l.b16 %v1759
      %v1846 = vunpack.c.h.b16 %v1759
      %v1847 = vunpack.c.l.b16 %v1760
      %v1848 = vunpack.c.h.b16 %v1760
      %v1849 = vunpack.c.l.b16 %v1761
      %v1850 = vunpack.c.h.b16 %v1761
      %v1851 = vunpack.c.l.b16 %v1762
      %v1852 = vunpack.c.h.b16 %v1762
      %v1853 = vunpack.c.l.b16 %v1763
      %v1854 = vunpack.c.h.b16 %v1763
      %v1855 = vunpack.c.l.b16 %v1764
      %v1856 = vunpack.c.h.b16 %v1764
      %v1857 = vunpack.c.l.b16 %v1765
      %v1858 = vunpack.c.h.b16 %v1765
      %v1859 = vunpack.c.l.b16 %v1766
      %v1860 = vunpack.c.h.b16 %v1766
      %v1861 = vunpack.c.l.b16 %v1767
      %v1862 = vunpack.c.h.b16 %v1767
      %v1863 = vunpack.c.l.b16 %v1768
      %v1864 = vunpack.c.h.b16 %v1768
      %v1865 = vpack.c.b16 %v1805, %v1801
      %v1866 = vpack.c.b16 %v1806, %v1802
      %v1867 = vpack.c.b16 %v1807, %v1803
      %v1868 = vpack.c.b16 %v1808, %v1804
      %v1869 = vpack.c.b16 %v1813, %v1809
      %v1870 = vpack.c.b16 %v1814, %v1810
      %v1871 = vpack.c.b16 %v1815, %v1811
      %v1872 = vpack.c.b16 %v1816, %v1812
      %v1873 = vpack.c.b16 %v1821, %v1817
      %v1874 = vpack.c.b16 %v1822, %v1818
      %v1875 = vpack.c.b16 %v1823, %v1819
      %v1876 = vpack.c.b16 %v1824, %v1820
      %v1877 = vpack.c.b16 %v1829, %v1825
      %v1878 = vpack.c.b16 %v1830, %v1826
      %v1879 = vpack.c.b16 %v1831, %v1827
      %v1880 = vpack.c.b16 %v1832, %v1828
      %v1881 = vpack.c.b16 %v1837, %v1833
      %v1882 = vpack.c.b16 %v1838, %v1834
      %v1883 = vpack.c.b16 %v1839, %v1835
      %v1884 = vpack.c.b16 %v1840, %v1836
      %v1885 = vpack.c.b16 %v1845, %v1841
      %v1886 = vpack.c.b16 %v1846, %v1842
      %v1887 = vpack.c.b16 %v1847, %v1843
      %v1888 = vpack.c.b16 %v1848, %v1844
      %v1889 = vpack.c.b16 %v1853, %v1849
      %v1890 = vpack.c.b16 %v1854, %v1850
      %v1891 = vpack.c.b16 %v1855, %v1851
      %v1892 = vpack.c.b16 %v1856, %v1852
      %v1893 = vpack.c.b16 %v1861, %v1857
      %v1894 = vpack.c.b16 %v1862, %v1858
      %v1895 = vpack.c.b16 %v1863, %v1859
      %v1896 = vpack.c.b16 %v1864, %v1860
      %1929 = vmatpush.bf16.msra.mxu0 %v1893
      %1930 = vmatpush.bf16.msra.mxu0 %v1889
      %1931 = vmatpush.bf16.msra.mxu0 %v1885
      %1932 = vmatpush.bf16.msra.mxu0 %v1881
      %1933 = vmatpush.bf16.msra.mxu0 %v1877
      %1934 = vmatpush.bf16.msra.mxu0 %v1873
      %1935 = vmatpush.bf16.msra.mxu0 %v1869
      %1936 = vmatpush.bf16.msra.mxu0 %v1865
      %1937 = vmatmul.bf16.gmra.mxu0 %v1732
      %v1938 = vpop.f32.mrf.mxu0
      %v1939 = vadd.f32 0.0, %v1938
      %v1940 = vpop.f32.mrf.mxu0
      %v1941 = vadd.f32 0.0, %v1940
      %1942 = vmatmul.bf16.gmra.mxu0 %v1733
      %v1943 = vpop.f32.mrf.mxu0
      %v1944 = vadd.f32 0.0, %v1943
      %v1945 = vpop.f32.mrf.mxu0
      %v1946 = vadd.f32 0.0, %v1945
      %1947 = vmatmul.bf16.gmra.mxu0 %v1734
      %v1948 = vpop.f32.mrf.mxu0
      %v1949 = vadd.f32 0.0, %v1948
      %v1950 = vpop.f32.mrf.mxu0
      %v1951 = vadd.f32 0.0, %v1950
      %1952 = vmatmul.bf16.gmra.mxu0 %v1735
      %v1953 = vpop.f32.mrf.mxu0
      %v1954 = vadd.f32 0.0, %v1953
      %v1955 = vpop.f32.mrf.mxu0
      %1956 = vdwg.mxu0
      %1957 = vmatpush.bf16.msra.mxu0 %v1894
      %1958 = vmatpush.bf16.msra.mxu0 %v1890
      %1959 = vmatpush.bf16.msra.mxu0 %v1886
      %1960 = vmatpush.bf16.msra.mxu0 %v1882
      %1961 = vmatpush.bf16.msra.mxu0 %v1878
      %1962 = vmatpush.bf16.msra.mxu0 %v1874
      %1963 = vmatpush.bf16.msra.mxu0 %v1870
      %1964 = vmatpush.bf16.msra.mxu0 %v1866
      %1965 = vmatmul.bf16.gmra.mxu0 %v1732
      %v1966 = vpop.f32.mrf.mxu0
      %v1967 = vadd.f32 0.0, %v1966
      %v1968 = vpop.f32.mrf.mxu0
      %v1969 = vadd.f32 0.0, %v1968
      %1970 = vmatmul.bf16.gmra.mxu0 %v1733
      %v1971 = vpop.f32.mrf.mxu0
      %v1972 = vadd.f32 0.0, %v1971
      %v1973 = vpop.f32.mrf.mxu0
      %v1974 = vadd.f32 0.0, %v1973
      %1975 = vmatmul.bf16.gmra.mxu0 %v1734
      %v1976 = vpop.f32.mrf.mxu0
      %v1977 = vadd.f32 0.0, %v1976
      %v1978 = vpop.f32.mrf.mxu0
      %v1979 = vadd.f32 0.0, %v1978
      %1980 = vmatmul.bf16.gmra.mxu0 %v1735
      %v1981 = vpop.f32.mrf.mxu0
      %v1982 = vadd.f32 0.0, %v1981
      %v1983 = vpop.f32.mrf.mxu0
      %1984 = vdwg.mxu0
      %1985 = vmatpush.bf16.msra.mxu0 %v1895
      %1986 = vmatpush.bf16.msra.mxu0 %v1891
      %1987 = vmatpush.bf16.msra.mxu0 %v1887
      %1988 = vmatpush.bf16.msra.mxu0 %v1883
      %1989 = vmatpush.bf16.msra.mxu0 %v1879
      %1990 = vmatpush.bf16.msra.mxu0 %v1875
      %1991 = vmatpush.bf16.msra.mxu0 %v1871
      %1992 = vmatpush.bf16.msra.mxu0 %v1867
      %1993 = vmatmul.bf16.gmra.mxu0 %v1732
      %v1994 = vpop.f32.mrf.mxu0
      %v1995 = vadd.f32 0.0, %v1994
      %v1996 = vpop.f32.mrf.mxu0
      %v1997 = vadd.f32 0.0, %v1996
      %1998 = vmatmul.bf16.gmra.mxu0 %v1733
      %v1999 = vpop.f32.mrf.mxu0
      %v2000 = vadd.f32 0.0, %v1999
      %v2001 = vpop.f32.mrf.mxu0
      %v2002 = vadd.f32 0.0, %v2001
      %2003 = vmatmul.bf16.gmra.mxu0 %v1734
      %v2004 = vpop.f32.mrf.mxu0
      %v2005 = vadd.f32 0.0, %v2004
      %v2006 = vpop.f32.mrf.mxu0
      %v2007 = vadd.f32 0.0, %v2006
      %2008 = vmatmul.bf16.gmra.mxu0 %v1735
      %v2009 = vpop.f32.mrf.mxu0
      %v2010 = vadd.f32 0.0, %v2009
      %v2011 = vpop.f32.mrf.mxu0
      %2012 = vdwg.mxu0
      %2013 = vmatpush.bf16.msra.mxu0 %v1896
      %2014 = vmatpush.bf16.msra.mxu0 %v1892
      %2015 = vmatpush.bf16.msra.mxu0 %v1888
      %2016 = vmatpush.bf16.msra.mxu0 %v1884
      %2017 = vmatpush.bf16.msra.mxu0 %v1880
      %2018 = vmatpush.bf16.msra.mxu0 %v1876
      %2019 = vmatpush.bf16.msra.mxu0 %v1872
      %2020 = vmatpush.bf16.msra.mxu0 %v1868
      %2021 = vmatmul.bf16.gmra.mxu0 %v1732
      %v2022 = vpop.f32.mrf.mxu0
      %v2023 = vadd.f32 0.0, %v2022
      %v2024 = vpop.f32.mrf.mxu0
      %v2025 = vadd.f32 0.0, %v2024
      %2026 = vmatmul.bf16.gmra.mxu0 %v1733
      %v2027 = vpop.f32.mrf.mxu0
      %v2028 = vadd.f32 0.0, %v2027
      %v2029 = vpop.f32.mrf.mxu0
      %v2030 = vadd.f32 0.0, %v2029
      %2031 = vmatmul.bf16.gmra.mxu0 %v1734
      %v2032 = vpop.f32.mrf.mxu0
      %v2033 = vadd.f32 0.0, %v2032
      %v2034 = vpop.f32.mrf.mxu0
      %v2035 = vadd.f32 0.0, %v2034
      %2036 = vmatmul.bf16.gmra.mxu0 %v1735
      %v2037 = vpop.f32.mrf.mxu0
      %v2038 = vadd.f32 0.0, %v2037
      %v2039 = vpop.f32.mrf.mxu0
      %2040 = vdwg.mxu0
      %v2041 = vadd.f32 %v1697, %v1939
      %v2042 = vadd.f32 %v1698, %v1967
      %v2043 = vadd.f32 %v1699, %v1995
      %v2044 = vadd.f32 %v1700, %v2023
      %v2045 = vadd.f32 %v1701, %v1941
      %v2046 = vadd.f32 %v1702, %v1969
      %v2047 = vadd.f32 %v1703, %v1997
      %v2048 = vadd.f32 %v1704, %v2025
      %v2049 = vadd.f32 %v1705, %v1944
      %v2050 = vadd.f32 %v1706, %v1972
      %v2051 = vadd.f32 %v1707, %v2000
      %v2052 = vadd.f32 %v1708, %v2028
      %v2053 = vadd.f32 %v1709, %v1946
      %v2054 = vadd.f32 %v1710, %v1974
      %v2055 = vadd.f32 %v1711, %v2002
      %v2056 = vadd.f32 %v1712, %v2030
      %v2057 = vadd.f32 %v1713, %v1949
      %v2058 = vadd.f32 %v1714, %v1977
      %v2059 = vadd.f32 %v1715, %v2005
      %v2060 = vadd.f32 %v1716, %v2033
      %v2061 = vadd.f32 %v1717, %v1951
      %v2062 = vadd.f32 %v1718, %v1979
      %v2063 = vadd.f32 %v1719, %v2007
      %v2064 = vadd.f32 %v1720, %v2035
      %v2065 = vadd.f32 %v1721, %v1954
      %v2066 = vadd.f32 %v1722, %v1982
      %v2067 = vadd.f32 %v1723, %v2010
      %v2068 = vadd.f32 %v1724, %v2038
      %v2069 = vld [vmem:[#allocation2 + $0x9] sm:$0xff]
      %v2070 = vld [vmem:[#allocation2 + $0x11] sm:$0xff]
      %v2071 = vld [vmem:[#allocation2 + $0x19] sm:$0xff]
      %v2072 = vld [vmem:[#allocation2 + $0x21] sm:$0xff]
      %v2073 = vld [vmem:[#allocation2 + $0x29] sm:$0xff]
      %v2074 = vld [vmem:[#allocation2 + $0x31] sm:$0xff]
      %v2075 = vld [vmem:[#allocation2 + $0x39] sm:$0xff]
      %v2076 = vpack.c.bf16 %v2070, %v2069
      %v2077 = vpack.c.bf16 %v2072, %v2071
      %v2078 = vpack.c.bf16 %v2074, %v2073
      %v2079 = vpack.c.bf16 %v2075, %v2075
      %s2080 = scalar_lea.vmem %s1, 1280
      %v2081 = vld [vmem:[%s2080] sm:$0xff]
      %v2082 = vld [vmem:[%s2080 + $0x8] sm:$0xff]
      %v2083 = vld [vmem:[%s2080 + $0x10] sm:$0xff]
      %v2084 = vld [vmem:[%s2080 + $0x18] sm:$0xff]
      %v2085 = vld [vmem:[%s2080 + $0x20] sm:$0xff]
      %v2086 = vld [vmem:[%s2080 + $0x28] sm:$0xff]
      %v2087 = vld [vmem:[%s2080 + $0x30] sm:$0xff]
      %v2088 = vld [vmem:[%s2080 + $0x38] sm:$0xff]
      %v2089 = vld [vmem:[%s2080 + $0x40] sm:$0xff]
      %v2090 = vld [vmem:[%s2080 + $0x48] sm:$0xff]
      %v2091 = vld [vmem:[%s2080 + $0x50] sm:$0xff]
      %v2092 = vld [vmem:[%s2080 + $0x58] sm:$0xff]
      %v2093 = vld [vmem:[%s2080 + $0x60] sm:$0xff]
      %v2094 = vld [vmem:[%s2080 + $0x68] sm:$0xff]
      %v2095 = vld [vmem:[%s2080 + $0x70] sm:$0xff]
      %v2096 = vld [vmem:[%s2080 + $0x78] sm:$0xff]
      %v2097 = vld [vmem:[%s2080 + $0x80] sm:$0xff]
      %v2098 = vld [vmem:[%s2080 + $0x88] sm:$0xff]
      %v2099 = vld [vmem:[%s2080 + $0x90] sm:$0xff]
      %v2100 = vld [vmem:[%s2080 + $0x98] sm:$0xff]
      %v2101 = vld [vmem:[%s2080 + $0xa0] sm:$0xff]
      %v2102 = vld [vmem:[%s2080 + $0xa8] sm:$0xff]
      %v2103 = vld [vmem:[%s2080 + $0xb0] sm:$0xff]
      %v2104 = vld [vmem:[%s2080 + $0xb8] sm:$0xff]
      %v2105 = vld [vmem:[%s2080 + $0xc0] sm:$0xff]
      %v2106 = vld [vmem:[%s2080 + $0xc8] sm:$0xff]
      %v2107 = vld [vmem:[%s2080 + $0xd0] sm:$0xff]
      %v2108 = vld [vmem:[%s2080 + $0xd8] sm:$0xff]
      %v2109 = vld [vmem:[%s2080 + $0xe0] sm:$0xff]
      %v2110 = vld [vmem:[%s2080 + $0xe8] sm:$0xff]
      %v2111 = vld [vmem:[%s2080 + $0xf0] sm:$0xff]
      %v2112 = vld [vmem:[%s2080 + $0xf8] sm:$0xff]
      %v2145 = vunpack.c.l.b16 %v2081
      %v2146 = vunpack.c.h.b16 %v2081
      %v2147 = vunpack.c.l.b16 %v2082
      %v2148 = vunpack.c.h.b16 %v2082
      %v2149 = vunpack.c.l.b16 %v2083
      %v2150 = vunpack.c.h.b16 %v2083
      %v2151 = vunpack.c.l.b16 %v2084
      %v2152 = vunpack.c.h.b16 %v2084
      %v2153 = vunpack.c.l.b16 %v2085
      %v2154 = vunpack.c.h.b16 %v2085
      %v2155 = vunpack.c.l.b16 %v2086
      %v2156 = vunpack.c.h.b16 %v2086
      %v2157 = vunpack.c.l.b16 %v2087
      %v2158 = vunpack.c.h.b16 %v2087
      %v2159 = vunpack.c.l.b16 %v2088
      %v2160 = vunpack.c.h.b16 %v2088
      %v2161 = vunpack.c.l.b16 %v2089
      %v2162 = vunpack.c.h.b16 %v2089
      %v2163 = vunpack.c.l.b16 %v2090
      %v2164 = vunpack.c.h.b16 %v2090
      %v2165 = vunpack.c.l.b16 %v2091
      %v2166 = vunpack.c.h.b16 %v2091
      %v2167 = vunpack.c.l.b16 %v2092
      %v2168 = vunpack.c.h.b16 %v2092
      %v2169 = vunpack.c.l.b16 %v2093
      %v2170 = vunpack.c.h.b16 %v2093
      %v2171 = vunpack.c.l.b16 %v2094
      %v2172 = vunpack.c.h.b16 %v2094
      %v2173 = vunpack.c.l.b16 %v2095
      %v2174 = vunpack.c.h.b16 %v2095
      %v2175 = vunpack.c.l.b16 %v2096
      %v2176 = vunpack.c.h.b16 %v2096
      %v2177 = vunpack.c.l.b16 %v2097
      %v2178 = vunpack.c.h.b16 %v2097
      %v2179 = vunpack.c.l.b16 %v2098
      %v2180 = vunpack.c.h.b16 %v2098
      %v2181 = vunpack.c.l.b16 %v2099
      %v2182 = vunpack.c.h.b16 %v2099
      %v2183 = vunpack.c.l.b16 %v2100
      %v2184 = vunpack.c.h.b16 %v2100
      %v2185 = vunpack.c.l.b16 %v2101
      %v2186 = vunpack.c.h.b16 %v2101
      %v2187 = vunpack.c.l.b16 %v2102
      %v2188 = vunpack.c.h.b16 %v2102
      %v2189 = vunpack.c.l.b16 %v2103
      %v2190 = vunpack.c.h.b16 %v2103
      %v2191 = vunpack.c.l.b16 %v2104
      %v2192 = vunpack.c.h.b16 %v2104
      %v2193 = vunpack.c.l.b16 %v2105
      %v2194 = vunpack.c.h.b16 %v2105
      %v2195 = vunpack.c.l.b16 %v2106
      %v2196 = vunpack.c.h.b16 %v2106
      %v2197 = vunpack.c.l.b16 %v2107
      %v2198 = vunpack.c.h.b16 %v2107
      %v2199 = vunpack.c.l.b16 %v2108
      %v2200 = vunpack.c.h.b16 %v2108
      %v2201 = vunpack.c.l.b16 %v2109
      %v2202 = vunpack.c.h.b16 %v2109
      %v2203 = vunpack.c.l.b16 %v2110
      %v2204 = vunpack.c.h.b16 %v2110
      %v2205 = vunpack.c.l.b16 %v2111
      %v2206 = vunpack.c.h.b16 %v2111
      %v2207 = vunpack.c.l.b16 %v2112
      %v2208 = vunpack.c.h.b16 %v2112
      %v2209 = vpack.c.b16 %v2149, %v2145
      %v2210 = vpack.c.b16 %v2150, %v2146
      %v2211 = vpack.c.b16 %v2151, %v2147
      %v2212 = vpack.c.b16 %v2152, %v2148
      %v2213 = vpack.c.b16 %v2157, %v2153
      %v2214 = vpack.c.b16 %v2158, %v2154
      %v2215 = vpack.c.b16 %v2159, %v2155
      %v2216 = vpack.c.b16 %v2160, %v2156
      %v2217 = vpack.c.b16 %v2165, %v2161
      %v2218 = vpack.c.b16 %v2166, %v2162
      %v2219 = vpack.c.b16 %v2167, %v2163
      %v2220 = vpack.c.b16 %v2168, %v2164
      %v2221 = vpack.c.b16 %v2173, %v2169
      %v2222 = vpack.c.b16 %v2174, %v2170
      %v2223 = vpack.c.b16 %v2175, %v2171
      %v2224 = vpack.c.b16 %v2176, %v2172
      %v2225 = vpack.c.b16 %v2181, %v2177
      %v2226 = vpack.c.b16 %v2182, %v2178
      %v2227 = vpack.c.b16 %v2183, %v2179
      %v2228 = vpack.c.b16 %v2184, %v2180
      %v2229 = vpack.c.b16 %v2189, %v2185
      %v2230 = vpack.c.b16 %v2190, %v2186
      %v2231 = vpack.c.b16 %v2191, %v2187
      %v2232 = vpack.c.b16 %v2192, %v2188
      %v2233 = vpack.c.b16 %v2197, %v2193
      %v2234 = vpack.c.b16 %v2198, %v2194
      %v2235 = vpack.c.b16 %v2199, %v2195
      %v2236 = vpack.c.b16 %v2200, %v2196
      %v2237 = vpack.c.b16 %v2205, %v2201
      %v2238 = vpack.c.b16 %v2206, %v2202
      %v2239 = vpack.c.b16 %v2207, %v2203
      %v2240 = vpack.c.b16 %v2208, %v2204
      %2273 = vmatpush.bf16.msra.mxu0 %v2237
      %2274 = vmatpush.bf16.msra.mxu0 %v2233
      %2275 = vmatpush.bf16.msra.mxu0 %v2229
      %2276 = vmatpush.bf16.msra.mxu0 %v2225
      %2277 = vmatpush.bf16.msra.mxu0 %v2221
      %2278 = vmatpush.bf16.msra.mxu0 %v2217
      %2279 = vmatpush.bf16.msra.mxu0 %v2213
      %2280 = vmatpush.bf16.msra.mxu0 %v2209
      %2281 = vmatmul.bf16.gmra.mxu0 %v2076
      %v2282 = vpop.f32.mrf.mxu0
      %v2283 = vadd.f32 0.0, %v2282
      %v2284 = vpop.f32.mrf.mxu0
      %v2285 = vadd.f32 0.0, %v2284
      %2286 = vmatmul.bf16.gmra.mxu0 %v2077
      %v2287 = vpop.f32.mrf.mxu0
      %v2288 = vadd.f32 0.0, %v2287
      %v2289 = vpop.f32.mrf.mxu0
      %v2290 = vadd.f32 0.0, %v2289
      %2291 = vmatmul.bf16.gmra.mxu0 %v2078
      %v2292 = vpop.f32.mrf.mxu0
      %v2293 = vadd.f32 0.0, %v2292
      %v2294 = vpop.f32.mrf.mxu0
      %v2295 = vadd.f32 0.0, %v2294
      %2296 = vmatmul.bf16.gmra.mxu0 %v2079
      %v2297 = vpop.f32.mrf.mxu0
      %v2298 = vadd.f32 0.0, %v2297
      %v2299 = vpop.f32.mrf.mxu0
      %2300 = vdwg.mxu0
      %2301 = vmatpush.bf16.msra.mxu0 %v2238
      %2302 = vmatpush.bf16.msra.mxu0 %v2234
      %2303 = vmatpush.bf16.msra.mxu0 %v2230
      %2304 = vmatpush.bf16.msra.mxu0 %v2226
      %2305 = vmatpush.bf16.msra.mxu0 %v2222
      %2306 = vmatpush.bf16.msra.mxu0 %v2218
      %2307 = vmatpush.bf16.msra.mxu0 %v2214
      %2308 = vmatpush.bf16.msra.mxu0 %v2210
      %2309 = vmatmul.bf16.gmra.mxu0 %v2076
      %v2310 = vpop.f32.mrf.mxu0
      %v2311 = vadd.f32 0.0, %v2310
      %v2312 = vpop.f32.mrf.mxu0
      %v2313 = vadd.f32 0.0, %v2312
      %2314 = vmatmul.bf16.gmra.mxu0 %v2077
      %v2315 = vpop.f32.mrf.mxu0
      %v2316 = vadd.f32 0.0, %v2315
      %v2317 = vpop.f32.mrf.mxu0
      %v2318 = vadd.f32 0.0, %v2317
      %2319 = vmatmul.bf16.gmra.mxu0 %v2078
      %v2320 = vpop.f32.mrf.mxu0
      %v2321 = vadd.f32 0.0, %v2320
      %v2322 = vpop.f32.mrf.mxu0
      %v2323 = vadd.f32 0.0, %v2322
      %2324 = vmatmul.bf16.gmra.mxu0 %v2079
      %v2325 = vpop.f32.mrf.mxu0
      %v2326 = vadd.f32 0.0, %v2325
      %v2327 = vpop.f32.mrf.mxu0
      %2328 = vdwg.mxu0
      %2329 = vmatpush.bf16.msra.mxu0 %v2239
      %2330 = vmatpush.bf16.msra.mxu0 %v2235
      %2331 = vmatpush.bf16.msra.mxu0 %v2231
      %2332 = vmatpush.bf16.msra.mxu0 %v2227
      %2333 = vmatpush.bf16.msra.mxu0 %v2223
      %2334 = vmatpush.bf16.msra.mxu0 %v2219
      %2335 = vmatpush.bf16.msra.mxu0 %v2215
      %2336 = vmatpush.bf16.msra.mxu0 %v2211
      %2337 = vmatmul.bf16.gmra.mxu0 %v2076
      %v2338 = vpop.f32.mrf.mxu0
      %v2339 = vadd.f32 0.0, %v2338
      %v2340 = vpop.f32.mrf.mxu0
      %v2341 = vadd.f32 0.0, %v2340
      %2342 = vmatmul.bf16.gmra.mxu0 %v2077
      %v2343 = vpop.f32.mrf.mxu0
      %v2344 = vadd.f32 0.0, %v2343
      %v2345 = vpop.f32.mrf.mxu0
      %v2346 = vadd.f32 0.0, %v2345
      %2347 = vmatmul.bf16.gmra.mxu0 %v2078
      %v2348 = vpop.f32.mrf.mxu0
      %v2349 = vadd.f32 0.0, %v2348
      %v2350 = vpop.f32.mrf.mxu0
      %v2351 = vadd.f32 0.0, %v2350
      %2352 = vmatmul.bf16.gmra.mxu0 %v2079
      %v2353 = vpop.f32.mrf.mxu0
      %v2354 = vadd.f32 0.0, %v2353
      %v2355 = vpop.f32.mrf.mxu0
      %2356 = vdwg.mxu0
      %2357 = vmatpush.bf16.msra.mxu0 %v2240
      %2358 = vmatpush.bf16.msra.mxu0 %v2236
      %2359 = vmatpush.bf16.msra.mxu0 %v2232
      %2360 = vmatpush.bf16.msra.mxu0 %v2228
      %2361 = vmatpush.bf16.msra.mxu0 %v2224
      %2362 = vmatpush.bf16.msra.mxu0 %v2220
      %2363 = vmatpush.bf16.msra.mxu0 %v2216
      %2364 = vmatpush.bf16.msra.mxu0 %v2212
      %2365 = vmatmul.bf16.gmra.mxu0 %v2076
      %v2366 = vpop.f32.mrf.mxu0
      %v2367 = vadd.f32 0.0, %v2366
      %v2368 = vpop.f32.mrf.mxu0
      %v2369 = vadd.f32 0.0, %v2368
      %2370 = vmatmul.bf16.gmra.mxu0 %v2077
      %v2371 = vpop.f32.mrf.mxu0
      %v2372 = vadd.f32 0.0, %v2371
      %v2373 = vpop.f32.mrf.mxu0
      %v2374 = vadd.f32 0.0, %v2373
      %2375 = vmatmul.bf16.gmra.mxu0 %v2078
      %v2376 = vpop.f32.mrf.mxu0
      %v2377 = vadd.f32 0.0, %v2376
      %v2378 = vpop.f32.mrf.mxu0
      %v2379 = vadd.f32 0.0, %v2378
      %2380 = vmatmul.bf16.gmra.mxu0 %v2079
      %v2381 = vpop.f32.mrf.mxu0
      %v2382 = vadd.f32 0.0, %v2381
      %v2383 = vpop.f32.mrf.mxu0
      %2384 = vdwg.mxu0
      %v2385 = vadd.f32 %v2041, %v2283
      %v2386 = vadd.f32 %v2042, %v2311
      %v2387 = vadd.f32 %v2043, %v2339
      %v2388 = vadd.f32 %v2044, %v2367
      %v2389 = vadd.f32 %v2045, %v2285
      %v2390 = vadd.f32 %v2046, %v2313
      %v2391 = vadd.f32 %v2047, %v2341
      %v2392 = vadd.f32 %v2048, %v2369
      %v2393 = vadd.f32 %v2049, %v2288
      %v2394 = vadd.f32 %v2050, %v2316
      %v2395 = vadd.f32 %v2051, %v2344
      %v2396 = vadd.f32 %v2052, %v2372
      %v2397 = vadd.f32 %v2053, %v2290
      %v2398 = vadd.f32 %v2054, %v2318
      %v2399 = vadd.f32 %v2055, %v2346
      %v2400 = vadd.f32 %v2056, %v2374
      %v2401 = vadd.f32 %v2057, %v2293
      %v2402 = vadd.f32 %v2058, %v2321
      %v2403 = vadd.f32 %v2059, %v2349
      %v2404 = vadd.f32 %v2060, %v2377
      %v2405 = vadd.f32 %v2061, %v2295
      %v2406 = vadd.f32 %v2062, %v2323
      %v2407 = vadd.f32 %v2063, %v2351
      %v2408 = vadd.f32 %v2064, %v2379
      %v2409 = vadd.f32 %v2065, %v2298
      %v2410 = vadd.f32 %v2066, %v2326
      %v2411 = vadd.f32 %v2067, %v2354
      %v2412 = vadd.f32 %v2068, %v2382
      %v2413 = vld [vmem:[#allocation2 + $0xc] sm:$0xff]
      %v2414 = vld [vmem:[#allocation2 + $0x14] sm:$0xff]
      %v2415 = vld [vmem:[#allocation2 + $0x1c] sm:$0xff]
      %v2416 = vld [vmem:[#allocation2 + $0x24] sm:$0xff]
      %v2417 = vld [vmem:[#allocation2 + $0x2c] sm:$0xff]
      %v2418 = vld [vmem:[#allocation2 + $0x34] sm:$0xff]
      %v2419 = vld [vmem:[#allocation2 + $0x3c] sm:$0xff]
      %v2420 = vpack.c.bf16 %v2414, %v2413
      %v2421 = vpack.c.bf16 %v2416, %v2415
      %v2422 = vpack.c.bf16 %v2418, %v2417
      %v2423 = vpack.c.bf16 %v2419, %v2419
      %s2424 = scalar_lea.vmem %s1, 1536
      %v2425 = vld [vmem:[%s2424] sm:$0xff]
      %v2426 = vld [vmem:[%s2424 + $0x8] sm:$0xff]
      %v2427 = vld [vmem:[%s2424 + $0x10] sm:$0xff]
      %v2428 = vld [vmem:[%s2424 + $0x18] sm:$0xff]
      %v2429 = vld [vmem:[%s2424 + $0x20] sm:$0xff]
      %v2430 = vld [vmem:[%s2424 + $0x28] sm:$0xff]
      %v2431 = vld [vmem:[%s2424 + $0x30] sm:$0xff]
      %v2432 = vld [vmem:[%s2424 + $0x38] sm:$0xff]
      %v2433 = vld [vmem:[%s2424 + $0x40] sm:$0xff]
      %v2434 = vld [vmem:[%s2424 + $0x48] sm:$0xff]
      %v2435 = vld [vmem:[%s2424 + $0x50] sm:$0xff]
      %v2436 = vld [vmem:[%s2424 + $0x58] sm:$0xff]
      %v2437 = vld [vmem:[%s2424 + $0x60] sm:$0xff]
      %v2438 = vld [vmem:[%s2424 + $0x68] sm:$0xff]
      %v2439 = vld [vmem:[%s2424 + $0x70] sm:$0xff]
      %v2440 = vld [vmem:[%s2424 + $0x78] sm:$0xff]
      %v2441 = vld [vmem:[%s2424 + $0x80] sm:$0xff]
      %v2442 = vld [vmem:[%s2424 + $0x88] sm:$0xff]
      %v2443 = vld [vmem:[%s2424 + $0x90] sm:$0xff]
      %v2444 = vld [vmem:[%s2424 + $0x98] sm:$0xff]
      %v2445 = vld [vmem:[%s2424 + $0xa0] sm:$0xff]
      %v2446 = vld [vmem:[%s2424 + $0xa8] sm:$0xff]
      %v2447 = vld [vmem:[%s2424 + $0xb0] sm:$0xff]
      %v2448 = vld [vmem:[%s2424 + $0xb8] sm:$0xff]
      %v2449 = vld [vmem:[%s2424 + $0xc0] sm:$0xff]
      %v2450 = vld [vmem:[%s2424 + $0xc8] sm:$0xff]
      %v2451 = vld [vmem:[%s2424 + $0xd0] sm:$0xff]
      %v2452 = vld [vmem:[%s2424 + $0xd8] sm:$0xff]
      %v2453 = vld [vmem:[%s2424 + $0xe0] sm:$0xff]
      %v2454 = vld [vmem:[%s2424 + $0xe8] sm:$0xff]
      %v2455 = vld [vmem:[%s2424 + $0xf0] sm:$0xff]
      %v2456 = vld [vmem:[%s2424 + $0xf8] sm:$0xff]
      %v2489 = vunpack.c.l.b16 %v2425
      %v2490 = vunpack.c.h.b16 %v2425
      %v2491 = vunpack.c.l.b16 %v2426
      %v2492 = vunpack.c.h.b16 %v2426
      %v2493 = vunpack.c.l.b16 %v2427
      %v2494 = vunpack.c.h.b16 %v2427
      %v2495 = vunpack.c.l.b16 %v2428
      %v2496 = vunpack.c.h.b16 %v2428
      %v2497 = vunpack.c.l.b16 %v2429
      %v2498 = vunpack.c.h.b16 %v2429
      %v2499 = vunpack.c.l.b16 %v2430
      %v2500 = vunpack.c.h.b16 %v2430
      %v2501 = vunpack.c.l.b16 %v2431
      %v2502 = vunpack.c.h.b16 %v2431
      %v2503 = vunpack.c.l.b16 %v2432
      %v2504 = vunpack.c.h.b16 %v2432
      %v2505 = vunpack.c.l.b16 %v2433
      %v2506 = vunpack.c.h.b16 %v2433
      %v2507 = vunpack.c.l.b16 %v2434
      %v2508 = vunpack.c.h.b16 %v2434
      %v2509 = vunpack.c.l.b16 %v2435
      %v2510 = vunpack.c.h.b16 %v2435
      %v2511 = vunpack.c.l.b16 %v2436
      %v2512 = vunpack.c.h.b16 %v2436
      %v2513 = vunpack.c.l.b16 %v2437
      %v2514 = vunpack.c.h.b16 %v2437
      %v2515 = vunpack.c.l.b16 %v2438
      %v2516 = vunpack.c.h.b16 %v2438
      %v2517 = vunpack.c.l.b16 %v2439
      %v2518 = vunpack.c.h.b16 %v2439
      %v2519 = vunpack.c.l.b16 %v2440
      %v2520 = vunpack.c.h.b16 %v2440
      %v2521 = vunpack.c.l.b16 %v2441
      %v2522 = vunpack.c.h.b16 %v2441
      %v2523 = vunpack.c.l.b16 %v2442
      %v2524 = vunpack.c.h.b16 %v2442
      %v2525 = vunpack.c.l.b16 %v2443
      %v2526 = vunpack.c.h.b16 %v2443
      %v2527 = vunpack.c.l.b16 %v2444
      %v2528 = vunpack.c.h.b16 %v2444
      %v2529 = vunpack.c.l.b16 %v2445
      %v2530 = vunpack.c.h.b16 %v2445
      %v2531 = vunpack.c.l.b16 %v2446
      %v2532 = vunpack.c.h.b16 %v2446
      %v2533 = vunpack.c.l.b16 %v2447
      %v2534 = vunpack.c.h.b16 %v2447
      %v2535 = vunpack.c.l.b16 %v2448
      %v2536 = vunpack.c.h.b16 %v2448
      %v2537 = vunpack.c.l.b16 %v2449
      %v2538 = vunpack.c.h.b16 %v2449
      %v2539 = vunpack.c.l.b16 %v2450
      %v2540 = vunpack.c.h.b16 %v2450
      %v2541 = vunpack.c.l.b16 %v2451
      %v2542 = vunpack.c.h.b16 %v2451
      %v2543 = vunpack.c.l.b16 %v2452
      %v2544 = vunpack.c.h.b16 %v2452
      %v2545 = vunpack.c.l.b16 %v2453
      %v2546 = vunpack.c.h.b16 %v2453
      %v2547 = vunpack.c.l.b16 %v2454
      %v2548 = vunpack.c.h.b16 %v2454
      %v2549 = vunpack.c.l.b16 %v2455
      %v2550 = vunpack.c.h.b16 %v2455
      %v2551 = vunpack.c.l.b16 %v2456
      %v2552 = vunpack.c.h.b16 %v2456
      %v2553 = vpack.c.b16 %v2493, %v2489
      %v2554 = vpack.c.b16 %v2494, %v2490
      %v2555 = vpack.c.b16 %v2495, %v2491
      %v2556 = vpack.c.b16 %v2496, %v2492
      %v2557 = vpack.c.b16 %v2501, %v2497
      %v2558 = vpack.c.b16 %v2502, %v2498
      %v2559 = vpack.c.b16 %v2503, %v2499
      %v2560 = vpack.c.b16 %v2504, %v2500
      %v2561 = vpack.c.b16 %v2509, %v2505
      %v2562 = vpack.c.b16 %v2510, %v2506
      %v2563 = vpack.c.b16 %v2511, %v2507
      %v2564 = vpack.c.b16 %v2512, %v2508
      %v2565 = vpack.c.b16 %v2517, %v2513
      %v2566 = vpack.c.b16 %v2518, %v2514
      %v2567 = vpack.c.b16 %v2519, %v2515
      %v2568 = vpack.c.b16 %v2520, %v2516
      %v2569 = vpack.c.b16 %v2525, %v2521
      %v2570 = vpack.c.b16 %v2526, %v2522
      %v2571 = vpack.c.b16 %v2527, %v2523
      %v2572 = vpack.c.b16 %v2528, %v2524
      %v2573 = vpack.c.b16 %v2533, %v2529
      %v2574 = vpack.c.b16 %v2534, %v2530
      %v2575 = vpack.c.b16 %v2535, %v2531
      %v2576 = vpack.c.b16 %v2536, %v2532
      %v2577 = vpack.c.b16 %v2541, %v2537
      %v2578 = vpack.c.b16 %v2542, %v2538
      %v2579 = vpack.c.b16 %v2543, %v2539
      %v2580 = vpack.c.b16 %v2544, %v2540
      %v2581 = vpack.c.b16 %v2549, %v2545
      %v2582 = vpack.c.b16 %v2550, %v2546
      %v2583 = vpack.c.b16 %v2551, %v2547
      %v2584 = vpack.c.b16 %v2552, %v2548
      %2617 = vmatpush.bf16.msra.mxu0 %v2581
      %2618 = vmatpush.bf16.msra.mxu0 %v2577
      %2619 = vmatpush.bf16.msra.mxu0 %v2573
      %2620 = vmatpush.bf16.msra.mxu0 %v2569
      %2621 = vmatpush.bf16.msra.mxu0 %v2565
      %2622 = vmatpush.bf16.msra.mxu0 %v2561
      %2623 = vmatpush.bf16.msra.mxu0 %v2557
      %2624 = vmatpush.bf16.msra.mxu0 %v2553
      %2625 = vmatmul.bf16.gmra.mxu0 %v2420
      %v2626 = vpop.f32.mrf.mxu0
      %v2627 = vadd.f32 0.0, %v2626
      %v2628 = vpop.f32.mrf.mxu0
      %v2629 = vadd.f32 0.0, %v2628
      %2630 = vmatmul.bf16.gmra.mxu0 %v2421
      %v2631 = vpop.f32.mrf.mxu0
      %v2632 = vadd.f32 0.0, %v2631
      %v2633 = vpop.f32.mrf.mxu0
      %v2634 = vadd.f32 0.0, %v2633
      %2635 = vmatmul.bf16.gmra.mxu0 %v2422
      %v2636 = vpop.f32.mrf.mxu0
      %v2637 = vadd.f32 0.0, %v2636
      %v2638 = vpop.f32.mrf.mxu0
      %v2639 = vadd.f32 0.0, %v2638
      %2640 = vmatmul.bf16.gmra.mxu0 %v2423
      %v2641 = vpop.f32.mrf.mxu0
      %v2642 = vadd.f32 0.0, %v2641
      %v2643 = vpop.f32.mrf.mxu0
      %2644 = vdwg.mxu0
      %2645 = vmatpush.bf16.msra.mxu0 %v2582
      %2646 = vmatpush.bf16.msra.mxu0 %v2578
      %2647 = vmatpush.bf16.msra.mxu0 %v2574
      %2648 = vmatpush.bf16.msra.mxu0 %v2570
      %2649 = vmatpush.bf16.msra.mxu0 %v2566
      %2650 = vmatpush.bf16.msra.mxu0 %v2562
      %2651 = vmatpush.bf16.msra.mxu0 %v2558
      %2652 = vmatpush.bf16.msra.mxu0 %v2554
      %2653 = vmatmul.bf16.gmra.mxu0 %v2420
      %v2654 = vpop.f32.mrf.mxu0
      %v2655 = vadd.f32 0.0, %v2654
      %v2656 = vpop.f32.mrf.mxu0
      %v2657 = vadd.f32 0.0, %v2656
      %2658 = vmatmul.bf16.gmra.mxu0 %v2421
      %v2659 = vpop.f32.mrf.mxu0
      %v2660 = vadd.f32 0.0, %v2659
      %v2661 = vpop.f32.mrf.mxu0
      %v2662 = vadd.f32 0.0, %v2661
      %2663 = vmatmul.bf16.gmra.mxu0 %v2422
      %v2664 = vpop.f32.mrf.mxu0
      %v2665 = vadd.f32 0.0, %v2664
      %v2666 = vpop.f32.mrf.mxu0
      %v2667 = vadd.f32 0.0, %v2666
      %2668 = vmatmul.bf16.gmra.mxu0 %v2423
      %v2669 = vpop.f32.mrf.mxu0
      %v2670 = vadd.f32 0.0, %v2669
      %v2671 = vpop.f32.mrf.mxu0
      %2672 = vdwg.mxu0
      %2673 = vmatpush.bf16.msra.mxu0 %v2583
      %2674 = vmatpush.bf16.msra.mxu0 %v2579
      %2675 = vmatpush.bf16.msra.mxu0 %v2575
      %2676 = vmatpush.bf16.msra.mxu0 %v2571
      %2677 = vmatpush.bf16.msra.mxu0 %v2567
      %2678 = vmatpush.bf16.msra.mxu0 %v2563
      %2679 = vmatpush.bf16.msra.mxu0 %v2559
      %2680 = vmatpush.bf16.msra.mxu0 %v2555
      %2681 = vmatmul.bf16.gmra.mxu0 %v2420
      %v2682 = vpop.f32.mrf.mxu0
      %v2683 = vadd.f32 0.0, %v2682
      %v2684 = vpop.f32.mrf.mxu0
      %v2685 = vadd.f32 0.0, %v2684
      %2686 = vmatmul.bf16.gmra.mxu0 %v2421
      %v2687 = vpop.f32.mrf.mxu0
      %v2688 = vadd.f32 0.0, %v2687
      %v2689 = vpop.f32.mrf.mxu0
      %v2690 = vadd.f32 0.0, %v2689
      %2691 = vmatmul.bf16.gmra.mxu0 %v2422
      %v2692 = vpop.f32.mrf.mxu0
      %v2693 = vadd.f32 0.0, %v2692
      %v2694 = vpop.f32.mrf.mxu0
      %v2695 = vadd.f32 0.0, %v2694
      %2696 = vmatmul.bf16.gmra.mxu0 %v2423
      %v2697 = vpop.f32.mrf.mxu0
      %v2698 = vadd.f32 0.0, %v2697
      %v2699 = vpop.f32.mrf.mxu0
      %2700 = vdwg.mxu0
      %2701 = vmatpush.bf16.msra.mxu0 %v2584
      %2702 = vmatpush.bf16.msra.mxu0 %v2580
      %2703 = vmatpush.bf16.msra.mxu0 %v2576
      %2704 = vmatpush.bf16.msra.mxu0 %v2572
      %2705 = vmatpush.bf16.msra.mxu0 %v2568
      %2706 = vmatpush.bf16.msra.mxu0 %v2564
      %2707 = vmatpush.bf16.msra.mxu0 %v2560
      %2708 = vmatpush.bf16.msra.mxu0 %v2556
      %2709 = vmatmul.bf16.gmra.mxu0 %v2420
      %v2710 = vpop.f32.mrf.mxu0
      %v2711 = vadd.f32 0.0, %v2710
      %v2712 = vpop.f32.mrf.mxu0
      %v2713 = vadd.f32 0.0, %v2712
      %2714 = vmatmul.bf16.gmra.mxu0 %v2421
      %v2715 = vpop.f32.mrf.mxu0
      %v2716 = vadd.f32 0.0, %v2715
      %v2717 = vpop.f32.mrf.mxu0
      %v2718 = vadd.f32 0.0, %v2717
      %2719 = vmatmul.bf16.gmra.mxu0 %v2422
      %v2720 = vpop.f32.mrf.mxu0
      %v2721 = vadd.f32 0.0, %v2720
      %v2722 = vpop.f32.mrf.mxu0
      %v2723 = vadd.f32 0.0, %v2722
      %2724 = vmatmul.bf16.gmra.mxu0 %v2423
      %v2725 = vpop.f32.mrf.mxu0
      %v2726 = vadd.f32 0.0, %v2725
      %v2727 = vpop.f32.mrf.mxu0
      %2728 = vdwg.mxu0
      %v2729 = vadd.f32 %v2385, %v2627
      %v2730 = vadd.f32 %v2386, %v2655
      %v2731 = vadd.f32 %v2387, %v2683
      %v2732 = vadd.f32 %v2388, %v2711
      %v2733 = vadd.f32 %v2389, %v2629
      %v2734 = vadd.f32 %v2390, %v2657
      %v2735 = vadd.f32 %v2391, %v2685
      %v2736 = vadd.f32 %v2392, %v2713
      %v2737 = vadd.f32 %v2393, %v2632
      %v2738 = vadd.f32 %v2394, %v2660
      %v2739 = vadd.f32 %v2395, %v2688
      %v2740 = vadd.f32 %v2396, %v2716
      %v2741 = vadd.f32 %v2397, %v2634
      %v2742 = vadd.f32 %v2398, %v2662
      %v2743 = vadd.f32 %v2399, %v2690
      %v2744 = vadd.f32 %v2400, %v2718
      %v2745 = vadd.f32 %v2401, %v2637
      %v2746 = vadd.f32 %v2402, %v2665
      %v2747 = vadd.f32 %v2403, %v2693
      %v2748 = vadd.f32 %v2404, %v2721
      %v2749 = vadd.f32 %v2405, %v2639
      %v2750 = vadd.f32 %v2406, %v2667
      %v2751 = vadd.f32 %v2407, %v2695
      %v2752 = vadd.f32 %v2408, %v2723
      %v2753 = vadd.f32 %v2409, %v2642
      %v2754 = vadd.f32 %v2410, %v2670
      %v2755 = vadd.f32 %v2411, %v2698
      %v2756 = vadd.f32 %v2412, %v2726
      %v2757 = vld [vmem:[#allocation2 + $0xd] sm:$0xff]
      %v2758 = vld [vmem:[#allocation2 + $0x15] sm:$0xff]
      %v2759 = vld [vmem:[#allocation2 + $0x1d] sm:$0xff]
      %v2760 = vld [vmem:[#allocation2 + $0x25] sm:$0xff]
      %v2761 = vld [vmem:[#allocation2 + $0x2d] sm:$0xff]
      %v2762 = vld [vmem:[#allocation2 + $0x35] sm:$0xff]
      %v2763 = vld [vmem:[#allocation2 + $0x3d] sm:$0xff]
      %v2764 = vpack.c.bf16 %v2758, %v2757
      %v2765 = vpack.c.bf16 %v2760, %v2759
      %v2766 = vpack.c.bf16 %v2762, %v2761
      %v2767 = vpack.c.bf16 %v2763, %v2763
      %s2768 = scalar_lea.vmem %s1, 1792
      %v2769 = vld [vmem:[%s2768] sm:$0xff]
      %v2770 = vld [vmem:[%s2768 + $0x8] sm:$0xff]
      %v2771 = vld [vmem:[%s2768 + $0x10] sm:$0xff]
      %v2772 = vld [vmem:[%s2768 + $0x18] sm:$0xff]
      %v2773 = vld [vmem:[%s2768 + $0x20] sm:$0xff]
      %v2774 = vld [vmem:[%s2768 + $0x28] sm:$0xff]
      %v2775 = vld [vmem:[%s2768 + $0x30] sm:$0xff]
      %v2776 = vld [vmem:[%s2768 + $0x38] sm:$0xff]
      %v2777 = vld [vmem:[%s2768 + $0x40] sm:$0xff]
      %v2778 = vld [vmem:[%s2768 + $0x48] sm:$0xff]
      %v2779 = vld [vmem:[%s2768 + $0x50] sm:$0xff]
      %v2780 = vld [vmem:[%s2768 + $0x58] sm:$0xff]
      %v2781 = vld [vmem:[%s2768 + $0x60] sm:$0xff]
      %v2782 = vld [vmem:[%s2768 + $0x68] sm:$0xff]
      %v2783 = vld [vmem:[%s2768 + $0x70] sm:$0xff]
      %v2784 = vld [vmem:[%s2768 + $0x78] sm:$0xff]
      %v2785 = vld [vmem:[%s2768 + $0x80] sm:$0xff]
      %v2786 = vld [vmem:[%s2768 + $0x88] sm:$0xff]
      %v2787 = vld [vmem:[%s2768 + $0x90] sm:$0xff]
      %v2788 = vld [vmem:[%s2768 + $0x98] sm:$0xff]
      %v2789 = vld [vmem:[%s2768 + $0xa0] sm:$0xff]
      %v2790 = vld [vmem:[%s2768 + $0xa8] sm:$0xff]
      %v2791 = vld [vmem:[%s2768 + $0xb0] sm:$0xff]
      %v2792 = vld [vmem:[%s2768 + $0xb8] sm:$0xff]
      %v2793 = vld [vmem:[%s2768 + $0xc0] sm:$0xff]
      %v2794 = vld [vmem:[%s2768 + $0xc8] sm:$0xff]
      %v2795 = vld [vmem:[%s2768 + $0xd0] sm:$0xff]
      %v2796 = vld [vmem:[%s2768 + $0xd8] sm:$0xff]
      %v2797 = vld [vmem:[%s2768 + $0xe0] sm:$0xff]
      %v2798 = vld [vmem:[%s2768 + $0xe8] sm:$0xff]
      %v2799 = vld [vmem:[%s2768 + $0xf0] sm:$0xff]
      %v2800 = vld [vmem:[%s2768 + $0xf8] sm:$0xff]
      %v2833 = vunpack.c.l.b16 %v2769
      %v2834 = vunpack.c.h.b16 %v2769
      %v2835 = vunpack.c.l.b16 %v2770
      %v2836 = vunpack.c.h.b16 %v2770
      %v2837 = vunpack.c.l.b16 %v2771
      %v2838 = vunpack.c.h.b16 %v2771
      %v2839 = vunpack.c.l.b16 %v2772
      %v2840 = vunpack.c.h.b16 %v2772
      %v2841 = vunpack.c.l.b16 %v2773
      %v2842 = vunpack.c.h.b16 %v2773
      %v2843 = vunpack.c.l.b16 %v2774
      %v2844 = vunpack.c.h.b16 %v2774
      %v2845 = vunpack.c.l.b16 %v2775
      %v2846 = vunpack.c.h.b16 %v2775
      %v2847 = vunpack.c.l.b16 %v2776
      %v2848 = vunpack.c.h.b16 %v2776
      %v2849 = vunpack.c.l.b16 %v2777
      %v2850 = vunpack.c.h.b16 %v2777
      %v2851 = vunpack.c.l.b16 %v2778
      %v2852 = vunpack.c.h.b16 %v2778
      %v2853 = vunpack.c.l.b16 %v2779
      %v2854 = vunpack.c.h.b16 %v2779
      %v2855 = vunpack.c.l.b16 %v2780
      %v2856 = vunpack.c.h.b16 %v2780
      %v2857 = vunpack.c.l.b16 %v2781
      %v2858 = vunpack.c.h.b16 %v2781
      %v2859 = vunpack.c.l.b16 %v2782
      %v2860 = vunpack.c.h.b16 %v2782
      %v2861 = vunpack.c.l.b16 %v2783
      %v2862 = vunpack.c.h.b16 %v2783
      %v2863 = vunpack.c.l.b16 %v2784
      %v2864 = vunpack.c.h.b16 %v2784
      %v2865 = vunpack.c.l.b16 %v2785
      %v2866 = vunpack.c.h.b16 %v2785
      %v2867 = vunpack.c.l.b16 %v2786
      %v2868 = vunpack.c.h.b16 %v2786
      %v2869 = vunpack.c.l.b16 %v2787
      %v2870 = vunpack.c.h.b16 %v2787
      %v2871 = vunpack.c.l.b16 %v2788
      %v2872 = vunpack.c.h.b16 %v2788
      %v2873 = vunpack.c.l.b16 %v2789
      %v2874 = vunpack.c.h.b16 %v2789
      %v2875 = vunpack.c.l.b16 %v2790
      %v2876 = vunpack.c.h.b16 %v2790
      %v2877 = vunpack.c.l.b16 %v2791
      %v2878 = vunpack.c.h.b16 %v2791
      %v2879 = vunpack.c.l.b16 %v2792
      %v2880 = vunpack.c.h.b16 %v2792
      %v2881 = vunpack.c.l.b16 %v2793
      %v2882 = vunpack.c.h.b16 %v2793
      %v2883 = vunpack.c.l.b16 %v2794
      %v2884 = vunpack.c.h.b16 %v2794
      %v2885 = vunpack.c.l.b16 %v2795
      %v2886 = vunpack.c.h.b16 %v2795
      %v2887 = vunpack.c.l.b16 %v2796
      %v2888 = vunpack.c.h.b16 %v2796
      %v2889 = vunpack.c.l.b16 %v2797
      %v2890 = vunpack.c.h.b16 %v2797
      %v2891 = vunpack.c.l.b16 %v2798
      %v2892 = vunpack.c.h.b16 %v2798
      %v2893 = vunpack.c.l.b16 %v2799
      %v2894 = vunpack.c.h.b16 %v2799
      %v2895 = vunpack.c.l.b16 %v2800
      %v2896 = vunpack.c.h.b16 %v2800
      %v2897 = vpack.c.b16 %v2837, %v2833
      %v2898 = vpack.c.b16 %v2838, %v2834
      %v2899 = vpack.c.b16 %v2839, %v2835
      %v2900 = vpack.c.b16 %v2840, %v2836
      %v2901 = vpack.c.b16 %v2845, %v2841
      %v2902 = vpack.c.b16 %v2846, %v2842
      %v2903 = vpack.c.b16 %v2847, %v2843
      %v2904 = vpack.c.b16 %v2848, %v2844
      %v2905 = vpack.c.b16 %v2853, %v2849
      %v2906 = vpack.c.b16 %v2854, %v2850
      %v2907 = vpack.c.b16 %v2855, %v2851
      %v2908 = vpack.c.b16 %v2856, %v2852
      %v2909 = vpack.c.b16 %v2861, %v2857
      %v2910 = vpack.c.b16 %v2862, %v2858
      %v2911 = vpack.c.b16 %v2863, %v2859
      %v2912 = vpack.c.b16 %v2864, %v2860
      %v2913 = vpack.c.b16 %v2869, %v2865
      %v2914 = vpack.c.b16 %v2870, %v2866
      %v2915 = vpack.c.b16 %v2871, %v2867
      %v2916 = vpack.c.b16 %v2872, %v2868
      %v2917 = vpack.c.b16 %v2877, %v2873
      %v2918 = vpack.c.b16 %v2878, %v2874
      %v2919 = vpack.c.b16 %v2879, %v2875
      %v2920 = vpack.c.b16 %v2880, %v2876
      %v2921 = vpack.c.b16 %v2885, %v2881
      %v2922 = vpack.c.b16 %v2886, %v2882
      %v2923 = vpack.c.b16 %v2887, %v2883
      %v2924 = vpack.c.b16 %v2888, %v2884
      %v2925 = vpack.c.b16 %v2893, %v2889
      %v2926 = vpack.c.b16 %v2894, %v2890
      %v2927 = vpack.c.b16 %v2895, %v2891
      %v2928 = vpack.c.b16 %v2896, %v2892
      %2961 = vmatpush.bf16.msra.mxu0 %v2925
      %2962 = vmatpush.bf16.msra.mxu0 %v2921
      %2963 = vmatpush.bf16.msra.mxu0 %v2917
      %2964 = vmatpush.bf16.msra.mxu0 %v2913
      %2965 = vmatpush.bf16.msra.mxu0 %v2909
      %2966 = vmatpush.bf16.msra.mxu0 %v2905
      %2967 = vmatpush.bf16.msra.mxu0 %v2901
      %2968 = vmatpush.bf16.msra.mxu0 %v2897
      %2969 = vmatmul.bf16.gmra.mxu0 %v2764
      %v2970 = vpop.f32.mrf.mxu0
      %v2971 = vadd.f32 0.0, %v2970
      %v2972 = vpop.f32.mrf.mxu0
      %v2973 = vadd.f32 0.0, %v2972
      %2974 = vmatmul.bf16.gmra.mxu0 %v2765
      %v2975 = vpop.f32.mrf.mxu0
      %v2976 = vadd.f32 0.0, %v2975
      %v2977 = vpop.f32.mrf.mxu0
      %v2978 = vadd.f32 0.0, %v2977
      %2979 = vmatmul.bf16.gmra.mxu0 %v2766
      %v2980 = vpop.f32.mrf.mxu0
      %v2981 = vadd.f32 0.0, %v2980
      %v2982 = vpop.f32.mrf.mxu0
      %v2983 = vadd.f32 0.0, %v2982
      %2984 = vmatmul.bf16.gmra.mxu0 %v2767
      %v2985 = vpop.f32.mrf.mxu0
      %v2986 = vadd.f32 0.0, %v2985
      %v2987 = vpop.f32.mrf.mxu0
      %2988 = vdwg.mxu0
      %2989 = vmatpush.bf16.msra.mxu0 %v2926
      %2990 = vmatpush.bf16.msra.mxu0 %v2922
      %2991 = vmatpush.bf16.msra.mxu0 %v2918
      %2992 = vmatpush.bf16.msra.mxu0 %v2914
      %2993 = vmatpush.bf16.msra.mxu0 %v2910
      %2994 = vmatpush.bf16.msra.mxu0 %v2906
      %2995 = vmatpush.bf16.msra.mxu0 %v2902
      %2996 = vmatpush.bf16.msra.mxu0 %v2898
      %2997 = vmatmul.bf16.gmra.mxu0 %v2764
      %v2998 = vpop.f32.mrf.mxu0
      %v2999 = vadd.f32 0.0, %v2998
      %v3000 = vpop.f32.mrf.mxu0
      %v3001 = vadd.f32 0.0, %v3000
      %3002 = vmatmul.bf16.gmra.mxu0 %v2765
      %v3003 = vpop.f32.mrf.mxu0
      %v3004 = vadd.f32 0.0, %v3003
      %v3005 = vpop.f32.mrf.mxu0
      %v3006 = vadd.f32 0.0, %v3005
      %3007 = vmatmul.bf16.gmra.mxu0 %v2766
      %v3008 = vpop.f32.mrf.mxu0
      %v3009 = vadd.f32 0.0, %v3008
      %v3010 = vpop.f32.mrf.mxu0
      %v3011 = vadd.f32 0.0, %v3010
      %3012 = vmatmul.bf16.gmra.mxu0 %v2767
      %v3013 = vpop.f32.mrf.mxu0
      %v3014 = vadd.f32 0.0, %v3013
      %v3015 = vpop.f32.mrf.mxu0
      %3016 = vdwg.mxu0
      %3017 = vmatpush.bf16.msra.mxu0 %v2927
      %3018 = vmatpush.bf16.msra.mxu0 %v2923
      %3019 = vmatpush.bf16.msra.mxu0 %v2919
      %3020 = vmatpush.bf16.msra.mxu0 %v2915
      %3021 = vmatpush.bf16.msra.mxu0 %v2911
      %3022 = vmatpush.bf16.msra.mxu0 %v2907
      %3023 = vmatpush.bf16.msra.mxu0 %v2903
      %3024 = vmatpush.bf16.msra.mxu0 %v2899
      %3025 = vmatmul.bf16.gmra.mxu0 %v2764
      %v3026 = vpop.f32.mrf.mxu0
      %v3027 = vadd.f32 0.0, %v3026
      %v3028 = vpop.f32.mrf.mxu0
      %v3029 = vadd.f32 0.0, %v3028
      %3030 = vmatmul.bf16.gmra.mxu0 %v2765
      %v3031 = vpop.f32.mrf.mxu0
      %v3032 = vadd.f32 0.0, %v3031
      %v3033 = vpop.f32.mrf.mxu0
      %v3034 = vadd.f32 0.0, %v3033
      %3035 = vmatmul.bf16.gmra.mxu0 %v2766
      %v3036 = vpop.f32.mrf.mxu0
      %v3037 = vadd.f32 0.0, %v3036
      %v3038 = vpop.f32.mrf.mxu0
      %v3039 = vadd.f32 0.0, %v3038
      %3040 = vmatmul.bf16.gmra.mxu0 %v2767
      %v3041 = vpop.f32.mrf.mxu0
      %v3042 = vadd.f32 0.0, %v3041
      %v3043 = vpop.f32.mrf.mxu0
      %3044 = vdwg.mxu0
      %3045 = vmatpush.bf16.msra.mxu0 %v2928
      %3046 = vmatpush.bf16.msra.mxu0 %v2924
      %3047 = vmatpush.bf16.msra.mxu0 %v2920
      %3048 = vmatpush.bf16.msra.mxu0 %v2916
      %3049 = vmatpush.bf16.msra.mxu0 %v2912
      %3050 = vmatpush.bf16.msra.mxu0 %v2908
      %3051 = vmatpush.bf16.msra.mxu0 %v2904
      %3052 = vmatpush.bf16.msra.mxu0 %v2900
      %3053 = vmatmul.bf16.gmra.mxu0 %v2764
      %v3054 = vpop.f32.mrf.mxu0
      %v3055 = vadd.f32 0.0, %v3054
      %v3056 = vpop.f32.mrf.mxu0
      %v3057 = vadd.f32 0.0, %v3056
      %3058 = vmatmul.bf16.gmra.mxu0 %v2765
      %v3059 = vpop.f32.mrf.mxu0
      %v3060 = vadd.f32 0.0, %v3059
      %v3061 = vpop.f32.mrf.mxu0
      %v3062 = vadd.f32 0.0, %v3061
      %3063 = vmatmul.bf16.gmra.mxu0 %v2766
      %v3064 = vpop.f32.mrf.mxu0
      %v3065 = vadd.f32 0.0, %v3064
      %v3066 = vpop.f32.mrf.mxu0
      %v3067 = vadd.f32 0.0, %v3066
      %3068 = vmatmul.bf16.gmra.mxu0 %v2767
      %v3069 = vpop.f32.mrf.mxu0
      %v3070 = vadd.f32 0.0, %v3069
      %v3071 = vpop.f32.mrf.mxu0
      %3072 = vdwg.mxu0
      %v3073 = vadd.f32 %v2729, %v2971
      %v3074 = vadd.f32 %v2730, %v2999
      %v3075 = vadd.f32 %v2731, %v3027
      %v3076 = vadd.f32 %v2732, %v3055
      %v3077 = vadd.f32 %v2733, %v2973
      %v3078 = vadd.f32 %v2734, %v3001
      %v3079 = vadd.f32 %v2735, %v3029
      %v3080 = vadd.f32 %v2736, %v3057
      %v3081 = vadd.f32 %v2737, %v2976
      %v3082 = vadd.f32 %v2738, %v3004
      %v3083 = vadd.f32 %v2739, %v3032
      %v3084 = vadd.f32 %v2740, %v3060
      %v3085 = vadd.f32 %v2741, %v2978
      %v3086 = vadd.f32 %v2742, %v3006
      %v3087 = vadd.f32 %v2743, %v3034
      %v3088 = vadd.f32 %v2744, %v3062
      %v3089 = vadd.f32 %v2745, %v2981
      %v3090 = vadd.f32 %v2746, %v3009
      %v3091 = vadd.f32 %v2747, %v3037
      %v3092 = vadd.f32 %v2748, %v3065
      %v3093 = vadd.f32 %v2749, %v2983
      %v3094 = vadd.f32 %v2750, %v3011
      %v3095 = vadd.f32 %v2751, %v3039
      %v3096 = vadd.f32 %v2752, %v3067
      %v3097 = vadd.f32 %v2753, %v2986
      %v3098 = vadd.f32 %v2754, %v3014
      %v3099 = vadd.f32 %v2755, %v3042
      %v3100 = vadd.f32 %v2756, %v3070
      %v3101 = vld [vmem:[#allocation2 + $0xe] sm:$0xff]
      %v3102 = vld [vmem:[#allocation2 + $0x16] sm:$0xff]
      %v3103 = vld [vmem:[#allocation2 + $0x1e] sm:$0xff]
      %v3104 = vld [vmem:[#allocation2 + $0x26] sm:$0xff]
      %v3105 = vld [vmem:[#allocation2 + $0x2e] sm:$0xff]
      %v3106 = vld [vmem:[#allocation2 + $0x36] sm:$0xff]
      %v3107 = vld [vmem:[#allocation2 + $0x3e] sm:$0xff]
      %v3108 = vpack.c.bf16 %v3102, %v3101
      %v3109 = vpack.c.bf16 %v3104, %v3103
      %v3110 = vpack.c.bf16 %v3106, %v3105
      %v3111 = vpack.c.bf16 %v3107, %v3107
      %s3112 = scalar_lea.vmem %s1, 2048
      %v3113 = vld [vmem:[%s3112] sm:$0xff]
      %v3114 = vld [vmem:[%s3112 + $0x8] sm:$0xff]
      %v3115 = vld [vmem:[%s3112 + $0x10] sm:$0xff]
      %v3116 = vld [vmem:[%s3112 + $0x18] sm:$0xff]
      %v3117 = vld [vmem:[%s3112 + $0x20] sm:$0xff]
      %v3118 = vld [vmem:[%s3112 + $0x28] sm:$0xff]
      %v3119 = vld [vmem:[%s3112 + $0x30] sm:$0xff]
      %v3120 = vld [vmem:[%s3112 + $0x38] sm:$0xff]
      %v3121 = vld [vmem:[%s3112 + $0x40] sm:$0xff]
      %v3122 = vld [vmem:[%s3112 + $0x48] sm:$0xff]
      %v3123 = vld [vmem:[%s3112 + $0x50] sm:$0xff]
      %v3124 = vld [vmem:[%s3112 + $0x58] sm:$0xff]
      %v3125 = vld [vmem:[%s3112 + $0x60] sm:$0xff]
      %v3126 = vld [vmem:[%s3112 + $0x68] sm:$0xff]
      %v3127 = vld [vmem:[%s3112 + $0x70] sm:$0xff]
      %v3128 = vld [vmem:[%s3112 + $0x78] sm:$0xff]
      %v3129 = vld [vmem:[%s3112 + $0x80] sm:$0xff]
      %v3130 = vld [vmem:[%s3112 + $0x88] sm:$0xff]
      %v3131 = vld [vmem:[%s3112 + $0x90] sm:$0xff]
      %v3132 = vld [vmem:[%s3112 + $0x98] sm:$0xff]
      %v3133 = vld [vmem:[%s3112 + $0xa0] sm:$0xff]
      %v3134 = vld [vmem:[%s3112 + $0xa8] sm:$0xff]
      %v3135 = vld [vmem:[%s3112 + $0xb0] sm:$0xff]
      %v3136 = vld [vmem:[%s3112 + $0xb8] sm:$0xff]
      %v3137 = vld [vmem:[%s3112 + $0xc0] sm:$0xff]
      %v3138 = vld [vmem:[%s3112 + $0xc8] sm:$0xff]
      %v3139 = vld [vmem:[%s3112 + $0xd0] sm:$0xff]
      %v3140 = vld [vmem:[%s3112 + $0xd8] sm:$0xff]
      %v3141 = vld [vmem:[%s3112 + $0xe0] sm:$0xff]
      %v3142 = vld [vmem:[%s3112 + $0xe8] sm:$0xff]
      %v3143 = vld [vmem:[%s3112 + $0xf0] sm:$0xff]
      %v3144 = vld [vmem:[%s3112 + $0xf8] sm:$0xff]
      %v3177 = vunpack.c.l.b16 %v3113
      %v3178 = vunpack.c.h.b16 %v3113
      %v3179 = vunpack.c.l.b16 %v3114
      %v3180 = vunpack.c.h.b16 %v3114
      %v3181 = vunpack.c.l.b16 %v3115
      %v3182 = vunpack.c.h.b16 %v3115
      %v3183 = vunpack.c.l.b16 %v3116
      %v3184 = vunpack.c.h.b16 %v3116
      %v3185 = vunpack.c.l.b16 %v3117
      %v3186 = vunpack.c.h.b16 %v3117
      %v3187 = vunpack.c.l.b16 %v3118
      %v3188 = vunpack.c.h.b16 %v3118
      %v3189 = vunpack.c.l.b16 %v3119
      %v3190 = vunpack.c.h.b16 %v3119
      %v3191 = vunpack.c.l.b16 %v3120
      %v3192 = vunpack.c.h.b16 %v3120
      %v3193 = vunpack.c.l.b16 %v3121
      %v3194 = vunpack.c.h.b16 %v3121
      %v3195 = vunpack.c.l.b16 %v3122
      %v3196 = vunpack.c.h.b16 %v3122
      %v3197 = vunpack.c.l.b16 %v3123
      %v3198 = vunpack.c.h.b16 %v3123
      %v3199 = vunpack.c.l.b16 %v3124
      %v3200 = vunpack.c.h.b16 %v3124
      %v3201 = vunpack.c.l.b16 %v3125
      %v3202 = vunpack.c.h.b16 %v3125
      %v3203 = vunpack.c.l.b16 %v3126
      %v3204 = vunpack.c.h.b16 %v3126
      %v3205 = vunpack.c.l.b16 %v3127
      %v3206 = vunpack.c.h.b16 %v3127
      %v3207 = vunpack.c.l.b16 %v3128
      %v3208 = vunpack.c.h.b16 %v3128
      %v3209 = vunpack.c.l.b16 %v3129
      %v3210 = vunpack.c.h.b16 %v3129
      %v3211 = vunpack.c.l.b16 %v3130
      %v3212 = vunpack.c.h.b16 %v3130
      %v3213 = vunpack.c.l.b16 %v3131
      %v3214 = vunpack.c.h.b16 %v3131
      %v3215 = vunpack.c.l.b16 %v3132
      %v3216 = vunpack.c.h.b16 %v3132
      %v3217 = vunpack.c.l.b16 %v3133
      %v3218 = vunpack.c.h.b16 %v3133
      %v3219 = vunpack.c.l.b16 %v3134
      %v3220 = vunpack.c.h.b16 %v3134
      %v3221 = vunpack.c.l.b16 %v3135
      %v3222 = vunpack.c.h.b16 %v3135
      %v3223 = vunpack.c.l.b16 %v3136
      %v3224 = vunpack.c.h.b16 %v3136
      %v3225 = vunpack.c.l.b16 %v3137
      %v3226 = vunpack.c.h.b16 %v3137
      %v3227 = vunpack.c.l.b16 %v3138
      %v3228 = vunpack.c.h.b16 %v3138
      %v3229 = vunpack.c.l.b16 %v3139
      %v3230 = vunpack.c.h.b16 %v3139
      %v3231 = vunpack.c.l.b16 %v3140
      %v3232 = vunpack.c.h.b16 %v3140
      %v3233 = vunpack.c.l.b16 %v3141
      %v3234 = vunpack.c.h.b16 %v3141
      %v3235 = vunpack.c.l.b16 %v3142
      %v3236 = vunpack.c.h.b16 %v3142
      %v3237 = vunpack.c.l.b16 %v3143
      %v3238 = vunpack.c.h.b16 %v3143
      %v3239 = vunpack.c.l.b16 %v3144
      %v3240 = vunpack.c.h.b16 %v3144
      %v3241 = vpack.c.b16 %v3181, %v3177
      %v3242 = vpack.c.b16 %v3182, %v3178
      %v3243 = vpack.c.b16 %v3183, %v3179
      %v3244 = vpack.c.b16 %v3184, %v3180
      %v3245 = vpack.c.b16 %v3189, %v3185
      %v3246 = vpack.c.b16 %v3190, %v3186
      %v3247 = vpack.c.b16 %v3191, %v3187
      %v3248 = vpack.c.b16 %v3192, %v3188
      %v3249 = vpack.c.b16 %v3197, %v3193
      %v3250 = vpack.c.b16 %v3198, %v3194
      %v3251 = vpack.c.b16 %v3199, %v3195
      %v3252 = vpack.c.b16 %v3200, %v3196
      %v3253 = vpack.c.b16 %v3205, %v3201
      %v3254 = vpack.c.b16 %v3206, %v3202
      %v3255 = vpack.c.b16 %v3207, %v3203
      %v3256 = vpack.c.b16 %v3208, %v3204
      %v3257 = vpack.c.b16 %v3213, %v3209
      %v3258 = vpack.c.b16 %v3214, %v3210
      %v3259 = vpack.c.b16 %v3215, %v3211
      %v3260 = vpack.c.b16 %v3216, %v3212
      %v3261 = vpack.c.b16 %v3221, %v3217
      %v3262 = vpack.c.b16 %v3222, %v3218
      %v3263 = vpack.c.b16 %v3223, %v3219
      %v3264 = vpack.c.b16 %v3224, %v3220
      %v3265 = vpack.c.b16 %v3229, %v3225
      %v3266 = vpack.c.b16 %v3230, %v3226
      %v3267 = vpack.c.b16 %v3231, %v3227
      %v3268 = vpack.c.b16 %v3232, %v3228
      %v3269 = vpack.c.b16 %v3237, %v3233
      %v3270 = vpack.c.b16 %v3238, %v3234
      %v3271 = vpack.c.b16 %v3239, %v3235
      %v3272 = vpack.c.b16 %v3240, %v3236
      %3305 = vmatpush.bf16.msra.mxu0 %v3269
      %3306 = vmatpush.bf16.msra.mxu0 %v3265
      %3307 = vmatpush.bf16.msra.mxu0 %v3261
      %3308 = vmatpush.bf16.msra.mxu0 %v3257
      %3309 = vmatpush.bf16.msra.mxu0 %v3253
      %3310 = vmatpush.bf16.msra.mxu0 %v3249
      %3311 = vmatpush.bf16.msra.mxu0 %v3245
      %3312 = vmatpush.bf16.msra.mxu0 %v3241
      %3313 = vmatmul.bf16.gmra.mxu0 %v3108
      %v3314 = vpop.f32.mrf.mxu0
      %v3315 = vadd.f32 0.0, %v3314
      %v3316 = vpop.f32.mrf.mxu0
      %v3317 = vadd.f32 0.0, %v3316
      %3318 = vmatmul.bf16.gmra.mxu0 %v3109
      %v3319 = vpop.f32.mrf.mxu0
      %v3320 = vadd.f32 0.0, %v3319
      %v3321 = vpop.f32.mrf.mxu0
      %v3322 = vadd.f32 0.0, %v3321
      %3323 = vmatmul.bf16.gmra.mxu0 %v3110
      %v3324 = vpop.f32.mrf.mxu0
      %v3325 = vadd.f32 0.0, %v3324
      %v3326 = vpop.f32.mrf.mxu0
      %v3327 = vadd.f32 0.0, %v3326
      %3328 = vmatmul.bf16.gmra.mxu0 %v3111
      %v3329 = vpop.f32.mrf.mxu0
      %v3330 = vadd.f32 0.0, %v3329
      %v3331 = vpop.f32.mrf.mxu0
      %3332 = vdwg.mxu0
      %3333 = vmatpush.bf16.msra.mxu0 %v3270
      %3334 = vmatpush.bf16.msra.mxu0 %v3266
      %3335 = vmatpush.bf16.msra.mxu0 %v3262
      %3336 = vmatpush.bf16.msra.mxu0 %v3258
      %3337 = vmatpush.bf16.msra.mxu0 %v3254
      %3338 = vmatpush.bf16.msra.mxu0 %v3250
      %3339 = vmatpush.bf16.msra.mxu0 %v3246
      %3340 = vmatpush.bf16.msra.mxu0 %v3242
      %3341 = vmatmul.bf16.gmra.mxu0 %v3108
      %v3342 = vpop.f32.mrf.mxu0
      %v3343 = vadd.f32 0.0, %v3342
      %v3344 = vpop.f32.mrf.mxu0
      %v3345 = vadd.f32 0.0, %v3344
      %3346 = vmatmul.bf16.gmra.mxu0 %v3109
      %v3347 = vpop.f32.mrf.mxu0
      %v3348 = vadd.f32 0.0, %v3347
      %v3349 = vpop.f32.mrf.mxu0
      %v3350 = vadd.f32 0.0, %v3349
      %3351 = vmatmul.bf16.gmra.mxu0 %v3110
      %v3352 = vpop.f32.mrf.mxu0
      %v3353 = vadd.f32 0.0, %v3352
      %v3354 = vpop.f32.mrf.mxu0
      %v3355 = vadd.f32 0.0, %v3354
      %3356 = vmatmul.bf16.gmra.mxu0 %v3111
      %v3357 = vpop.f32.mrf.mxu0
      %v3358 = vadd.f32 0.0, %v3357
      %v3359 = vpop.f32.mrf.mxu0
      %3360 = vdwg.mxu0
      %3361 = vmatpush.bf16.msra.mxu0 %v3271
      %3362 = vmatpush.bf16.msra.mxu0 %v3267
      %3363 = vmatpush.bf16.msra.mxu0 %v3263
      %3364 = vmatpush.bf16.msra.mxu0 %v3259
      %3365 = vmatpush.bf16.msra.mxu0 %v3255
      %3366 = vmatpush.bf16.msra.mxu0 %v3251
      %3367 = vmatpush.bf16.msra.mxu0 %v3247
      %3368 = vmatpush.bf16.msra.mxu0 %v3243
      %3369 = vmatmul.bf16.gmra.mxu0 %v3108
      %v3370 = vpop.f32.mrf.mxu0
      %v3371 = vadd.f32 0.0, %v3370
      %v3372 = vpop.f32.mrf.mxu0
      %v3373 = vadd.f32 0.0, %v3372
      %3374 = vmatmul.bf16.gmra.mxu0 %v3109
      %v3375 = vpop.f32.mrf.mxu0
      %v3376 = vadd.f32 0.0, %v3375
      %v3377 = vpop.f32.mrf.mxu0
      %v3378 = vadd.f32 0.0, %v3377
      %3379 = vmatmul.bf16.gmra.mxu0 %v3110
      %v3380 = vpop.f32.mrf.mxu0
      %v3381 = vadd.f32 0.0, %v3380
      %v3382 = vpop.f32.mrf.mxu0
      %v3383 = vadd.f32 0.0, %v3382
      %3384 = vmatmul.bf16.gmra.mxu0 %v3111
      %v3385 = vpop.f32.mrf.mxu0
      %v3386 = vadd.f32 0.0, %v3385
      %v3387 = vpop.f32.mrf.mxu0
      %3388 = vdwg.mxu0
      %3389 = vmatpush.bf16.msra.mxu0 %v3272
      %3390 = vmatpush.bf16.msra.mxu0 %v3268
      %3391 = vmatpush.bf16.msra.mxu0 %v3264
      %3392 = vmatpush.bf16.msra.mxu0 %v3260
      %3393 = vmatpush.bf16.msra.mxu0 %v3256
      %3394 = vmatpush.bf16.msra.mxu0 %v3252
      %3395 = vmatpush.bf16.msra.mxu0 %v3248
      %3396 = vmatpush.bf16.msra.mxu0 %v3244
      %3397 = vmatmul.bf16.gmra.mxu0 %v3108
      %v3398 = vpop.f32.mrf.mxu0
      %v3399 = vadd.f32 0.0, %v3398
      %v3400 = vpop.f32.mrf.mxu0
      %v3401 = vadd.f32 0.0, %v3400
      %3402 = vmatmul.bf16.gmra.mxu0 %v3109
      %v3403 = vpop.f32.mrf.mxu0
      %v3404 = vadd.f32 0.0, %v3403
      %v3405 = vpop.f32.mrf.mxu0
      %v3406 = vadd.f32 0.0, %v3405
      %3407 = vmatmul.bf16.gmra.mxu0 %v3110
      %v3408 = vpop.f32.mrf.mxu0
      %v3409 = vadd.f32 0.0, %v3408
      %v3410 = vpop.f32.mrf.mxu0
      %v3411 = vadd.f32 0.0, %v3410
      %3412 = vmatmul.bf16.gmra.mxu0 %v3111
      %v3413 = vpop.f32.mrf.mxu0
      %v3414 = vadd.f32 0.0, %v3413
      %v3415 = vpop.f32.mrf.mxu0
      %3416 = vdwg.mxu0
      %v3417 = vadd.f32 %v3073, %v3315
      %v3418 = vadd.f32 %v3074, %v3343
      %v3419 = vadd.f32 %v3075, %v3371
      %v3420 = vadd.f32 %v3076, %v3399
      %v3421 = vadd.f32 %v3077, %v3317
      %v3422 = vadd.f32 %v3078, %v3345
      %v3423 = vadd.f32 %v3079, %v3373
      %v3424 = vadd.f32 %v3080, %v3401
      %v3425 = vadd.f32 %v3081, %v3320
      %v3426 = vadd.f32 %v3082, %v3348
      %v3427 = vadd.f32 %v3083, %v3376
      %v3428 = vadd.f32 %v3084, %v3404
      %v3429 = vadd.f32 %v3085, %v3322
      %v3430 = vadd.f32 %v3086, %v3350
      %v3431 = vadd.f32 %v3087, %v3378
      %v3432 = vadd.f32 %v3088, %v3406
      %v3433 = vadd.f32 %v3089, %v3325
      %v3434 = vadd.f32 %v3090, %v3353
      %v3435 = vadd.f32 %v3091, %v3381
      %v3436 = vadd.f32 %v3092, %v3409
      %v3437 = vadd.f32 %v3093, %v3327
      %v3438 = vadd.f32 %v3094, %v3355
      %v3439 = vadd.f32 %v3095, %v3383
      %v3440 = vadd.f32 %v3096, %v3411
      %v3441 = vadd.f32 %v3097, %v3330
      %v3442 = vadd.f32 %v3098, %v3358
      %v3443 = vadd.f32 %v3099, %v3386
      %v3444 = vadd.f32 %v3100, %v3414
      %v3445 = vld [vmem:[#allocation3] sm:$0xff]
      %v3446 = vld [vmem:[#allocation3 + $0x8] sm:$0xff]
      %v3447 = vld [vmem:[#allocation3 + $0x10] sm:$0xff]
      %v3448 = vld [vmem:[#allocation3 + $0x18] sm:$0xff]
      %v3449 = vld [vmem:[#allocation3 + $0x20] sm:$0xff]
      %v3450 = vld [vmem:[#allocation3 + $0x28] sm:$0xff]
      %v3451 = vld [vmem:[#allocation3 + $0x30] sm:$0xff]
      %v3452 = vtanh.pop %v3418
      %v3453 = vtanh.pop %v3422
      %v3454 = vtanh.pop %v3426
      %v3455 = vtanh.pop %v3430
      %v3456 = vtanh.pop %v3434
      %v3457 = vtanh.pop %v3438
      %v3458 = vtanh.pop %v3442
      %v3459 = vld [vmem:[%s3] sm:$0xff]
      %v3460 = vld [vmem:[%s3 + $0x8] sm:$0xff]
      %v3461 = vld [vmem:[%s3 + $0x10] sm:$0xff]
      %v3462 = vld [vmem:[%s3 + $0x18] sm:$0xff]
      %v3463 = vld [vmem:[%s3 + $0x20] sm:$0xff]
      %v3464 = vld [vmem:[%s3 + $0x28] sm:$0xff]
      %v3465 = vld [vmem:[%s3 + $0x30] sm:$0xff]
      %v3466 = vmul.f32 %v3445, %v3459
      %v3467 = vmul.f32 %v3446, %v3460
      %v3468 = vmul.f32 %v3447, %v3461
      %v3469 = vmul.f32 %v3448, %v3462
      %v3470 = vmul.f32 %v3449, %v3463
      %v3471 = vmul.f32 %v3450, %v3464
      %v3472 = vmul.f32 %v3451, %v3465
      %v3473 = vadd.f32 %v3417, %v3466
      %v3474 = vadd.f32 %v3421, %v3467
      %v3475 = vadd.f32 %v3425, %v3468
      %v3476 = vadd.f32 %v3429, %v3469
      %v3477 = vadd.f32 %v3433, %v3470
      %v3478 = vadd.f32 %v3437, %v3471
      %v3479 = vadd.f32 %v3441, %v3472
      %v3480 = vsub.f32 0.0, %v3473
      %v3481 = vsub.f32 0.0, %v3474
      %v3482 = vsub.f32 0.0, %v3475
      %v3483 = vsub.f32 0.0, %v3476
      %v3484 = vsub.f32 0.0, %v3477
      %v3485 = vsub.f32 0.0, %v3478
      %v3486 = vsub.f32 0.0, %v3479
      %v3487 = vmul.f32 %v3480, 1.442695
      %v3488 = vpow.pop %v3487
      %v3489 = vmul.f32 %v3481, 1.442695
      %v3490 = vpow.pop %v3489
      %v3491 = vmul.f32 %v3482, 1.442695
      %v3492 = vpow.pop %v3491
      %v3493 = vmul.f32 %v3483, 1.442695
      %v3494 = vpow.pop %v3493
      %v3495 = vmul.f32 %v3484, 1.442695
      %v3496 = vpow.pop %v3495
      %v3497 = vmul.f32 %v3485, 1.442695
      %v3498 = vpow.pop %v3497
      %v3499 = vmul.f32 %v3486, 1.442695
      %v3500 = vpow.pop %v3499
      %v3501 = vadd.f32 %v3488, 1.0
      %v3502 = vadd.f32 %v3490, 1.0
      %v3503 = vadd.f32 %v3492, 1.0
      %v3504 = vadd.f32 %v3494, 1.0
      %v3505 = vadd.f32 %v3496, 1.0
      %v3506 = vadd.f32 %v3498, 1.0
      %v3507 = vadd.f32 %v3500, 1.0
      %v3508 = vrcp.pop %v3501
      %v3509 = vrcp.pop %v3502
      %v3510 = vrcp.pop %v3503
      %v3511 = vrcp.pop %v3504
      %v3512 = vrcp.pop %v3505
      %v3513 = vrcp.pop %v3506
      %v3514 = vrcp.pop %v3507
      %v3515 = vld [vmem:[%s4] sm:$0xff]
      %v3516 = vld [vmem:[%s4 + $0x8] sm:$0xff]
      %v3517 = vld [vmem:[%s4 + $0x10] sm:$0xff]
      %v3518 = vld [vmem:[%s4 + $0x18] sm:$0xff]
      %v3519 = vld [vmem:[%s4 + $0x20] sm:$0xff]
      %v3520 = vld [vmem:[%s4 + $0x28] sm:$0xff]
      %v3521 = vld [vmem:[%s4 + $0x30] sm:$0xff]
      %v3522 = vmul.f32 %v3445, %v3515
      %v3523 = vmul.f32 %v3446, %v3516
      %v3524 = vmul.f32 %v3447, %v3517
      %v3525 = vmul.f32 %v3448, %v3518
      %v3526 = vmul.f32 %v3449, %v3519
      %v3527 = vmul.f32 %v3450, %v3520
      %v3528 = vmul.f32 %v3451, %v3521
      %v3529 = vadd.f32 %v3420, %v3522
      %v3530 = vadd.f32 %v3424, %v3523
      %v3531 = vadd.f32 %v3428, %v3524
      %v3532 = vadd.f32 %v3432, %v3525
      %v3533 = vadd.f32 %v3436, %v3526
      %v3534 = vadd.f32 %v3440, %v3527
      %v3535 = vadd.f32 %v3444, %v3528
      %v3536 = vsub.f32 0.0, %v3529
      %v3537 = vsub.f32 0.0, %v3530
      %v3538 = vsub.f32 0.0, %v3531
      %v3539 = vsub.f32 0.0, %v3532
      %v3540 = vsub.f32 0.0, %v3533
      %v3541 = vsub.f32 0.0, %v3534
      %v3542 = vsub.f32 0.0, %v3535
      %v3543 = vmul.f32 %v3536, 1.442695
      %v3544 = vpow.pop %v3543
      %v3545 = vmul.f32 %v3537, 1.442695
      %v3546 = vpow.pop %v3545
      %v3547 = vmul.f32 %v3538, 1.442695
      %v3548 = vpow.pop %v3547
      %v3549 = vmul.f32 %v3539, 1.442695
      %v3550 = vpow.pop %v3549
      %v3551 = vmul.f32 %v3540, 1.442695
      %v3552 = vpow.pop %v3551
      %v3553 = vmul.f32 %v3541, 1.442695
      %v3554 = vpow.pop %v3553
      %v3555 = vmul.f32 %v3542, 1.442695
      %v3556 = vpow.pop %v3555
      %v3557 = vadd.f32 %v3544, 1.0
      %v3558 = vadd.f32 %v3546, 1.0
      %v3559 = vadd.f32 %v3548, 1.0
      %v3560 = vadd.f32 %v3550, 1.0
      %v3561 = vadd.f32 %v3552, 1.0
      %v3562 = vadd.f32 %v3554, 1.0
      %v3563 = vadd.f32 %v3556, 1.0
      %v3564 = vrcp.pop %v3557
      %v3565 = vrcp.pop %v3558
      %v3566 = vrcp.pop %v3559
      %v3567 = vrcp.pop %v3560
      %v3568 = vrcp.pop %v3561
      %v3569 = vrcp.pop %v3562
      %v3570 = vrcp.pop %v3563
      %v3571 = vmul.f32 %v3564, %v3445
      %v3572 = vmul.f32 %v3565, %v3446
      %v3573 = vmul.f32 %v3566, %v3447
      %v3574 = vmul.f32 %v3567, %v3448
      %v3575 = vmul.f32 %v3568, %v3449
      %v3576 = vmul.f32 %v3569, %v3450
      %v3577 = vmul.f32 %v3570, %v3451
      %v3578 = vmul.f32 %v3508, %v3452
      %v3579 = vmul.f32 %v3509, %v3453
      %v3580 = vmul.f32 %v3510, %v3454
      %v3581 = vmul.f32 %v3511, %v3455
      %v3582 = vmul.f32 %v3512, %v3456
      %v3583 = vmul.f32 %v3513, %v3457
      %v3584 = vmul.f32 %v3514, %v3458
      %v3585 = vadd.f32 %v3571, %v3578
      %v3586 = vadd.f32 %v3572, %v3579
      %v3587 = vadd.f32 %v3573, %v3580
      %v3588 = vadd.f32 %v3574, %v3581
      %v3589 = vadd.f32 %v3575, %v3582
      %v3590 = vadd.f32 %v3576, %v3583
      %v3591 = vadd.f32 %v3577, %v3584
      %v3592 = vld [vmem:[%s5] sm:$0xff]
      %v3593 = vld [vmem:[%s5 + $0x8] sm:$0xff]
      %v3594 = vld [vmem:[%s5 + $0x10] sm:$0xff]
      %v3595 = vld [vmem:[%s5 + $0x18] sm:$0xff]
      %v3596 = vld [vmem:[%s5 + $0x20] sm:$0xff]
      %v3597 = vld [vmem:[%s5 + $0x28] sm:$0xff]
      %v3598 = vld [vmem:[%s5 + $0x30] sm:$0xff]
      %v3599 = vmul.f32 %v3585, %v3592
      %v3600 = vmul.f32 %v3586, %v3593
      %v3601 = vmul.f32 %v3587, %v3594
      %v3602 = vmul.f32 %v3588, %v3595
      %v3603 = vmul.f32 %v3589, %v3596
      %v3604 = vmul.f32 %v3590, %v3597
      %v3605 = vmul.f32 %v3591, %v3598
      %v3606 = vadd.f32 %v3419, %v3599
      %v3607 = vadd.f32 %v3423, %v3600
      %v3608 = vadd.f32 %v3427, %v3601
      %v3609 = vadd.f32 %v3431, %v3602
      %v3610 = vadd.f32 %v3435, %v3603
      %v3611 = vadd.f32 %v3439, %v3604
      %v3612 = vadd.f32 %v3443, %v3605
      %v3613 = vsub.f32 0.0, %v3606
      %v3614 = vsub.f32 0.0, %v3607
      %v3615 = vsub.f32 0.0, %v3608
      %v3616 = vsub.f32 0.0, %v3609
      %v3617 = vsub.f32 0.0, %v3610
      %v3618 = vsub.f32 0.0, %v3611
      %v3619 = vsub.f32 0.0, %v3612
      %v3620 = vmul.f32 %v3613, 1.442695
      %v3621 = vpow.pop %v3620
      %v3622 = vmul.f32 %v3614, 1.442695
      %v3623 = vpow.pop %v3622
      %v3624 = vmul.f32 %v3615, 1.442695
      %v3625 = vpow.pop %v3624
      %v3626 = vmul.f32 %v3616, 1.442695
      %v3627 = vpow.pop %v3626
      %v3628 = vmul.f32 %v3617, 1.442695
      %v3629 = vpow.pop %v3628
      %v3630 = vmul.f32 %v3618, 1.442695
      %v3631 = vpow.pop %v3630
      %v3632 = vmul.f32 %v3619, 1.442695
      %v3633 = vpow.pop %v3632
      %v3634 = vadd.f32 %v3621, 1.0
      %v3635 = vadd.f32 %v3623, 1.0
      %v3636 = vadd.f32 %v3625, 1.0
      %v3637 = vadd.f32 %v3627, 1.0
      %v3638 = vadd.f32 %v3629, 1.0
      %v3639 = vadd.f32 %v3631, 1.0
      %v3640 = vadd.f32 %v3633, 1.0
      %v3641 = vrcp.pop %v3634
      %v3642 = vrcp.pop %v3635
      %v3643 = vrcp.pop %v3636
      %v3644 = vrcp.pop %v3637
      %v3645 = vrcp.pop %v3638
      %v3646 = vrcp.pop %v3639
      %v3647 = vrcp.pop %v3640
      %v3648 = vtanh.pop %v3585
      %v3649 = vtanh.pop %v3586
      %v3650 = vtanh.pop %v3587
      %v3651 = vtanh.pop %v3588
      %v3652 = vtanh.pop %v3589
      %v3653 = vtanh.pop %v3590
      %v3654 = vtanh.pop %v3591
      %v3655 = vmul.f32 %v3641, %v3648
      %v3656 = vmul.f32 %v3642, %v3649
      %v3657 = vmul.f32 %v3643, %v3650
      %v3658 = vmul.f32 %v3644, %v3651
      %v3659 = vmul.f32 %v3645, %v3652
      %v3660 = vmul.f32 %v3646, %v3653
      %v3661 = vmul.f32 %v3647, %v3654
      %v3662 = vld [vmem:[%s6] sm:$0xff]
      %v3663 = vld [vmem:[%s6 + $0x8] sm:$0xff]
      %v3664 = vld [vmem:[%s6 + $0x10] sm:$0xff]
      %v3665 = vld [vmem:[%s6 + $0x18] sm:$0xff]
      %v3666 = vld [vmem:[%s6 + $0x20] sm:$0xff]
      %v3667 = vld [vmem:[%s6 + $0x28] sm:$0xff]
      %v3668 = vld [vmem:[%s6 + $0x30] sm:$0xff]
      %v3669 = vmul.f32 %v3655, %v3662
      %v3670 = vmul.f32 %v3656, %v3663
      %v3671 = vmul.f32 %v3657, %v3664
      %v3672 = vmul.f32 %v3658, %v3665
      %v3673 = vmul.f32 %v3659, %v3666
      %v3674 = vmul.f32 %v3660, %v3667
      %v3675 = vmul.f32 %v3661, %v3668
      %v3676 = vmul.f32 %v3585, %v3662
      %v3677 = vmul.f32 %v3586, %v3663
      %v3678 = vmul.f32 %v3587, %v3664
      %v3679 = vmul.f32 %v3588, %v3665
      %v3680 = vmul.f32 %v3589, %v3666
      %v3681 = vmul.f32 %v3590, %v3667
      %v3682 = vmul.f32 %v3591, %v3668
      %3683 = vst [vmem:[#allocation2 + $0x8] sm:$0xff] %v3669
      %3684 = vst [vmem:[#allocation2 + $0x10] sm:$0xff] %v3670
      %3685 = vst [vmem:[#allocation2 + $0x18] sm:$0xff] %v3671
      %3686 = vst [vmem:[#allocation2 + $0x20] sm:$0xff] %v3672
      %3687 = vst [vmem:[#allocation2 + $0x28] sm:$0xff] %v3673
      %3688 = vst [vmem:[#allocation2 + $0x30] sm:$0xff] %v3674
      %3689 = vst [vmem:[#allocation2 + $0x38] sm:$0xff] %v3675
      %3690 = vst [vmem:[#allocation3] sm:$0xff] %v3676
      %3691 = vst [vmem:[#allocation3 + $0x8] sm:$0xff] %v3677
      %3692 = vst [vmem:[#allocation3 + $0x10] sm:$0xff] %v3678
      %3693 = vst [vmem:[#allocation3 + $0x18] sm:$0xff] %v3679
      %3694 = vst [vmem:[#allocation3 + $0x20] sm:$0xff] %v3680
      %3695 = vst [vmem:[#allocation3 + $0x28] sm:$0xff] %v3681
      %3696 = vst [vmem:[#allocation3 + $0x30] sm:$0xff] %v3682
      %p3697 = scmp.eq.s32.totalorder %s18, 3
      // Predicated region
      $region53: #{_lambda_.5} parent=47 // pred_check
        %p3698 = pneg %p3697
      $region54: #{_lambda_.5} parent=47 // pred_check_branch
        %3700 = sbr.rel (%p3698) target = $region56
      $region55: #{_lambda_.5} parent=47 // pred_region
        %3701 = vst [vmem:[%s7] sm:$0xff] %v3669
        %3702 = vst [vmem:[%s7 + $0x10] sm:$0xff] %v3670
        %3703 = vst [vmem:[%s7 + $0x20] sm:$0xff] %v3671
        %3704 = vst [vmem:[%s7 + $0x30] sm:$0xff] %v3672
        %3705 = vst [vmem:[%s7 + $0x40] sm:$0xff] %v3673
        %3706 = vst [vmem:[%s7 + $0x50] sm:$0xff] %v3674
        %3707 = vst [vmem:[%s7 + $0x60] sm:$0xff] %v3675
        %3708 = vst [vmem:[%s7 + $0x8] sm:$0xff] %v3676
        %3709 = vst [vmem:[%s7 + $0x18] sm:$0xff] %v3677
        %3710 = vst [vmem:[%s7 + $0x28] sm:$0xff] %v3678
        %3711 = vst [vmem:[%s7 + $0x38] sm:$0xff] %v3679
        %3712 = vst [vmem:[%s7 + $0x48] sm:$0xff] %v3680
        %3713 = vst [vmem:[%s7 + $0x58] sm:$0xff] %v3681
        %3714 = vst [vmem:[%s7 + $0x68] sm:$0xff] %v3682
      $region56: #{_lambda_.5} parent=47 // pred_fallthru
        _
      // Predicated region
      $region57: #{_lambda_.5} parent=47 // pred_check
        %p3715 = pneg %p183
      $region58: #{_lambda_.5} parent=47 // pred_check_branch
        %3717 = sbr.rel (%p3715) target = $region60
      $region59: #{_lambda_.5} parent=47 // pred_region
        _
      $region60: #{_lambda_.5} parent=47 // pred_fallthru
        _
      // Predicated region
      $region61: #{_lambda_.5} parent=47 // pred_check
        %p3718 = pneg %p183
      $region62: #{_lambda_.5} parent=47 // pred_check_branch
        %3720 = sbr.rel (%p3718) target = $region64
      $region63: #{_lambda_.5} parent=47 // pred_region
        _
      $region64: #{_lambda_.5} parent=47 // pred_fallthru
        _
    $region48: #{_lambda_.5} parent=5 // pred_fallthru
      _
    %p3721 = scmp.le.s32.totalorder 2, %s13
    // Predicated region
    $region65: #{_lambda_.5} parent=5 // pred_check
      %p3722 = pneg %p3721
    $region66: #{_lambda_.5} parent=5 // pred_check_branch
      %3724 = sbr.rel (%p3722) target = $region68
    $region67: #{_lambda_.5} parent=5 // pred_region
      %s3725 = ssub.s32 %s13, 2
    $region68: #{_lambda_.5} parent=5 // pred_fallthru
      _
  $region6: #{_lambda_.5} parent=0 // loop_footer
    %s17 = sadd.s32 1, %s13
  $region7: #{_lambda_.5} parent=0 // loop_footer_branch
    %12 = sbr.rel target = $region3
  $region8: #{_lambda_.5} parent=0 // loop_exit
    _

</llo_original>
